<compile_context>
chip_gen: v7x
topology: tpu7x:2x2x1
jax: 0.10.0
libtpu: 0.0.40
codegen_flags: <defaults>
</compile_context>

<pallas_src>
import jax
import jax.numpy as jnp
from jax.experimental import pallas as pl
from jax.experimental.pallas import tpu as pltpu


NUM_FTRS = 1280          # EfficientNet-b0 head width (net._fc.in_features)
STEM_CH = 32             # EfficientNet-b0 stem output channels
KP = 16                  # 3*3*1 = 9 stem-patch taps, zero-padded to 16
LANE = 128               # TPU lane width (pad hidden_dim to this)


# ----------------------------------------------------------------------------
# Kernel: one grid step = one branch x one batch-tile.
#   cols (rows, KP)bf16 -> stem matmul + swish -> head matmul + bf16 swish
#   -> MXU mean-pool -> fused _fc matmul -> (tile_b, Hp) f32 output block.
# ----------------------------------------------------------------------------
def _branch_kernel(cols_ref, ws_ref, bs_ref, wh_ref, bh_ref, pool_ref,
                   wfc_ref, bfc_ref, o_ref):
    # stem 3x3/s2 conv via im2col: (rows, KP)bf16 @ (KP, 32)bf16 -> f32, swish
    stem = jnp.dot(cols_ref[0], ws_ref[0],
                   preferred_element_type=jnp.float32) + bs_ref[0]
    stem = stem * jax.nn.sigmoid(stem)                      # 32-wide, cheap

    # head 1x1 conv: (rows, 32)bf16 @ (32, 1280)bf16 -> f32 on the MXU
    head = jnp.dot(stem.astype(jnp.bfloat16), wh_ref[0],
                   preferred_element_type=jnp.float32)

    # Bias + swish in bf16: this 1280-wide elementwise path is the binding
    # VALU/EUP work (MXU has >10x slack); bf16 halves it on v6e/v7x.
    # TODO(synk): on v5e (no bf16 VALU/EUP) an f32 x*rcp(1+exp(-x)) variant
    # that offloads the divide to the EUP would be preferable.
    head = head.astype(jnp.bfloat16) + bh_ref[0]
    head = head * jax.nn.sigmoid(head)                      # swish (bf16)

    # Global average pool on the MXU: block-diagonal (tile_b, rows) matrix of
    # 1/S, f32 accumulation — no cross-sublane reduce, no reshape.
    pooled = jnp.dot(pool_ref[...], head, preferred_element_type=jnp.float32)

    # Replaced _fc: Linear(1280, hidden) fused here (no second pallas_call).
    o_ref[0] = (jnp.dot(pooled.astype(jnp.bfloat16), wfc_ref[0],
                        preferred_element_type=jnp.float32) + bfc_ref[0])


def _pick_tile_b(B, S, max_rows=2048):
    """Fold whole images into the matmul M dim; tile the batch only if needed."""
    if B * S <= max_rows:
        return B
    for t in range(B - 1, 0, -1):
        # t == B handled above; otherwise sublane-align the block dims.
        if B % t == 0 and t * S <= max_rows and t % 8 == 0:
            return t
    return B  # TODO(synk): add spatial tiling for very large single images


def fused_mult_stage_branches(cols, ws, bs, wh, bh, wfc, bfc, *, S):
    """cols: (2, B*S, KP) bf16; weights stacked per branch.

    Returns per-branch fc outputs (2, B, Hp) f32 (vote applied outside)."""
    NB, R, Kp = cols.shape
    B = R // S
    Hp = wfc.shape[-1]
    tile_b = _pick_tile_b(B, S)
    rows = tile_b * S
    n_b = B // tile_b

    # Block-diagonal mean-pool operator (value 1/S in the per-image block).
    img_id = jax.lax.broadcasted_iota(jnp.int32, (tile_b, rows), 1) // S
    row_id = jax.lax.broadcasted_iota(jnp.int32, (tile_b, rows), 0)
    pool = jnp.where(img_id == row_id, 1.0 / S, 0.0).astype(jnp.bfloat16)

    flops = int(2 * NB * B * S * (Kp * STEM_CH + STEM_CH * NUM_FTRS)
                + 2 * NB * B * S * NUM_FTRS            # pool matmul
                + 2 * NB * B * NUM_FTRS * Hp)          # fused fc
    trans = int(NB * B * S * (STEM_CH + NUM_FTRS))
    bytes_acc = int(cols.size * 2 + ws.size * 2 + wh.size * 2 + wfc.size * 2
                    + bs.size * 4 + bh.size * 2 + bfc.size * 4
                    + NB * B * Hp * 4)

    return pl.pallas_call(
        _branch_kernel,
        out_shape=jax.ShapeDtypeStruct((NB, B, Hp), jnp.float32),
        grid=(NB, n_b),
        in_specs=[
            pl.BlockSpec((1, rows, Kp), lambda n, b: (n, b, 0)),
            pl.BlockSpec((1, Kp, STEM_CH), lambda n, b: (n, 0, 0)),
            pl.BlockSpec((1, 1, STEM_CH), lambda n, b: (n, 0, 0)),
            pl.BlockSpec((1, STEM_CH, NUM_FTRS), lambda n, b: (n, 0, 0)),
            pl.BlockSpec((1, 1, NUM_FTRS), lambda n, b: (n, 0, 0)),
            pl.BlockSpec((tile_b, rows), lambda n, b: (0, 0)),
            pl.BlockSpec((1, NUM_FTRS, Hp), lambda n, b: (n, 0, 0)),
            pl.BlockSpec((1, 1, Hp), lambda n, b: (n, 0, 0)),
        ],
        out_specs=pl.BlockSpec((1, tile_b, Hp), lambda n, b: (n, b, 0)),
        compiler_params=pltpu.CompilerParams(
            dimension_semantics=("parallel", "parallel"),
            vmem_limit_bytes=48 * 1024 * 1024),
        cost_estimate=pl.CostEstimate(flops=flops, transcendentals=trans,
                                      bytes_accessed=bytes_acc),
    )(cols, ws, bs, wh, bh, pool, wfc, bfc)


# ----------------------------------------------------------------------------
# Glue: im2col for the 3x3 stride-2 "same"-padded stem conv (TF-style padding,
# as used by Conv2dStaticSamePadding in EfficientNet).  NCHW (C=1) in.
# TODO(synk): for large images the stem could be done in-kernel as 9 shifted
# VPU MACs instead of wrapper-side im2col (stem is <3% of the head's work).
# ----------------------------------------------------------------------------
def im2col_3x3_s2_same(x_nchw):
    x = jnp.transpose(x_nchw, (0, 2, 3, 1)).astype(jnp.float32)   # NHWC
    B, H, W, C = x.shape
    k, s = 3, 2
    Ho, Wo = -(-H // s), -(-W // s)
    pad_h = max((Ho - 1) * s + k - H, 0)
    pad_w = max((Wo - 1) * s + k - W, 0)
    xp = jnp.pad(x, ((0, 0),
                     (pad_h // 2, pad_h - pad_h // 2),
                     (pad_w // 2, pad_w - pad_w // 2),
                     (0, 0)))
    patches = []
    for di in range(k):
        for dj in range(k):
            patches.append(xp[:, di:di + (Ho - 1) * s + 1:s,
                              dj:dj + (Wo - 1) * s + 1:s, :])
    cols = jnp.concatenate(patches, axis=-1)            # (B, Ho, Wo, 9*C)
    return cols.reshape(B, Ho * Wo, k * k * C), (Ho, Wo)


# ----------------------------------------------------------------------------
# Parameters (deterministic, synthetic).
# ----------------------------------------------------------------------------
def make_backbone_params(key, hidden_dim):
    k1, k2, k3, k4, k5 = jax.random.split(key, 5)
    w_stem = 0.1 * jax.random.normal(k1, (9, STEM_CH), jnp.float32)
    b_stem = jnp.zeros((STEM_CH,), jnp.float32)         # stem conv has bias=False
    w_head = 0.05 * jax.random.normal(k2, (STEM_CH, NUM_FTRS), jnp.float32)
    b_head = 0.01 * jax.random.normal(k3, (NUM_FTRS,), jnp.float32)
    w_fc = 0.02 * jax.random.normal(k4, (NUM_FTRS, hidden_dim), jnp.float32)
    b_fc = 0.01 * jax.random.normal(k5, (hidden_dim,), jnp.float32)
    return dict(w_stem=w_stem, b_stem=b_stem, w_head=w_head, b_head=b_head,
                w_fc=w_fc, b_fc=b_fc)


def mult_stage_forward(x1, x2, params):
    cols1, _ = im2col_3x3_s2_same(x1)                    # (B, S, 9) f32
    cols2, _ = im2col_3x3_s2_same(x2)
    B, S, _ = cols1.shape
    cols = jnp.stack([cols1, cols2], axis=0)             # (2, B, S, 9)
    cols = jnp.pad(cols, ((0, 0), (0, 0), (0, 0), (0, KP - cols.shape[-1])))
    cols = cols.reshape(2, B * S, KP).astype(jnp.bfloat16)

    H = params["net1"]["w_fc"].shape[-1]
    Hp = -(-H // LANE) * LANE                            # lane-dense fc output

    def stack(name):
        return jnp.stack([params["net1"][name], params["net2"][name]], axis=0)

    ws = jnp.pad(stack("w_stem"), ((0, 0), (0, KP - 9), (0, 0))).astype(jnp.bfloat16)
    bs = stack("b_stem").reshape(2, 1, STEM_CH)
    wh = stack("w_head").astype(jnp.bfloat16)
    bh = stack("b_head").reshape(2, 1, NUM_FTRS).astype(jnp.bfloat16)
    wfc = jnp.pad(stack("w_fc"),
                  ((0, 0), (0, 0), (0, Hp - H))).astype(jnp.bfloat16)
    bfc = jnp.pad(stack("b_fc"), ((0, 0), (0, Hp - H))).reshape(2, 1, Hp)

    r = fused_mult_stage_branches(cols, ws, bs, wh, bh, wfc, bfc, S=S)
    # vote: Linear(2, 1) across the two branch outputs (tiny, plain jnp)
    out = (params["vote_w"][0] * r[0] + params["vote_w"][1] * r[1]
           + params["vote_b"][0])
    return out[:, :H]


# ----------------------------------------------------------------------------
# Pure-JAX f32 reference (same math, no Pallas) for validation.
# ----------------------------------------------------------------------------
def reference_forward(x1, x2, params):
    def branch(x, p):
        cols, _ = im2col_3x3_s2_same(x)                   # (B, S, 9)
        stem = cols @ p["w_stem"] + p["b_stem"]
        stem = stem * jax.nn.sigmoid(stem)
        head = stem @ p["w_head"] + p["b_head"]
        head = head * jax.nn.sigmoid(head)
        return jnp.mean(head, axis=1)                     # (B, 1280)
    f1 = branch(x1, params["net1"])
    f2 = branch(x2, params["net2"])
    r1 = f1 @ params["net1"]["w_fc"] + params["net1"]["b_fc"]
    r2 = f2 @ params["net2"]["w_fc"] + params["net2"]["b_fc"]
    return (params["vote_w"][0] * r1 + params["vote_w"][1] * r2
            + params["vote_b"][0])


# ----------------------------------------------------------------------------
if __name__ == "__main__":
    hidden_dim = 32
    B, C, H, W = 2, 1, 16, 16

    root = jax.random.PRNGKey(0)
    kx1, kx2, kn1, kn2, kv = jax.random.split(root, 5)

    x1 = jax.random.normal(kx1, (B, C, H, W), jnp.float32)
    x2 = jax.random.normal(kx2, (B, C, H, W), jnp.float32)

    params = {
        "net1": make_backbone_params(kn1, hidden_dim),
        "net2": make_backbone_params(kn2, hidden_dim),
        # nn.Linear(2, 1): weight (1, 2) flattened, bias (1,)
        "vote_w": 0.5 * jax.random.normal(kv, (2,), jnp.float32),
        "vote_b": jnp.zeros((1,), jnp.float32),
    }

    out = jax.jit(mult_stage_forward)(x1, x2, params)
    out = jax.block_until_ready(out)

    assert out.shape == (B, hidden_dim), out.shape
    assert jnp.all(jnp.isfinite(out))

    ref = reference_forward(x1, x2, params)
    max_err = float(jnp.max(jnp.abs(out - ref)))
    assert max_err < 5e-2, f"mismatch vs f32 reference: {max_err}"

    print("KERNEL_OK")
</pallas_src>

<mosaic_0001>
module attributes {stable_mosaic.version = 11 : i64} {
  func.func @_branch_kernel(%arg0: i32, %arg1: i32, %arg2: memref<1x128x16xbf16, #tpu.memory_space<vmem>>, %arg3: memref<1x16x32xbf16, #tpu.memory_space<vmem>>, %arg4: memref<1x1x32xf32, #tpu.memory_space<vmem>>, %arg5: memref<1x32x1280xbf16, #tpu.memory_space<vmem>>, %arg6: memref<1x1x1280xbf16, #tpu.memory_space<vmem>>, %arg7: memref<2x128xbf16, #tpu.memory_space<vmem>>, %arg8: memref<1x1280x128xbf16, #tpu.memory_space<vmem>>, %arg9: memref<1x1x128xf32, #tpu.memory_space<vmem>>, %arg10: memref<1x2x128xf32, #tpu.memory_space<vmem>>) attributes {dimension_semantics = [#tpu.dimension_semantics<parallel>, #tpu.dimension_semantics<parallel>], iteration_bounds = array<i64: 2, 1>, scalar_prefetch = 0 : i64, scratch_operands = 0 : i64, tpu.core_type = #tpu.core_type<tc>, window_params = [{transform_indices = @transform_0, window_bounds = array<i64: 1, 128, 16>}, {transform_indices = @transform_1, window_bounds = array<i64: 1, 16, 32>}, {transform_indices = @transform_2, window_bounds = array<i64: 1, 1, 32>}, {transform_indices = @transform_3, window_bounds = array<i64: 1, 32, 1280>}, {transform_indices = @transform_4, window_bounds = array<i64: 1, 1, 1280>}, {pipeline_mode = #tpu.pipeline_mode<synchronous>, transform_indices = @transform_5, window_bounds = array<i64: 2, 128>}, {transform_indices = @transform_6, window_bounds = array<i64: 1, 1280, 128>}, {transform_indices = @transform_7, window_bounds = array<i64: 1, 1, 128>}, {transform_indices = @transform_8, window_bounds = array<i64: 1, 2, 128>}]} {
    %c0 = arith.constant 0 : index
    %c0_0 = arith.constant 0 : index
    %c0_1 = arith.constant 0 : index
    %0 = vector.load %arg2[%c0, %c0_0, %c0_1] : memref<1x128x16xbf16, #tpu.memory_space<vmem>>, vector<1x128x16xbf16>
    %1 = vector.shape_cast %0 : vector<1x128x16xbf16> to vector<128x16xbf16>
    %c0_2 = arith.constant 0 : index
    %c0_3 = arith.constant 0 : index
    %c0_4 = arith.constant 0 : index
    %2 = vector.load %arg3[%c0_2, %c0_3, %c0_4] : memref<1x16x32xbf16, #tpu.memory_space<vmem>>, vector<1x16x32xbf16>
    %3 = vector.shape_cast %2 : vector<1x16x32xbf16> to vector<16x32xbf16>
    %cst = arith.constant dense<0.000000e+00> : vector<128x32xf32>
    %4 = tpu.matmul %1, %3, %cst {dimension_numbers = #tpu.dot_dimension_numbers<[1], [0], [0], [1], [0, 0, 1, 1], [], []>} : vector<128x16xbf16>, vector<16x32xbf16>, vector<128x32xf32> -> vector<128x32xf32>
    %c0_5 = arith.constant 0 : index
    %c0_6 = arith.constant 0 : index
    %c0_7 = arith.constant 0 : index
    %5 = vector.load %arg4[%c0_5, %c0_6, %c0_7] : memref<1x1x32xf32, #tpu.memory_space<vmem>>, vector<1x1x32xf32>
    %6 = vector.shape_cast %5 : vector<1x1x32xf32> to vector<1x32xf32>
    %7 = vector.broadcast %6 : vector<1x32xf32> to vector<128x32xf32>
    %8 = arith.addf %4, %7 : vector<128x32xf32>
    %9 = arith.negf %8 : vector<128x32xf32>
    %10 = math.exp %9 : vector<128x32xf32>
    %cst_8 = arith.constant 1.000000e+00 : f32
    %11 = vector.broadcast %cst_8 : f32 to vector<128x32xf32>
    %12 = arith.addf %11, %10 : vector<128x32xf32>
    %13 = arith.divf %11, %12 : vector<128x32xf32>
    %14 = arith.mulf %8, %13 : vector<128x32xf32>
    %15 = arith.truncf %14 : vector<128x32xf32> to vector<128x32xbf16>
    %c0_9 = arith.constant 0 : index
    %c0_10 = arith.constant 0 : index
    %c0_11 = arith.constant 0 : index
    %16 = vector.load %arg5[%c0_9, %c0_10, %c0_11] : memref<1x32x1280xbf16, #tpu.memory_space<vmem>>, vector<1x32x1280xbf16>
    %17 = vector.shape_cast %16 : vector<1x32x1280xbf16> to vector<32x1280xbf16>
    %cst_12 = arith.constant dense<0.000000e+00> : vector<128x1280xf32>
    %18 = tpu.matmul %15, %17, %cst_12 {dimension_numbers = #tpu.dot_dimension_numbers<[1], [0], [0], [1], [0, 0, 1, 1], [], []>} : vector<128x32xbf16>, vector<32x1280xbf16>, vector<128x1280xf32> -> vector<128x1280xf32>
    %19 = arith.truncf %18 : vector<128x1280xf32> to vector<128x1280xbf16>
    %c0_13 = arith.constant 0 : index
    %c0_14 = arith.constant 0 : index
    %c0_15 = arith.constant 0 : index
    %20 = vector.load %arg6[%c0_13, %c0_14, %c0_15] : memref<1x1x1280xbf16, #tpu.memory_space<vmem>>, vector<1x1x1280xbf16>
    %21 = vector.shape_cast %20 : vector<1x1x1280xbf16> to vector<1x1280xbf16>
    %22 = vector.broadcast %21 : vector<1x1280xbf16> to vector<128x1280xbf16>
    %23 = arith.addf %19, %22 : vector<128x1280xbf16>
    %24 = arith.negf %23 : vector<128x1280xbf16>
    %25 = math.exp %24 : vector<128x1280xbf16>
    %cst_16 = arith.constant 1.000000e+00 : bf16
    %26 = vector.broadcast %cst_16 : bf16 to vector<128x1280xbf16>
    %27 = arith.addf %26, %25 : vector<128x1280xbf16>
    %28 = arith.divf %26, %27 : vector<128x1280xbf16>
    %29 = arith.mulf %23, %28 : vector<128x1280xbf16>
    %c0_17 = arith.constant 0 : index
    %c0_18 = arith.constant 0 : index
    %30 = vector.load %arg7[%c0_17, %c0_18] : memref<2x128xbf16, #tpu.memory_space<vmem>>, vector<2x128xbf16>
    %cst_19 = arith.constant dense<0.000000e+00> : vector<2x1280xf32>
    %31 = tpu.matmul %30, %29, %cst_19 {dimension_numbers = #tpu.dot_dimension_numbers<[1], [0], [0], [1], [0, 0, 1, 1], [], []>} : vector<2x128xbf16>, vector<128x1280xbf16>, vector<2x1280xf32> -> vector<2x1280xf32>
    %32 = arith.truncf %31 : vector<2x1280xf32> to vector<2x1280xbf16>
    %c0_20 = arith.constant 0 : index
    %c0_21 = arith.constant 0 : index
    %c0_22 = arith.constant 0 : index
    %33 = vector.load %arg8[%c0_20, %c0_21, %c0_22] : memref<1x1280x128xbf16, #tpu.memory_space<vmem>>, vector<1x1280x128xbf16>
    %34 = vector.shape_cast %33 : vector<1x1280x128xbf16> to vector<1280x128xbf16>
    %cst_23 = arith.constant dense<0.000000e+00> : vector<2x128xf32>
    %35 = tpu.matmul %32, %34, %cst_23 {dimension_numbers = #tpu.dot_dimension_numbers<[1], [0], [0], [1], [0, 0, 1, 1], [], []>} : vector<2x1280xbf16>, vector<1280x128xbf16>, vector<2x128xf32> -> vector<2x128xf32>
    %c0_24 = arith.constant 0 : index
    %c0_25 = arith.constant 0 : index
    %c0_26 = arith.constant 0 : index
    %36 = vector.load %arg9[%c0_24, %c0_25, %c0_26] : memref<1x1x128xf32, #tpu.memory_space<vmem>>, vector<1x1x128xf32>
    %37 = vector.shape_cast %36 : vector<1x1x128xf32> to vector<1x128xf32>
    %38 = vector.broadcast %37 : vector<1x128xf32> to vector<2x128xf32>
    %39 = arith.addf %35, %38 : vector<2x128xf32>
    %c0_27 = arith.constant 0 : index
    %c0_28 = arith.constant 0 : index
    %c0_29 = arith.constant 0 : index
    %40 = vector.load %arg10[%c0_27, %c0_28, %c0_29] : memref<1x2x128xf32, #tpu.memory_space<vmem>>, vector<1x2x128xf32>
    %41 = vector.shape_cast %40 : vector<1x2x128xf32> to vector<2x128xf32>
    %42 = vector.shape_cast %39 : vector<2x128xf32> to vector<1x2x128xf32>
    tpu.vector_store %arg10[%c0_27, %c0_28, %c0_29], %42 {strides = array<i32>} : memref<1x2x128xf32, #tpu.memory_space<vmem>>, vector<1x2x128xf32>,
    return
  }
  func.func @transform_0(%arg0: i32, %arg1: i32) -> (i32, i32, i32) {
    %c0_i32 = arith.constant 0 : i32
    %c0_i32_0 = arith.constant 0 : i32
    return %arg0, %arg1, %c0_i32 : i32, i32, i32
  }
  func.func @transform_1(%arg0: i32, %arg1: i32) -> (i32, i32, i32) {
    %c0_i32 = arith.constant 0 : i32
    %c0_i32_0 = arith.constant 0 : i32
    %c0_i32_1 = arith.constant 0 : i32
    return %arg0, %c0_i32, %c0_i32_0 : i32, i32, i32
  }
  func.func @transform_2(%arg0: i32, %arg1: i32) -> (i32, i32, i32) {
    %c0_i32 = arith.constant 0 : i32
    %c0_i32_0 = arith.constant 0 : i32
    %c0_i32_1 = arith.constant 0 : i32
    return %arg0, %c0_i32, %c0_i32_0 : i32, i32, i32
  }
  func.func @transform_3(%arg0: i32, %arg1: i32) -> (i32, i32, i32) {
    %c0_i32 = arith.constant 0 : i32
    %c0_i32_0 = arith.constant 0 : i32
    %c0_i32_1 = arith.constant 0 : i32
    return %arg0, %c0_i32, %c0_i32_0 : i32, i32, i32
  }
  func.func @transform_4(%arg0: i32, %arg1: i32) -> (i32, i32, i32) {
    %c0_i32 = arith.constant 0 : i32
    %c0_i32_0 = arith.constant 0 : i32
    %c0_i32_1 = arith.constant 0 : i32
    return %arg0, %c0_i32, %c0_i32_0 : i32, i32, i32
  }
  func.func @transform_5(%arg0: i32, %arg1: i32) -> (i32, i32) {
    %c0_i32 = arith.constant 0 : i32
    %c0_i32_0 = arith.constant 0 : i32
    %c0_i32_1 = arith.constant 0 : i32
    return %c0_i32, %c0_i32_0 : i32, i32
  }
  func.func @transform_6(%arg0: i32, %arg1: i32) -> (i32, i32, i32) {
    %c0_i32 = arith.constant 0 : i32
    %c0_i32_0 = arith.constant 0 : i32
    %c0_i32_1 = arith.constant 0 : i32
    return %arg0, %c0_i32, %c0_i32_0 : i32, i32, i32
  }
  func.func @transform_7(%arg0: i32, %arg1: i32) -> (i32, i32, i32) {
    %c0_i32 = arith.constant 0 : i32
    %c0_i32_0 = arith.constant 0 : i32
    %c0_i32_1 = arith.constant 0 : i32
    return %arg0, %c0_i32, %c0_i32_0 : i32, i32, i32
  }
  func.func @transform_8(%arg0: i32, %arg1: i32) -> (i32, i32, i32) {
    %c0_i32 = arith.constant 0 : i32
    %c0_i32_0 = arith.constant 0 : i32
    return %arg0, %arg1, %c0_i32 : i32, i32, i32
  }
}

</mosaic_0001>

<llo_original>
// kernel: mult_stage_forward.1
$region0: #{mult_stage_forward.1}
  #allocation0 [shape = 'u32[]', space=smem, size = 0x4, offset = 0x4, fixed_abs, tag = 'smem constant byte address 0x4 - core index']
  #allocation1 [shape = 'u32[144,128]{1,0:T(1,128)}', space=vmem, size = 0x12000, scoped, tag = 'internal scratch']
  %s0 = inlined_call_operand.vmem [shape: bf16[2,128,16], index: 0, kind: input, shape index: {}]
  %s1 = inlined_call_operand.vmem [shape: bf16[2,16,32], index: 1, kind: input, shape index: {}]
  %s2 = inlined_call_operand.vmem [shape: f32[2,1,32], index: 2, kind: input, shape index: {}]
  %s3 = inlined_call_operand.vmem [shape: bf16[2,32,1280], index: 3, kind: input, shape index: {}]
  %s4 = inlined_call_operand.vmem [shape: bf16[2,1,1280], index: 4, kind: input, shape index: {}]
  %s5 = inlined_call_operand.vmem [shape: bf16[2,128], index: 5, kind: input, shape index: {}]
  %s6 = inlined_call_operand.vmem [shape: bf16[2,1280,128], index: 6, kind: input, shape index: {}]
  %s7 = inlined_call_operand.vmem [shape: f32[2,1,128], index: 7, kind: input, shape index: {}]
  %s8 = inlined_call_operand.vmem [shape: f32[2,2,128], index: 8, kind: output, shape index: {}]
  %s9 = sld [smem:[#allocation0]]
  $region65: #{mult_stage_forward.1} parent=0
    _
  %s11 = ssub.s32 1, %s9
  %s12 = scalar_select 0, %s11, %s9
  loop: start=0, step=1, limit=4
  $region2: #{mult_stage_forward.1} parent=0 // loop_pre_header
    _
  $region3: #{mult_stage_forward.1} parent=0 // loop_header
    %s14 = sphi 0, %s18
    %p15 = scmp.ge.s32.totalorder %s14, 4
    %s21 = sphi 0, %s33
    %s22 = sphi 0, %s29
    %s23 = sphi 0, %s21
    %s24 = sphi 0, %s22
    %s25 = sphi 0, %s23
    %s26 = sphi 0, %s24
    %s38 = sphi 0, %s40
    %s41 = sphi 0, %s38
    %s42 = sphi 0, %s41
    %s58 = sphi 0, %s42
    %s64 = sphi 0, %s66
    %s67 = sphi 0, %s64
    %s68 = sphi 0, %s67
    %s84 = sphi 0, %s68
    %s90 = sphi 0, %s92
    %s93 = sphi 0, %s90
    %s94 = sphi 0, %s93
    %s110 = sphi 0, %s94
    %s116 = sphi 0, %s118
    %s119 = sphi 0, %s116
    %s120 = sphi 0, %s119
    %s136 = sphi 0, %s120
    %s142 = sphi 0, %s144
    %s145 = sphi 0, %s142
    %s146 = sphi 0, %s145
    %s162 = sphi 0, %s146
    %s166 = sphi 0, %s166
    %s168 = sphi 0, %s166
    %s169 = sphi 0, %s168
    %s183 = sphi 0, %s169
    %s189 = sphi 0, %s191
    %s192 = sphi 0, %s189
    %s193 = sphi 0, %s192
    %s209 = sphi 0, %s193
    %s215 = sphi 0, %s217
    %s218 = sphi 0, %s215
    %s219 = sphi 0, %s218
    %s235 = sphi 0, %s219
    %s243 = sphi 0, %s245
    %s246 = sphi 0, %s243
    %s247 = sphi 0, %s246
    %s263 = sphi 0, %s247
  $region4: #{mult_stage_forward.1} parent=0 // loop_header_branch
    %17 = sbr.rel (%p15) target = $region8
  $region5: #{mult_stage_forward.1} parent=0 // loop_body
    %s19 = ssub.s32 %s14, 1
    %s20 = ssub.s32 %s14, 2
    %s27 = sadd.s32 1, %s22
    %p28 = scmp.ge.s32.totalorder %s27, 1
    %s29 = scalar_select %p28, 0, %s27
    %s30 = sadd.s32 1, %s21
    %s31 = scalar_select %p28, %s30, %s21
    %p32 = scmp.ge.s32.totalorder %s31, 2
    %s33 = scalar_select %p32, 0, %s31
    %s34 = ssub.s32 %s21, %s33
    %s35 = ssub.s32 %s22, %s29
    %s36 = sor.u32 %s34, %s35
    %p37 = scmp.eq.s32.totalorder %s36, 0
    %s39 = sadd.s32 %s38, 1
    %s40 = scalar_select %p37, %s38, %s39
    %p43 = pneg %p37
    %p44 = scmp.eq.s32.totalorder %s14, 1
    %p45 = por %p43, %p44
    %p46 = scmp.ne.s32.totalorder %s38, %s41
    %p47 = scmp.eq.s32.totalorder %s14, 0
    %p48 = por %p46, %p47
    %p49 = scmp.ne.s32.totalorder %s38, %s41
    %p50 = scmp.eq.s32.totalorder %s19, 1
    %p51 = por %p49, %p50
    %p52 = scmp.ne.s32.totalorder %s41, %s42
    %p53 = scmp.eq.s32.totalorder %s19, 0
    %p54 = por %p52, %p53
    %p55 = scmp.ne.s32.totalorder %s41, %s42
    %p56 = scmp.eq.s32.totalorder %s20, 1
    %p57 = por %p55, %p56
    %p59 = scmp.ne.s32.totalorder %s42, %s58
    %p60 = scmp.eq.s32.totalorder %s20, 0
    %p61 = por %p59, %p60
    %s62 = ssub.s32 %s21, %s33
    %p63 = scmp.eq.s32.totalorder %s62, 0
    %s65 = sadd.s32 %s64, 1
    %s66 = scalar_select %p63, %s64, %s65
    %p69 = pneg %p63
    %p70 = scmp.eq.s32.totalorder %s14, 1
    %p71 = por %p69, %p70
    %p72 = scmp.ne.s32.totalorder %s64, %s67
    %p73 = scmp.eq.s32.totalorder %s14, 0
    %p74 = por %p72, %p73
    %p75 = scmp.ne.s32.totalorder %s64, %s67
    %p76 = scmp.eq.s32.totalorder %s19, 1
    %p77 = por %p75, %p76
    %p78 = scmp.ne.s32.totalorder %s67, %s68
    %p79 = scmp.eq.s32.totalorder %s19, 0
    %p80 = por %p78, %p79
    %p81 = scmp.ne.s32.totalorder %s67, %s68
    %p82 = scmp.eq.s32.totalorder %s20, 1
    %p83 = por %p81, %p82
    %p85 = scmp.ne.s32.totalorder %s68, %s84
    %p86 = scmp.eq.s32.totalorder %s20, 0
    %p87 = por %p85, %p86
    %s88 = ssub.s32 %s21, %s33
    %p89 = scmp.eq.s32.totalorder %s88, 0
    %s91 = sadd.s32 %s90, 1
    %s92 = scalar_select %p89, %s90, %s91
    %p95 = pneg %p89
    %p96 = scmp.eq.s32.totalorder %s14, 1
    %p97 = por %p95, %p96
    %p98 = scmp.ne.s32.totalorder %s90, %s93
    %p99 = scmp.eq.s32.totalorder %s14, 0
    %p100 = por %p98, %p99
    %p101 = scmp.ne.s32.totalorder %s90, %s93
    %p102 = scmp.eq.s32.totalorder %s19, 1
    %p103 = por %p101, %p102
    %p104 = scmp.ne.s32.totalorder %s93, %s94
    %p105 = scmp.eq.s32.totalorder %s19, 0
    %p106 = por %p104, %p105
    %p107 = scmp.ne.s32.totalorder %s93, %s94
    %p108 = scmp.eq.s32.totalorder %s20, 1
    %p109 = por %p107, %p108
    %p111 = scmp.ne.s32.totalorder %s94, %s110
    %p112 = scmp.eq.s32.totalorder %s20, 0
    %p113 = por %p111, %p112
    %s114 = ssub.s32 %s21, %s33
    %p115 = scmp.eq.s32.totalorder %s114, 0
    %s117 = sadd.s32 %s116, 1
    %s118 = scalar_select %p115, %s116, %s117
    %p121 = pneg %p115
    %p122 = scmp.eq.s32.totalorder %s14, 1
    %p123 = por %p121, %p122
    %p124 = scmp.ne.s32.totalorder %s116, %s119
    %p125 = scmp.eq.s32.totalorder %s14, 0
    %p126 = por %p124, %p125
    %p127 = scmp.ne.s32.totalorder %s116, %s119
    %p128 = scmp.eq.s32.totalorder %s19, 1
    %p129 = por %p127, %p128
    %p130 = scmp.ne.s32.totalorder %s119, %s120
    %p131 = scmp.eq.s32.totalorder %s19, 0
    %p132 = por %p130, %p131
    %p133 = scmp.ne.s32.totalorder %s119, %s120
    %p134 = scmp.eq.s32.totalorder %s20, 1
    %p135 = por %p133, %p134
    %p137 = scmp.ne.s32.totalorder %s120, %s136
    %p138 = scmp.eq.s32.totalorder %s20, 0
    %p139 = por %p137, %p138
    %s140 = ssub.s32 %s21, %s33
    %p141 = scmp.eq.s32.totalorder %s140, 0
    %s143 = sadd.s32 %s142, 1
    %s144 = scalar_select %p141, %s142, %s143
    %p147 = pneg %p141
    %p148 = scmp.eq.s32.totalorder %s14, 1
    %p149 = por %p147, %p148
    %p150 = scmp.ne.s32.totalorder %s142, %s145
    %p151 = scmp.eq.s32.totalorder %s14, 0
    %p152 = por %p150, %p151
    %p153 = scmp.ne.s32.totalorder %s142, %s145
    %p154 = scmp.eq.s32.totalorder %s19, 1
    %p155 = por %p153, %p154
    %p156 = scmp.ne.s32.totalorder %s145, %s146
    %p157 = scmp.eq.s32.totalorder %s19, 0
    %p158 = por %p156, %p157
    %p159 = scmp.ne.s32.totalorder %s145, %s146
    %p160 = scmp.eq.s32.totalorder %s20, 1
    %p161 = por %p159, %p160
    %p163 = scmp.ne.s32.totalorder %s146, %s162
    %p164 = scmp.eq.s32.totalorder %s20, 0
    %p165 = por %p163, %p164
    %s167 = sadd.s32 %s166, 1
    %p170 = scmp.eq.s32.totalorder %s14, 1
    %p171 = scmp.ne.s32.totalorder %s166, %s168
    %p172 = scmp.eq.s32.totalorder %s14, 0
    %p173 = por %p171, %p172
    %p174 = scmp.ne.s32.totalorder %s166, %s168
    %p175 = scmp.eq.s32.totalorder %s19, 1
    %p176 = por %p174, %p175
    %p177 = scmp.ne.s32.totalorder %s168, %s169
    %p178 = scmp.eq.s32.totalorder %s19, 0
    %p179 = por %p177, %p178
    %p180 = scmp.ne.s32.totalorder %s168, %s169
    %p181 = scmp.eq.s32.totalorder %s20, 1
    %p182 = por %p180, %p181
    %p184 = scmp.ne.s32.totalorder %s169, %s183
    %p185 = scmp.eq.s32.totalorder %s20, 0
    %p186 = por %p184, %p185
    %s187 = ssub.s32 %s21, %s33
    %p188 = scmp.eq.s32.totalorder %s187, 0
    %s190 = sadd.s32 %s189, 1
    %s191 = scalar_select %p188, %s189, %s190
    %p194 = pneg %p188
    %p195 = scmp.eq.s32.totalorder %s14, 1
    %p196 = por %p194, %p195
    %p197 = scmp.ne.s32.totalorder %s189, %s192
    %p198 = scmp.eq.s32.totalorder %s14, 0
    %p199 = por %p197, %p198
    %p200 = scmp.ne.s32.totalorder %s189, %s192
    %p201 = scmp.eq.s32.totalorder %s19, 1
    %p202 = por %p200, %p201
    %p203 = scmp.ne.s32.totalorder %s192, %s193
    %p204 = scmp.eq.s32.totalorder %s19, 0
    %p205 = por %p203, %p204
    %p206 = scmp.ne.s32.totalorder %s192, %s193
    %p207 = scmp.eq.s32.totalorder %s20, 1
    %p208 = por %p206, %p207
    %p210 = scmp.ne.s32.totalorder %s193, %s209
    %p211 = scmp.eq.s32.totalorder %s20, 0
    %p212 = por %p210, %p211
    %s213 = ssub.s32 %s21, %s33
    %p214 = scmp.eq.s32.totalorder %s213, 0
    %s216 = sadd.s32 %s215, 1
    %s217 = scalar_select %p214, %s215, %s216
    %p220 = pneg %p214
    %p221 = scmp.eq.s32.totalorder %s14, 1
    %p222 = por %p220, %p221
    %p223 = scmp.ne.s32.totalorder %s215, %s218
    %p224 = scmp.eq.s32.totalorder %s14, 0
    %p225 = por %p223, %p224
    %p226 = scmp.ne.s32.totalorder %s215, %s218
    %p227 = scmp.eq.s32.totalorder %s19, 1
    %p228 = por %p226, %p227
    %p229 = scmp.ne.s32.totalorder %s218, %s219
    %p230 = scmp.eq.s32.totalorder %s19, 0
    %p231 = por %p229, %p230
    %p232 = scmp.ne.s32.totalorder %s218, %s219
    %p233 = scmp.eq.s32.totalorder %s20, 1
    %p234 = por %p232, %p233
    %p236 = scmp.ne.s32.totalorder %s219, %s235
    %p237 = scmp.eq.s32.totalorder %s20, 0
    %p238 = por %p236, %p237
    %s239 = ssub.s32 %s21, %s33
    %s240 = ssub.s32 %s22, %s29
    %s241 = sor.u32 %s239, %s240
    %p242 = scmp.eq.s32.totalorder %s241, 0
    %s244 = sadd.s32 %s243, 1
    %s245 = scalar_select %p242, %s243, %s244
    %p248 = pneg %p242
    %p249 = scmp.eq.s32.totalorder %s14, 1
    %p250 = por %p248, %p249
    %p251 = scmp.ne.s32.totalorder %s243, %s246
    %p252 = scmp.eq.s32.totalorder %s14, 0
    %p253 = por %p251, %p252
    %p254 = scmp.ne.s32.totalorder %s243, %s246
    %p255 = scmp.eq.s32.totalorder %s19, 1
    %p256 = por %p254, %p255
    %p257 = scmp.ne.s32.totalorder %s246, %s247
    %p258 = scmp.eq.s32.totalorder %s19, 0
    %p259 = por %p257, %p258
    %p260 = scmp.ne.s32.totalorder %s246, %s247
    %p261 = scmp.eq.s32.totalorder %s20, 1
    %p262 = por %p260, %p261
    %p264 = scmp.ne.s32.totalorder %s247, %s263
    %p265 = scmp.eq.s32.totalorder %s20, 0
    %p266 = por %p264, %p265
    %p267 = scmp.le.s32.totalorder 1, %s14
    %p268 = scmp.lt.s32.totalorder %s14, 3
    %p269 = pnand %p267, %p268
    %p270 = pneg %p269
    // Predicated region
    $region9: #{mult_stage_forward.1} parent=5 // pred_check
      _
    $region10: #{mult_stage_forward.1} parent=5 // pred_check_branch
      %272 = sbr.rel (%p269) target = $region12
    $region11: #{mult_stage_forward.1} parent=5 // pred_region
      %s273 = ssub.s32 %s14, 1
      // Predicated region
      $region13: #{mult_stage_forward.1} parent=11 // pred_check
        %p274 = pneg %p179
      $region14: #{mult_stage_forward.1} parent=11 // pred_check_branch
        %276 = sbr.rel (%p274) target = $region16
      $region15: #{mult_stage_forward.1} parent=11 // pred_region
        _
      $region16: #{mult_stage_forward.1} parent=11 // pred_fallthru
        _
    $region12: #{mult_stage_forward.1} parent=5 // pred_fallthru
      _
    %p277 = scmp.lt.s32.totalorder %s14, 2
    // Predicated region
    $region17: #{mult_stage_forward.1} parent=5 // pred_check
      %p278 = pneg %p277
    $region18: #{mult_stage_forward.1} parent=5 // pred_check_branch
      %280 = sbr.rel (%p278) target = $region20
    $region19: #{mult_stage_forward.1} parent=5 // pred_region
      // Predicated region
      $region21: #{mult_stage_forward.1} parent=19 // pred_check
        %p281 = pneg %p48
      $region22: #{mult_stage_forward.1} parent=19 // pred_check_branch
        %283 = sbr.rel (%p281) target = $region24
      $region23: #{mult_stage_forward.1} parent=19 // pred_region
        %s284 = smul.u32 16, %s22
        %p285 = scmp.lt.s32.totalorder %s21, 1
        %s286 = scalar_select %p285, %s21, 1
        %p287 = scmp.lt.s32.totalorder %s284, 15
        %s288 = scalar_select %p287, %s284, 15
        %s289 = smul.addr %s286, 16
        %s290 = sadd.s32 %s288, %s289
        %s291 = smul.addr %s290, 4
        %s292 = scalar_lea.vmem %s0, %s291
        %s293 = smul.u32 16, %s22
      $region24: #{mult_stage_forward.1} parent=19 // pred_fallthru
        _
      // Predicated region
      $region25: #{mult_stage_forward.1} parent=19 // pred_check
        %p294 = pneg %p74
      $region26: #{mult_stage_forward.1} parent=19 // pred_check_branch
        %296 = sbr.rel (%p294) target = $region28
      $region27: #{mult_stage_forward.1} parent=19 // pred_region
        %p297 = scmp.lt.s32.totalorder %s21, 1
        %s298 = scalar_select %p297, %s21, 1
        %s299 = smul.addr %s298, 2
        %s300 = smul.addr %s299, 4
        %s301 = scalar_lea.vmem %s1, %s300
      $region28: #{mult_stage_forward.1} parent=19 // pred_fallthru
        _
      // Predicated region
      $region29: #{mult_stage_forward.1} parent=19 // pred_check
        %p302 = pneg %p100
      $region30: #{mult_stage_forward.1} parent=19 // pred_check_branch
        %304 = sbr.rel (%p302) target = $region32
      $region31: #{mult_stage_forward.1} parent=19 // pred_region
        %p305 = scmp.lt.s32.totalorder %s21, 1
        %s306 = scalar_select %p305, %s21, 1
        %s307 = scalar_lea.vmem %s2, %s306
      $region32: #{mult_stage_forward.1} parent=19 // pred_fallthru
        _
      // Predicated region
      $region33: #{mult_stage_forward.1} parent=19 // pred_check
        %p308 = pneg %p126
      $region34: #{mult_stage_forward.1} parent=19 // pred_check_branch
        %310 = sbr.rel (%p308) target = $region36
      $region35: #{mult_stage_forward.1} parent=19 // pred_region
        %p311 = scmp.lt.s32.totalorder %s21, 1
        %s312 = scalar_select %p311, %s21, 1
        %s313 = smul.addr %s312, 40
        %s314 = smul.addr %s313, 4
        %s315 = scalar_lea.vmem %s3, %s314
      $region36: #{mult_stage_forward.1} parent=19 // pred_fallthru
        _
      // Predicated region
      $region37: #{mult_stage_forward.1} parent=19 // pred_check
        %p316 = pneg %p152
      $region38: #{mult_stage_forward.1} parent=19 // pred_check_branch
        %318 = sbr.rel (%p316) target = $region40
      $region39: #{mult_stage_forward.1} parent=19 // pred_region
        %p319 = scmp.lt.s32.totalorder %s21, 1
        %s320 = scalar_select %p319, %s21, 1
        %s321 = smul.addr %s320, 10
        %s322 = scalar_lea.vmem %s4, %s321
      $region40: #{mult_stage_forward.1} parent=19 // pred_fallthru
        _
      // Predicated region
      $region41: #{mult_stage_forward.1} parent=19 // pred_check
        %p323 = pneg %p199
      $region42: #{mult_stage_forward.1} parent=19 // pred_check_branch
        %325 = sbr.rel (%p323) target = $region44
      $region43: #{mult_stage_forward.1} parent=19 // pred_region
        %p326 = scmp.lt.s32.totalorder %s21, 1
        %s327 = scalar_select %p326, %s21, 1
        %s328 = smul.addr %s327, 160
        %s329 = smul.addr %s328, 4
        %s330 = scalar_lea.vmem %s6, %s329
      $region44: #{mult_stage_forward.1} parent=19 // pred_fallthru
        _
      // Predicated region
      $region45: #{mult_stage_forward.1} parent=19 // pred_check
        %p331 = pneg %p225
      $region46: #{mult_stage_forward.1} parent=19 // pred_check_branch
        %333 = sbr.rel (%p331) target = $region48
      $region47: #{mult_stage_forward.1} parent=19 // pred_region
        %p334 = scmp.lt.s32.totalorder %s21, 1
        %s335 = scalar_select %p334, %s21, 1
        %s336 = scalar_lea.vmem %s7, %s335
      $region48: #{mult_stage_forward.1} parent=19 // pred_fallthru
        _
    $region20: #{mult_stage_forward.1} parent=5 // pred_fallthru
      _
    %p337 = scmp.le.s32.totalorder 1, %s14
    %p338 = scmp.lt.s32.totalorder %s14, 3
    %p339 = pnand %p337, %p338
    %p340 = pneg %p339
    // Predicated region
    $region49: #{mult_stage_forward.1} parent=5 // pred_check
      _
    $region50: #{mult_stage_forward.1} parent=5 // pred_check_branch
      %342 = sbr.rel (%p339) target = $region52
    $region51: #{mult_stage_forward.1} parent=5 // pred_region
      %s343 = ssub.s32 %s14, 1
      %s344 = smul.u32 16, %s24
      %p345 = scmp.lt.s32.totalorder %s23, 1
      %s346 = scalar_select %p345, %s23, 1
      %p347 = scmp.lt.s32.totalorder %s344, 15
      %s348 = scalar_select %p347, %s344, 15
      %s349 = smul.addr %s346, 16
      %s350 = sadd.s32 %s348, %s349
      %s351 = smul.addr %s350, 4
      %s352 = scalar_lea.vmem %s0, %s351
      %p353 = pneg %p54
      %p354 = pneg %p51
      %p355 = scmp.lt.s32.totalorder %s23, 1
      %s356 = scalar_select %p355, %s23, 1
      %s357 = smul.addr %s356, 2
      %s358 = smul.addr %s357, 4
      %s359 = scalar_lea.vmem %s1, %s358
      %p360 = pneg %p80
      %p361 = pneg %p77
      %p362 = scmp.lt.s32.totalorder %s23, 1
      %s363 = scalar_select %p362, %s23, 1
      %s364 = scalar_lea.vmem %s2, %s363
      %p365 = pneg %p106
      %p366 = pneg %p103
      %p367 = scmp.lt.s32.totalorder %s23, 1
      %s368 = scalar_select %p367, %s23, 1
      %s369 = smul.addr %s368, 40
      %s370 = smul.addr %s369, 4
      %s371 = scalar_lea.vmem %s3, %s370
      %p372 = pneg %p132
      %p373 = pneg %p129
      %p374 = scmp.lt.s32.totalorder %s23, 1
      %s375 = scalar_select %p374, %s23, 1
      %s376 = smul.addr %s375, 10
      %s377 = scalar_lea.vmem %s4, %s376
      %p378 = pneg %p158
      %p379 = pneg %p155
      %p380 = pneg %p179
      %p381 = pneg %p176
      %p382 = scmp.lt.s32.totalorder %s23, 1
      %s383 = scalar_select %p382, %s23, 1
      %s384 = smul.addr %s383, 160
      %s385 = smul.addr %s384, 4
      %s386 = scalar_lea.vmem %s6, %s385
      %p387 = pneg %p205
      %p388 = pneg %p202
      %p389 = scmp.lt.s32.totalorder %s23, 1
      %s390 = scalar_select %p389, %s23, 1
      %s391 = scalar_lea.vmem %s7, %s390
      %p392 = pneg %p231
      %p393 = pneg %p228
      %p394 = pneg %p259
      %p395 = pneg %p256
      %p396 = scmp.lt.s32.totalorder %s23, 1
      %s397 = scalar_select %p396, %s23, 1
      %p398 = scmp.lt.s32.totalorder %s24, 0
      %s399 = scalar_select %p398, %s24, 0
      %s400 = sadd.s32 %s399, %s397
      %s401 = smul.addr %s400, 2
      %s402 = scalar_lea.vmem %s8, %s401
      %s403 = smul.u32 16, %s24
      %p404 = scmp.lt.s32.totalorder %s23, 1
      %s405 = scalar_select %p404, %s23, 1
      %p406 = scmp.lt.s32.totalorder %s403, 15
      %s407 = scalar_select %p406, %s403, 15
      %s408 = smul.addr %s405, 16
      %s409 = sadd.s32 %s407, %s408
      %s410 = smul.addr %s409, 4
      %s411 = scalar_lea.vmem %s0, %s410
      %s412 = smul.u32 16, %s24
      %p413 = scmp.lt.s32.totalorder %s23, 1
      %s414 = scalar_select %p413, %s23, 1
      %s415 = smul.addr %s414, 2
      %s416 = smul.addr %s415, 4
      %s417 = scalar_lea.vmem %s1, %s416
      %p418 = scmp.lt.s32.totalorder %s23, 1
      %s419 = scalar_select %p418, %s23, 1
      %s420 = scalar_lea.vmem %s2, %s419
      %p421 = scmp.lt.s32.totalorder %s23, 1
      %s422 = scalar_select %p421, %s23, 1
      %s423 = smul.addr %s422, 40
      %s424 = smul.addr %s423, 4
      %s425 = scalar_lea.vmem %s3, %s424
      %p426 = scmp.lt.s32.totalorder %s23, 1
      %s427 = scalar_select %p426, %s23, 1
      %s428 = smul.addr %s427, 10
      %s429 = scalar_lea.vmem %s4, %s428
      %p430 = scmp.lt.s32.totalorder %s23, 1
      %s431 = scalar_select %p430, %s23, 1
      %s432 = smul.addr %s431, 160
      %s433 = smul.addr %s432, 4
      %s434 = scalar_lea.vmem %s6, %s433
      %p435 = scmp.lt.s32.totalorder %s23, 1
      %s436 = scalar_select %p435, %s23, 1
      %s437 = scalar_lea.vmem %s7, %s436
      %p438 = scmp.lt.s32.totalorder %s23, 1
      %s439 = scalar_select %p438, %s23, 1
      %p440 = scmp.lt.s32.totalorder %s24, 0
      %s441 = scalar_select %p440, %s24, 0
      %s442 = sadd.s32 %s441, %s439
      %s443 = smul.addr %s442, 2
      %s444 = scalar_lea.vmem %s8, %s443
      %v447 = vld [vmem:[%s411] sm:$0xf]
      %v448 = vld [vmem:[%s411 + $0x4] sm:$0xf]
      %v449 = vld [vmem:[%s411 + $0x8] sm:$0xf]
      %v450 = vld [vmem:[%s411 + $0xc] sm:$0xf]
      %v451 = vld [vmem:[%s411 + $0x10] sm:$0xf]
      %v452 = vld [vmem:[%s411 + $0x14] sm:$0xf]
      %v453 = vld [vmem:[%s411 + $0x18] sm:$0xf]
      %v454 = vld [vmem:[%s411 + $0x1c] sm:$0xf]
      %v455 = vld [vmem:[%s411 + $0x20] sm:$0xf]
      %v456 = vld [vmem:[%s411 + $0x24] sm:$0xf]
      %v457 = vld [vmem:[%s411 + $0x28] sm:$0xf]
      %v458 = vld [vmem:[%s411 + $0x2c] sm:$0xf]
      %v459 = vld [vmem:[%s411 + $0x30] sm:$0xf]
      %v460 = vld [vmem:[%s411 + $0x34] sm:$0xf]
      %v461 = vld [vmem:[%s411 + $0x38] sm:$0xf]
      %v462 = vld [vmem:[%s411 + $0x3c] sm:$0xf]
      %v463 = vld [vmem:[%s417] sm:$0xf]
      %v464 = vld [vmem:[%s417 + $0x4] sm:$0xf]
      %v465 = vld [vmem:[%s420] sm:$0x1]
      %v467 = vlaneseq
      %v468 = vshrl.u32 %v467, 7
      %v469 = vsub.s32 0, %v468
      %v470 = vrot.slane %v465, %v469
      %v488 = vunpack.c.l.b16 %v447
      %v489 = vunpack.c.l.b16 %v448
      %v490 = vunpack.c.l.b16 %v449
      %v491 = vunpack.c.l.b16 %v450
      %v492 = vunpack.c.l.b16 %v451
      %v493 = vunpack.c.l.b16 %v452
      %v494 = vunpack.c.l.b16 %v453
      %v495 = vunpack.c.l.b16 %v454
      %v496 = vunpack.c.l.b16 %v455
      %v497 = vunpack.c.l.b16 %v456
      %v498 = vunpack.c.l.b16 %v457
      %v499 = vunpack.c.l.b16 %v458
      %v500 = vunpack.c.l.b16 %v459
      %v501 = vunpack.c.l.b16 %v460
      %v502 = vunpack.c.l.b16 %v461
      %v503 = vunpack.c.l.b16 %v462
      %v504 = vpack.c.b16 %v489, %v488
      %v505 = vpack.c.b16 %v491, %v490
      %v506 = vpack.c.b16 %v493, %v492
      %v507 = vpack.c.b16 %v495, %v494
      %v508 = vpack.c.b16 %v497, %v496
      %v509 = vpack.c.b16 %v499, %v498
      %v510 = vpack.c.b16 %v501, %v500
      %v511 = vpack.c.b16 %v503, %v502
      %v514 = vunpack.c.l.b16 %v463
      %v515 = vunpack.c.l.b16 %v464
      %v516 = vpack.c.b16 %v515, %v514
      %vm518 = vcmask 130048
      %v520 = vsel %vm518, %v504, 0
      %v523 = vsel %vm518, %v505, 0
      %v526 = vsel %vm518, %v506, 0
      %v529 = vsel %vm518, %v507, 0
      %v532 = vsel %vm518, %v508, 0
      %v535 = vsel %vm518, %v509, 0
      %v538 = vsel %vm518, %v510, 0
      %v541 = vsel %vm518, %v511, 0
      %543 = vmatprep.subr.bf16.mxu0 0
      %544 = vmatpush1.bf16.msra.mxu0 %v516
      %545 = vmatprep.subr.bf16.mxu0 0
      %546 = vmatpush1.bf16.msra.mxu0 0
      %547 = vmatprep.subr.bf16.mxu0 0
      %548 = vmatpush1.bf16.msra.mxu0 0
      %549 = vmatprep.subr.bf16.mxu0 0
      %550 = vmatpush1.bf16.msra.mxu0 0
      %551 = vmatprep.subr.bf16.mxu0 0
      %552 = vmatpush1.bf16.msra.mxu0 0
      %553 = vmatprep.subr.bf16.mxu0 0
      %554 = vmatpush1.bf16.msra.mxu0 0
      %555 = vmatprep.subr.bf16.mxu0 0
      %556 = vmatpush1.bf16.msra.mxu0 0
      %557 = vmatprep.subr.bf16.mxu0 0
      %558 = vmatpush1.bf16.msra.mxu0 0
      %559 = vmatprep.subr.bf16.mxu0 0
      %560 = vmatpush1.bf16.msra.mxu0 0
      %561 = vmatprep.subr.bf16.mxu0 0
      %562 = vmatpush1.bf16.msra.mxu0 0
      %563 = vmatprep.subr.bf16.mxu0 0
      %564 = vmatpush1.bf16.msra.mxu0 0
      %565 = vmatprep.subr.bf16.mxu0 0
      %566 = vmatpush1.bf16.msra.mxu0 0
      %567 = vmatprep.subr.bf16.mxu0 0
      %568 = vmatpush1.bf16.msra.mxu0 0
      %569 = vmatprep.subr.bf16.mxu0 0
      %570 = vmatpush1.bf16.msra.mxu0 0
      %571 = vmatprep.subr.bf16.mxu0 0
      %572 = vmatpush1.bf16.msra.mxu0 0
      %573 = vmatprep.subr.bf16.mxu0 0
      %574 = vmatpush1.bf16.msra.mxu0 0
      %575 = vmatprep.mubr.bf16.mxu0 0
      %576 = vmatmul.mubr.bf16.gmra.mrb[0].mxu0 %v520
      %v577 = vpop.f32.mrb[0].mxu0
      %v578 = vadd.f32 %v470, %v577
      %v579 = vpop.f32.mrb[0].mxu0
      %v580 = vpop.f32.mrb[0].mxu0
      %v581 = vadd.f32 %v470, %v580
      %v582 = vpop.f32.mrb[0].mxu0
      %583 = vmatprep.mubr.bf16.mxu0 0
      %584 = vmatmul.mubr.bf16.gmra.mrb[0].mxu0 %v523
      %v585 = vpop.f32.mrb[0].mxu0
      %v586 = vadd.f32 %v470, %v585
      %v587 = vpop.f32.mrb[0].mxu0
      %v588 = vpop.f32.mrb[0].mxu0
      %v589 = vadd.f32 %v470, %v588
      %v590 = vpop.f32.mrb[0].mxu0
      %591 = vmatprep.mubr.bf16.mxu0 0
      %592 = vmatmul.mubr.bf16.gmra.mrb[0].mxu0 %v526
      %v593 = vpop.f32.mrb[0].mxu0
      %v594 = vadd.f32 %v470, %v593
      %v595 = vpop.f32.mrb[0].mxu0
      %v596 = vpop.f32.mrb[0].mxu0
      %v597 = vadd.f32 %v470, %v596
      %v598 = vpop.f32.mrb[0].mxu0
      %599 = vmatprep.mubr.bf16.mxu0 0
      %600 = vmatmul.mubr.bf16.gmra.mrb[0].mxu0 %v529
      %v601 = vpop.f32.mrb[0].mxu0
      %v602 = vadd.f32 %v470, %v601
      %v603 = vpop.f32.mrb[0].mxu0
      %v604 = vpop.f32.mrb[0].mxu0
      %v605 = vadd.f32 %v470, %v604
      %v606 = vpop.f32.mrb[0].mxu0
      %607 = vmatprep.mubr.bf16.mxu0 0
      %608 = vmatmul.mubr.bf16.gmra.mrb[0].mxu0 %v532
      %v609 = vpop.f32.mrb[0].mxu0
      %v610 = vadd.f32 %v470, %v609
      %v611 = vpop.f32.mrb[0].mxu0
      %v612 = vpop.f32.mrb[0].mxu0
      %v613 = vadd.f32 %v470, %v612
      %v614 = vpop.f32.mrb[0].mxu0
      %615 = vmatprep.mubr.bf16.mxu0 0
      %616 = vmatmul.mubr.bf16.gmra.mrb[0].mxu0 %v535
      %v617 = vpop.f32.mrb[0].mxu0
      %v618 = vadd.f32 %v470, %v617
      %v619 = vpop.f32.mrb[0].mxu0
      %v620 = vpop.f32.mrb[0].mxu0
      %v621 = vadd.f32 %v470, %v620
      %v622 = vpop.f32.mrb[0].mxu0
      %623 = vmatprep.mubr.bf16.mxu0 0
      %624 = vmatmul.mubr.bf16.gmra.mrb[0].mxu0 %v538
      %v625 = vpop.f32.mrb[0].mxu0
      %v626 = vadd.f32 %v470, %v625
      %v627 = vpop.f32.mrb[0].mxu0
      %v628 = vpop.f32.mrb[0].mxu0
      %v629 = vadd.f32 %v470, %v628
      %v630 = vpop.f32.mrb[0].mxu0
      %631 = vmatprep.mubr.bf16.mxu0 0
      %632 = vmatmul.mubr.bf16.gmra.mrb[0].mxu0 %v541
      %v633 = vpop.f32.mrb[0].mxu0
      %v634 = vadd.f32 %v470, %v633
      %v635 = vpop.f32.mrb[0].mxu0
      %v636 = vpop.f32.mrb[0].mxu0
      %v637 = vadd.f32 %v470, %v636
      %v638 = vpop.f32.mrb[0].mxu0
      %639 = vdwg.mxu0
      %v640 = vxor.u32 %v578, 2147483648
      %v641 = vxor.u32 %v581, 2147483648
      %v642 = vxor.u32 %v586, 2147483648
      %v643 = vxor.u32 %v589, 2147483648
      %v644 = vxor.u32 %v594, 2147483648
      %v645 = vxor.u32 %v597, 2147483648
      %v646 = vxor.u32 %v602, 2147483648
      %v647 = vxor.u32 %v605, 2147483648
      %v648 = vxor.u32 %v610, 2147483648
      %v649 = vxor.u32 %v613, 2147483648
      %v650 = vxor.u32 %v618, 2147483648
      %v651 = vxor.u32 %v621, 2147483648
      %v652 = vxor.u32 %v626, 2147483648
      %v653 = vxor.u32 %v629, 2147483648
      %v654 = vxor.u32 %v634, 2147483648
      %v655 = vxor.u32 %v637, 2147483648
      %v656 = vmul.f32 %v640, 1.442695
      %v657 = vpow.pop %v656
      %v658 = vmul.f32 %v641, 1.442695
      %v659 = vpow.pop %v658
      %v660 = vmul.f32 %v642, 1.442695
      %v661 = vpow.pop %v660
      %v662 = vmul.f32 %v643, 1.442695
      %v663 = vpow.pop %v662
      %v664 = vmul.f32 %v644, 1.442695
      %v665 = vpow.pop %v664
      %v666 = vmul.f32 %v645, 1.442695
      %v667 = vpow.pop %v666
      %v668 = vmul.f32 %v646, 1.442695
      %v669 = vpow.pop %v668
      %v670 = vmul.f32 %v647, 1.442695
      %v671 = vpow.pop %v670
      %v672 = vmul.f32 %v648, 1.442695
      %v673 = vpow.pop %v672
      %v674 = vmul.f32 %v649, 1.442695
      %v675 = vpow.pop %v674
      %v676 = vmul.f32 %v650, 1.442695
      %v677 = vpow.pop %v676
      %v678 = vmul.f32 %v651, 1.442695
      %v679 = vpow.pop %v678
      %v680 = vmul.f32 %v652, 1.442695
      %v681 = vpow.pop %v680
      %v682 = vmul.f32 %v653, 1.442695
      %v683 = vpow.pop %v682
      %v684 = vmul.f32 %v654, 1.442695
      %v685 = vpow.pop %v684
      %v686 = vmul.f32 %v655, 1.442695
      %v687 = vpow.pop %v686
      %v688 = vadd.f32 %v657, 1.0
      %v689 = vadd.f32 %v659, 1.0
      %v690 = vadd.f32 %v661, 1.0
      %v691 = vadd.f32 %v663, 1.0
      %v692 = vadd.f32 %v665, 1.0
      %v693 = vadd.f32 %v667, 1.0
      %v694 = vadd.f32 %v669, 1.0
      %v695 = vadd.f32 %v671, 1.0
      %v696 = vadd.f32 %v673, 1.0
      %v697 = vadd.f32 %v675, 1.0
      %v698 = vadd.f32 %v677, 1.0
      %v699 = vadd.f32 %v679, 1.0
      %v700 = vadd.f32 %v681, 1.0
      %v701 = vadd.f32 %v683, 1.0
      %v702 = vadd.f32 %v685, 1.0
      %v703 = vadd.f32 %v687, 1.0
      %v704 = vrcp.pop %v688
      %v705 = vmul.f32 1.0, %v704
      %v706 = vrcp.pop %v689
      %v707 = vmul.f32 1.0, %v706
      %v708 = vrcp.pop %v690
      %v709 = vmul.f32 1.0, %v708
      %v710 = vrcp.pop %v691
      %v711 = vmul.f32 1.0, %v710
      %v712 = vrcp.pop %v692
      %v713 = vmul.f32 1.0, %v712
      %v714 = vrcp.pop %v693
      %v715 = vmul.f32 1.0, %v714
      %v716 = vrcp.pop %v694
      %v717 = vmul.f32 1.0, %v716
      %v718 = vrcp.pop %v695
      %v719 = vmul.f32 1.0, %v718
      %v720 = vrcp.pop %v696
      %v721 = vmul.f32 1.0, %v720
      %v722 = vrcp.pop %v697
      %v723 = vmul.f32 1.0, %v722
      %v724 = vrcp.pop %v698
      %v725 = vmul.f32 1.0, %v724
      %v726 = vrcp.pop %v699
      %v727 = vmul.f32 1.0, %v726
      %v728 = vrcp.pop %v700
      %v729 = vmul.f32 1.0, %v728
      %v730 = vrcp.pop %v701
      %v731 = vmul.f32 1.0, %v730
      %v732 = vrcp.pop %v702
      %v733 = vmul.f32 1.0, %v732
      %v734 = vrcp.pop %v703
      %v735 = vmul.f32 1.0, %v734
      %v736 = vmul.f32 %v578, %v705
      %v737 = vmul.f32 %v581, %v707
      %v738 = vmul.f32 %v586, %v709
      %v739 = vmul.f32 %v589, %v711
      %v740 = vmul.f32 %v594, %v713
      %v741 = vmul.f32 %v597, %v715
      %v742 = vmul.f32 %v602, %v717
      %v743 = vmul.f32 %v605, %v719
      %v744 = vmul.f32 %v610, %v721
      %v745 = vmul.f32 %v613, %v723
      %v746 = vmul.f32 %v618, %v725
      %v747 = vmul.f32 %v621, %v727
      %v748 = vmul.f32 %v626, %v729
      %v749 = vmul.f32 %v629, %v731
      %v750 = vmul.f32 %v634, %v733
      %v751 = vmul.f32 %v637, %v735
      %v752 = vpack.c.bf16 %v737, %v736
      %v753 = vpack.c.bf16 %v739, %v738
      %v754 = vpack.c.bf16 %v741, %v740
      %v755 = vpack.c.bf16 %v743, %v742
      %v756 = vpack.c.bf16 %v745, %v744
      %v757 = vpack.c.bf16 %v747, %v746
      %v758 = vpack.c.bf16 %v749, %v748
      %v759 = vpack.c.bf16 %v751, %v750
      %v760 = vld [vmem:[%s425] sm:$0xff]
      %v761 = vld [vmem:[%s425 + $0x8] sm:$0xff]
      %v762 = vld [vmem:[%s425 + $0x10] sm:$0xff]
      %v763 = vld [vmem:[%s425 + $0x18] sm:$0xff]
      %v764 = vld [vmem:[%s425 + $0x20] sm:$0xff]
      %v765 = vld [vmem:[%s425 + $0x28] sm:$0xff]
      %v766 = vld [vmem:[%s425 + $0x30] sm:$0xff]
      %v767 = vld [vmem:[%s425 + $0x38] sm:$0xff]
      %v768 = vld [vmem:[%s425 + $0x40] sm:$0xff]
      %v769 = vld [vmem:[%s425 + $0x48] sm:$0xff]
      %v770 = vld [vmem:[%s425 + $0x50] sm:$0xff]
      %v771 = vld [vmem:[%s425 + $0x58] sm:$0xff]
      %v772 = vld [vmem:[%s425 + $0x60] sm:$0xff]
      %v773 = vld [vmem:[%s425 + $0x68] sm:$0xff]
      %v774 = vld [vmem:[%s425 + $0x70] sm:$0xff]
      %v775 = vld [vmem:[%s425 + $0x78] sm:$0xff]
      %v776 = vld [vmem:[%s425 + $0x80] sm:$0xff]
      %v777 = vld [vmem:[%s425 + $0x88] sm:$0xff]
      %v778 = vld [vmem:[%s425 + $0x90] sm:$0xff]
      %v779 = vld [vmem:[%s425 + $0x98] sm:$0xff]
      %v800 = vunpack.c.l.b16 %v760
      %v801 = vunpack.c.h.b16 %v760
      %v802 = vunpack.c.l.b16 %v761
      %v803 = vunpack.c.h.b16 %v761
      %v804 = vunpack.c.l.b16 %v762
      %v805 = vunpack.c.h.b16 %v762
      %v806 = vunpack.c.l.b16 %v763
      %v807 = vunpack.c.h.b16 %v763
      %v808 = vunpack.c.l.b16 %v764
      %v809 = vunpack.c.h.b16 %v764
      %v810 = vunpack.c.l.b16 %v765
      %v811 = vunpack.c.h.b16 %v765
      %v812 = vunpack.c.l.b16 %v766
      %v813 = vunpack.c.h.b16 %v766
      %v814 = vunpack.c.l.b16 %v767
      %v815 = vunpack.c.h.b16 %v767
      %v816 = vunpack.c.l.b16 %v768
      %v817 = vunpack.c.h.b16 %v768
      %v818 = vunpack.c.l.b16 %v769
      %v819 = vunpack.c.h.b16 %v769
      %v820 = vunpack.c.l.b16 %v770
      %v821 = vunpack.c.h.b16 %v770
      %v822 = vunpack.c.l.b16 %v771
      %v823 = vunpack.c.h.b16 %v771
      %v824 = vunpack.c.l.b16 %v772
      %v825 = vunpack.c.h.b16 %v772
      %v826 = vunpack.c.l.b16 %v773
      %v827 = vunpack.c.h.b16 %v773
      %v828 = vunpack.c.l.b16 %v774
      %v829 = vunpack.c.h.b16 %v774
      %v830 = vunpack.c.l.b16 %v775
      %v831 = vunpack.c.h.b16 %v775
      %v832 = vunpack.c.l.b16 %v776
      %v833 = vunpack.c.h.b16 %v776
      %v834 = vunpack.c.l.b16 %v777
      %v835 = vunpack.c.h.b16 %v777
      %v836 = vunpack.c.l.b16 %v778
      %v837 = vunpack.c.h.b16 %v778
      %v838 = vunpack.c.l.b16 %v779
      %v839 = vunpack.c.h.b16 %v779
      %v840 = vpack.c.b16 %v810, %v800
      %v841 = vpack.c.b16 %v811, %v801
      %v842 = vpack.c.b16 %v812, %v802
      %v843 = vpack.c.b16 %v813, %v803
      %v844 = vpack.c.b16 %v814, %v804
      %v845 = vpack.c.b16 %v815, %v805
      %v846 = vpack.c.b16 %v816, %v806
      %v847 = vpack.c.b16 %v817, %v807
      %v848 = vpack.c.b16 %v818, %v808
      %v849 = vpack.c.b16 %v819, %v809
      %v850 = vpack.c.b16 %v830, %v820
      %v851 = vpack.c.b16 %v831, %v821
      %v852 = vpack.c.b16 %v832, %v822
      %v853 = vpack.c.b16 %v833, %v823
      %v854 = vpack.c.b16 %v834, %v824
      %v855 = vpack.c.b16 %v835, %v825
      %v856 = vpack.c.b16 %v836, %v826
      %v857 = vpack.c.b16 %v837, %v827
      %v858 = vpack.c.b16 %v838, %v828
      %v859 = vpack.c.b16 %v839, %v829
      %vm880 = vcmask 261120
      %v882 = vsel %vm880, %v752, 0
      %v885 = vsel %vm880, %v753, 0
      %v888 = vsel %vm880, %v754, 0
      %v891 = vsel %vm880, %v755, 0
      %v894 = vsel %vm880, %v756, 0
      %v897 = vsel %vm880, %v757, 0
      %v900 = vsel %vm880, %v758, 0
      %v903 = vsel %vm880, %v759, 0
      %905 = vmatprep.subr.bf16.mxu0 %v841
      %906 = vmatpush1.bf16.msra.mxu0 %v840
      %907 = vmatprep.subr.bf16.mxu0 %v851
      %908 = vmatpush1.bf16.msra.mxu0 %v850
      %909 = vmatprep.subr.bf16.mxu0 0
      %910 = vmatpush1.bf16.msra.mxu0 0
      %911 = vmatprep.subr.bf16.mxu0 0
      %912 = vmatpush1.bf16.msra.mxu0 0
      %913 = vmatprep.subr.bf16.mxu0 0
      %914 = vmatpush1.bf16.msra.mxu0 0
      %915 = vmatprep.subr.bf16.mxu0 0
      %916 = vmatpush1.bf16.msra.mxu0 0
      %917 = vmatprep.subr.bf16.mxu0 0
      %918 = vmatpush1.bf16.msra.mxu0 0
      %919 = vmatprep.subr.bf16.mxu0 0
      %920 = vmatpush1.bf16.msra.mxu0 0
      %921 = vmatprep.subr.bf16.mxu0 0
      %922 = vmatpush1.bf16.msra.mxu0 0
      %923 = vmatprep.subr.bf16.mxu0 0
      %924 = vmatpush1.bf16.msra.mxu0 0
      %925 = vmatprep.subr.bf16.mxu0 0
      %926 = vmatpush1.bf16.msra.mxu0 0
      %927 = vmatprep.subr.bf16.mxu0 0
      %928 = vmatpush1.bf16.msra.mxu0 0
      %929 = vmatprep.subr.bf16.mxu0 0
      %930 = vmatpush1.bf16.msra.mxu0 0
      %931 = vmatprep.subr.bf16.mxu0 0
      %932 = vmatpush1.bf16.msra.mxu0 0
      %933 = vmatprep.subr.bf16.mxu0 0
      %934 = vmatpush1.bf16.msra.mxu0 0
      %935 = vmatprep.subr.bf16.mxu0 0
      %936 = vmatpush1.bf16.msra.mxu0 0
      %937 = vmatprep.mubr.bf16.mxu0 0
      %938 = vmatmul.mubr.bf16.gmra.mrb[0].mxu0 %v882
      %v939 = vpop.f32.mrb[0].mxu0
      %v940 = vadd.f32 0.0, %v939
      %v941 = vpop.f32.mrb[0].mxu0
      %v942 = vadd.f32 0.0, %v941
      %v943 = vpop.f32.mrb[0].mxu0
      %v944 = vadd.f32 0.0, %v943
      %v945 = vpop.f32.mrb[0].mxu0
      %v946 = vadd.f32 0.0, %v945
      %947 = vmatprep.mubr.bf16.mxu0 0
      %948 = vmatmul.mubr.bf16.gmra.mrb[0].mxu0 %v885
      %v949 = vpop.f32.mrb[0].mxu0
      %v950 = vadd.f32 0.0, %v949
      %v951 = vpop.f32.mrb[0].mxu0
      %v952 = vadd.f32 0.0, %v951
      %v953 = vpop.f32.mrb[0].mxu0
      %v954 = vadd.f32 0.0, %v953
      %v955 = vpop.f32.mrb[0].mxu0
      %v956 = vadd.f32 0.0, %v955
      %957 = vmatprep.mubr.bf16.mxu0 0
      %958 = vmatmul.mubr.bf16.gmra.mrb[0].mxu0 %v888
      %v959 = vpop.f32.mrb[0].mxu0
      %v960 = vadd.f32 0.0, %v959
      %v961 = vpop.f32.mrb[0].mxu0
      %v962 = vadd.f32 0.0, %v961
      %v963 = vpop.f32.mrb[0].mxu0
      %v964 = vadd.f32 0.0, %v963
      %v965 = vpop.f32.mrb[0].mxu0
      %v966 = vadd.f32 0.0, %v965
      %967 = vmatprep.mubr.bf16.mxu0 0
      %968 = vmatmul.mubr.bf16.gmra.mrb[0].mxu0 %v891
      %v969 = vpop.f32.mrb[0].mxu0
      %v970 = vadd.f32 0.0, %v969
      %v971 = vpop.f32.mrb[0].mxu0
      %v972 = vadd.f32 0.0, %v971
      %v973 = vpop.f32.mrb[0].mxu0
      %v974 = vadd.f32 0.0, %v973
      %v975 = vpop.f32.mrb[0].mxu0
      %v976 = vadd.f32 0.0, %v975
      %977 = vmatprep.mubr.bf16.mxu0 0
      %978 = vmatmul.mubr.bf16.gmra.mrb[0].mxu0 %v894
      %v979 = vpop.f32.mrb[0].mxu0
      %v980 = vadd.f32 0.0, %v979
      %v981 = vpop.f32.mrb[0].mxu0
      %v982 = vadd.f32 0.0, %v981
      %v983 = vpop.f32.mrb[0].mxu0
      %v984 = vadd.f32 0.0, %v983
      %v985 = vpop.f32.mrb[0].mxu0
      %v986 = vadd.f32 0.0, %v985
      %987 = vmatprep.mubr.bf16.mxu0 0
      %988 = vmatmul.mubr.bf16.gmra.mrb[0].mxu0 %v897
      %v989 = vpop.f32.mrb[0].mxu0
      %v990 = vadd.f32 0.0, %v989
      %v991 = vpop.f32.mrb[0].mxu0
      %v992 = vadd.f32 0.0, %v991
      %v993 = vpop.f32.mrb[0].mxu0
      %v994 = vadd.f32 0.0, %v993
      %v995 = vpop.f32.mrb[0].mxu0
      %v996 = vadd.f32 0.0, %v995
      %997 = vmatprep.mubr.bf16.mxu0 0
      %998 = vmatmul.mubr.bf16.gmra.mrb[0].mxu0 %v900
      %v999 = vpop.f32.mrb[0].mxu0
      %v1000 = vadd.f32 0.0, %v999
      %v1001 = vpop.f32.mrb[0].mxu0
      %v1002 = vadd.f32 0.0, %v1001
      %v1003 = vpop.f32.mrb[0].mxu0
      %v1004 = vadd.f32 0.0, %v1003
      %v1005 = vpop.f32.mrb[0].mxu0
      %v1006 = vadd.f32 0.0, %v1005
      %1007 = vmatprep.mubr.bf16.mxu0 0
      %1008 = vmatmul.mubr.bf16.gmra.mrb[0].mxu0 %v903
      %v1009 = vpop.f32.mrb[0].mxu0
      %v1010 = vadd.f32 0.0, %v1009
      %v1011 = vpop.f32.mrb[0].mxu0
      %v1012 = vadd.f32 0.0, %v1011
      %v1013 = vpop.f32.mrb[0].mxu0
      %v1014 = vadd.f32 0.0, %v1013
      %v1015 = vpop.f32.mrb[0].mxu0
      %v1016 = vadd.f32 0.0, %v1015
      %1017 = vdwg.mxu0
      %1018 = vmatprep.subr.bf16.mxu0 %v843
      %1019 = vmatpush1.bf16.msra.mxu0 %v842
      %1020 = vmatprep.subr.bf16.mxu0 %v853
      %1021 = vmatpush1.bf16.msra.mxu0 %v852
      %1022 = vmatprep.subr.bf16.mxu0 0
      %1023 = vmatpush1.bf16.msra.mxu0 0
      %1024 = vmatprep.subr.bf16.mxu0 0
      %1025 = vmatpush1.bf16.msra.mxu0 0
      %1026 = vmatprep.subr.bf16.mxu0 0
      %1027 = vmatpush1.bf16.msra.mxu0 0
      %1028 = vmatprep.subr.bf16.mxu0 0
      %1029 = vmatpush1.bf16.msra.mxu0 0
      %1030 = vmatprep.subr.bf16.mxu0 0
      %1031 = vmatpush1.bf16.msra.mxu0 0
      %1032 = vmatprep.subr.bf16.mxu0 0
      %1033 = vmatpush1.bf16.msra.mxu0 0
      %1034 = vmatprep.subr.bf16.mxu0 0
      %1035 = vmatpush1.bf16.msra.mxu0 0
      %1036 = vmatprep.subr.bf16.mxu0 0
      %1037 = vmatpush1.bf16.msra.mxu0 0
      %1038 = vmatprep.subr.bf16.mxu0 0
      %1039 = vmatpush1.bf16.msra.mxu0 0
      %1040 = vmatprep.subr.bf16.mxu0 0
      %1041 = vmatpush1.bf16.msra.mxu0 0
      %1042 = vmatprep.subr.bf16.mxu0 0
      %1043 = vmatpush1.bf16.msra.mxu0 0
      %1044 = vmatprep.subr.bf16.mxu0 0
      %1045 = vmatpush1.bf16.msra.mxu0 0
      %1046 = vmatprep.subr.bf16.mxu0 0
      %1047 = vmatpush1.bf16.msra.mxu0 0
      %1048 = vmatprep.subr.bf16.mxu0 0
      %1049 = vmatpush1.bf16.msra.mxu0 0
      %1050 = vmatprep.mubr.bf16.mxu0 0
      %1051 = vmatmul.mubr.bf16.gmra.mrb[0].mxu0 %v882
      %v1052 = vpop.f32.mrb[0].mxu0
      %v1053 = vadd.f32 0.0, %v1052
      %v1054 = vpop.f32.mrb[0].mxu0
      %v1055 = vadd.f32 0.0, %v1054
      %v1056 = vpop.f32.mrb[0].mxu0
      %v1057 = vadd.f32 0.0, %v1056
      %v1058 = vpop.f32.mrb[0].mxu0
      %v1059 = vadd.f32 0.0, %v1058
      %1060 = vmatprep.mubr.bf16.mxu0 0
      %1061 = vmatmul.mubr.bf16.gmra.mrb[0].mxu0 %v885
      %v1062 = vpop.f32.mrb[0].mxu0
      %v1063 = vadd.f32 0.0, %v1062
      %v1064 = vpop.f32.mrb[0].mxu0
      %v1065 = vadd.f32 0.0, %v1064
      %v1066 = vpop.f32.mrb[0].mxu0
      %v1067 = vadd.f32 0.0, %v1066
      %v1068 = vpop.f32.mrb[0].mxu0
      %v1069 = vadd.f32 0.0, %v1068
      %1070 = vmatprep.mubr.bf16.mxu0 0
      %1071 = vmatmul.mubr.bf16.gmra.mrb[0].mxu0 %v888
      %v1072 = vpop.f32.mrb[0].mxu0
      %v1073 = vadd.f32 0.0, %v1072
      %v1074 = vpop.f32.mrb[0].mxu0
      %v1075 = vadd.f32 0.0, %v1074
      %v1076 = vpop.f32.mrb[0].mxu0
      %v1077 = vadd.f32 0.0, %v1076
      %v1078 = vpop.f32.mrb[0].mxu0
      %v1079 = vadd.f32 0.0, %v1078
      %1080 = vmatprep.mubr.bf16.mxu0 0
      %1081 = vmatmul.mubr.bf16.gmra.mrb[0].mxu0 %v891
      %v1082 = vpop.f32.mrb[0].mxu0
      %v1083 = vadd.f32 0.0, %v1082
      %v1084 = vpop.f32.mrb[0].mxu0
      %v1085 = vadd.f32 0.0, %v1084
      %v1086 = vpop.f32.mrb[0].mxu0
      %v1087 = vadd.f32 0.0, %v1086
      %v1088 = vpop.f32.mrb[0].mxu0
      %v1089 = vadd.f32 0.0, %v1088
      %1090 = vmatprep.mubr.bf16.mxu0 0
      %1091 = vmatmul.mubr.bf16.gmra.mrb[0].mxu0 %v894
      %v1092 = vpop.f32.mrb[0].mxu0
      %v1093 = vadd.f32 0.0, %v1092
      %v1094 = vpop.f32.mrb[0].mxu0
      %v1095 = vadd.f32 0.0, %v1094
      %v1096 = vpop.f32.mrb[0].mxu0
      %v1097 = vadd.f32 0.0, %v1096
      %v1098 = vpop.f32.mrb[0].mxu0
      %v1099 = vadd.f32 0.0, %v1098
      %1100 = vmatprep.mubr.bf16.mxu0 0
      %1101 = vmatmul.mubr.bf16.gmra.mrb[0].mxu0 %v897
      %v1102 = vpop.f32.mrb[0].mxu0
      %v1103 = vadd.f32 0.0, %v1102
      %v1104 = vpop.f32.mrb[0].mxu0
      %v1105 = vadd.f32 0.0, %v1104
      %v1106 = vpop.f32.mrb[0].mxu0
      %v1107 = vadd.f32 0.0, %v1106
      %v1108 = vpop.f32.mrb[0].mxu0
      %v1109 = vadd.f32 0.0, %v1108
      %1110 = vmatprep.mubr.bf16.mxu0 0
      %1111 = vmatmul.mubr.bf16.gmra.mrb[0].mxu0 %v900
      %v1112 = vpop.f32.mrb[0].mxu0
      %v1113 = vadd.f32 0.0, %v1112
      %v1114 = vpop.f32.mrb[0].mxu0
      %v1115 = vadd.f32 0.0, %v1114
      %v1116 = vpop.f32.mrb[0].mxu0
      %v1117 = vadd.f32 0.0, %v1116
      %v1118 = vpop.f32.mrb[0].mxu0
      %v1119 = vadd.f32 0.0, %v1118
      %1120 = vmatprep.mubr.bf16.mxu0 0
      %1121 = vmatmul.mubr.bf16.gmra.mrb[0].mxu0 %v903
      %v1122 = vpop.f32.mrb[0].mxu0
      %v1123 = vadd.f32 0.0, %v1122
      %v1124 = vpop.f32.mrb[0].mxu0
      %v1125 = vadd.f32 0.0, %v1124
      %v1126 = vpop.f32.mrb[0].mxu0
      %v1127 = vadd.f32 0.0, %v1126
      %v1128 = vpop.f32.mrb[0].mxu0
      %v1129 = vadd.f32 0.0, %v1128
      %1130 = vdwg.mxu0
      %1131 = vmatprep.subr.bf16.mxu0 %v845
      %1132 = vmatpush1.bf16.msra.mxu0 %v844
      %1133 = vmatprep.subr.bf16.mxu0 %v855
      %1134 = vmatpush1.bf16.msra.mxu0 %v854
      %1135 = vmatprep.subr.bf16.mxu0 0
      %1136 = vmatpush1.bf16.msra.mxu0 0
      %1137 = vmatprep.subr.bf16.mxu0 0
      %1138 = vmatpush1.bf16.msra.mxu0 0
      %1139 = vmatprep.subr.bf16.mxu0 0
      %1140 = vmatpush1.bf16.msra.mxu0 0
      %1141 = vmatprep.subr.bf16.mxu0 0
      %1142 = vmatpush1.bf16.msra.mxu0 0
      %1143 = vmatprep.subr.bf16.mxu0 0
      %1144 = vmatpush1.bf16.msra.mxu0 0
      %1145 = vmatprep.subr.bf16.mxu0 0
      %1146 = vmatpush1.bf16.msra.mxu0 0
      %1147 = vmatprep.subr.bf16.mxu0 0
      %1148 = vmatpush1.bf16.msra.mxu0 0
      %1149 = vmatprep.subr.bf16.mxu0 0
      %1150 = vmatpush1.bf16.msra.mxu0 0
      %1151 = vmatprep.subr.bf16.mxu0 0
      %1152 = vmatpush1.bf16.msra.mxu0 0
      %1153 = vmatprep.subr.bf16.mxu0 0
      %1154 = vmatpush1.bf16.msra.mxu0 0
      %1155 = vmatprep.subr.bf16.mxu0 0
      %1156 = vmatpush1.bf16.msra.mxu0 0
      %1157 = vmatprep.subr.bf16.mxu0 0
      %1158 = vmatpush1.bf16.msra.mxu0 0
      %1159 = vmatprep.subr.bf16.mxu0 0
      %1160 = vmatpush1.bf16.msra.mxu0 0
      %1161 = vmatprep.subr.bf16.mxu0 0
      %1162 = vmatpush1.bf16.msra.mxu0 0
      %1163 = vmatprep.mubr.bf16.mxu0 0
      %1164 = vmatmul.mubr.bf16.gmra.mrb[0].mxu0 %v882
      %v1165 = vpop.f32.mrb[0].mxu0
      %v1166 = vadd.f32 0.0, %v1165
      %v1167 = vpop.f32.mrb[0].mxu0
      %v1168 = vadd.f32 0.0, %v1167
      %v1169 = vpop.f32.mrb[0].mxu0
      %v1170 = vadd.f32 0.0, %v1169
      %v1171 = vpop.f32.mrb[0].mxu0
      %v1172 = vadd.f32 0.0, %v1171
      %1173 = vmatprep.mubr.bf16.mxu0 0
      %1174 = vmatmul.mubr.bf16.gmra.mrb[0].mxu0 %v885
      %v1175 = vpop.f32.mrb[0].mxu0
      %v1176 = vadd.f32 0.0, %v1175
      %v1177 = vpop.f32.mrb[0].mxu0
      %v1178 = vadd.f32 0.0, %v1177
      %v1179 = vpop.f32.mrb[0].mxu0
      %v1180 = vadd.f32 0.0, %v1179
      %v1181 = vpop.f32.mrb[0].mxu0
      %v1182 = vadd.f32 0.0, %v1181
      %1183 = vmatprep.mubr.bf16.mxu0 0
      %1184 = vmatmul.mubr.bf16.gmra.mrb[0].mxu0 %v888
      %v1185 = vpop.f32.mrb[0].mxu0
      %v1186 = vadd.f32 0.0, %v1185
      %v1187 = vpop.f32.mrb[0].mxu0
      %v1188 = vadd.f32 0.0, %v1187
      %v1189 = vpop.f32.mrb[0].mxu0
      %v1190 = vadd.f32 0.0, %v1189
      %v1191 = vpop.f32.mrb[0].mxu0
      %v1192 = vadd.f32 0.0, %v1191
      %1193 = vmatprep.mubr.bf16.mxu0 0
      %1194 = vmatmul.mubr.bf16.gmra.mrb[0].mxu0 %v891
      %v1195 = vpop.f32.mrb[0].mxu0
      %v1196 = vadd.f32 0.0, %v1195
      %v1197 = vpop.f32.mrb[0].mxu0
      %v1198 = vadd.f32 0.0, %v1197
      %v1199 = vpop.f32.mrb[0].mxu0
      %v1200 = vadd.f32 0.0, %v1199
      %v1201 = vpop.f32.mrb[0].mxu0
      %v1202 = vadd.f32 0.0, %v1201
      %1203 = vmatprep.mubr.bf16.mxu0 0
      %1204 = vmatmul.mubr.bf16.gmra.mrb[0].mxu0 %v894
      %v1205 = vpop.f32.mrb[0].mxu0
      %v1206 = vadd.f32 0.0, %v1205
      %v1207 = vpop.f32.mrb[0].mxu0
      %v1208 = vadd.f32 0.0, %v1207
      %v1209 = vpop.f32.mrb[0].mxu0
      %v1210 = vadd.f32 0.0, %v1209
      %v1211 = vpop.f32.mrb[0].mxu0
      %v1212 = vadd.f32 0.0, %v1211
      %1213 = vmatprep.mubr.bf16.mxu0 0
      %1214 = vmatmul.mubr.bf16.gmra.mrb[0].mxu0 %v897
      %v1215 = vpop.f32.mrb[0].mxu0
      %v1216 = vadd.f32 0.0, %v1215
      %v1217 = vpop.f32.mrb[0].mxu0
      %v1218 = vadd.f32 0.0, %v1217
      %v1219 = vpop.f32.mrb[0].mxu0
      %v1220 = vadd.f32 0.0, %v1219
      %v1221 = vpop.f32.mrb[0].mxu0
      %v1222 = vadd.f32 0.0, %v1221
      %1223 = vmatprep.mubr.bf16.mxu0 0
      %1224 = vmatmul.mubr.bf16.gmra.mrb[0].mxu0 %v900
      %v1225 = vpop.f32.mrb[0].mxu0
      %v1226 = vadd.f32 0.0, %v1225
      %v1227 = vpop.f32.mrb[0].mxu0
      %v1228 = vadd.f32 0.0, %v1227
      %v1229 = vpop.f32.mrb[0].mxu0
      %v1230 = vadd.f32 0.0, %v1229
      %v1231 = vpop.f32.mrb[0].mxu0
      %v1232 = vadd.f32 0.0, %v1231
      %1233 = vmatprep.mubr.bf16.mxu0 0
      %1234 = vmatmul.mubr.bf16.gmra.mrb[0].mxu0 %v903
      %v1235 = vpop.f32.mrb[0].mxu0
      %v1236 = vadd.f32 0.0, %v1235
      %v1237 = vpop.f32.mrb[0].mxu0
      %v1238 = vadd.f32 0.0, %v1237
      %v1239 = vpop.f32.mrb[0].mxu0
      %v1240 = vadd.f32 0.0, %v1239
      %v1241 = vpop.f32.mrb[0].mxu0
      %v1242 = vadd.f32 0.0, %v1241
      %1243 = vdwg.mxu0
      %1244 = vmatprep.subr.bf16.mxu0 %v847
      %1245 = vmatpush1.bf16.msra.mxu0 %v846
      %1246 = vmatprep.subr.bf16.mxu0 %v857
      %1247 = vmatpush1.bf16.msra.mxu0 %v856
      %1248 = vmatprep.subr.bf16.mxu0 0
      %1249 = vmatpush1.bf16.msra.mxu0 0
      %1250 = vmatprep.subr.bf16.mxu0 0
      %1251 = vmatpush1.bf16.msra.mxu0 0
      %1252 = vmatprep.subr.bf16.mxu0 0
      %1253 = vmatpush1.bf16.msra.mxu0 0
      %1254 = vmatprep.subr.bf16.mxu0 0
      %1255 = vmatpush1.bf16.msra.mxu0 0
      %1256 = vmatprep.subr.bf16.mxu0 0
      %1257 = vmatpush1.bf16.msra.mxu0 0
      %1258 = vmatprep.subr.bf16.mxu0 0
      %1259 = vmatpush1.bf16.msra.mxu0 0
      %1260 = vmatprep.subr.bf16.mxu0 0
      %1261 = vmatpush1.bf16.msra.mxu0 0
      %1262 = vmatprep.subr.bf16.mxu0 0
      %1263 = vmatpush1.bf16.msra.mxu0 0
      %1264 = vmatprep.subr.bf16.mxu0 0
      %1265 = vmatpush1.bf16.msra.mxu0 0
      %1266 = vmatprep.subr.bf16.mxu0 0
      %1267 = vmatpush1.bf16.msra.mxu0 0
      %1268 = vmatprep.subr.bf16.mxu0 0
      %1269 = vmatpush1.bf16.msra.mxu0 0
      %1270 = vmatprep.subr.bf16.mxu0 0
      %1271 = vmatpush1.bf16.msra.mxu0 0
      %1272 = vmatprep.subr.bf16.mxu0 0
      %1273 = vmatpush1.bf16.msra.mxu0 0
      %1274 = vmatprep.subr.bf16.mxu0 0
      %1275 = vmatpush1.bf16.msra.mxu0 0
      %1276 = vmatprep.mubr.bf16.mxu0 0
      %1277 = vmatmul.mubr.bf16.gmra.mrb[0].mxu0 %v882
      %v1278 = vpop.f32.mrb[0].mxu0
      %v1279 = vadd.f32 0.0, %v1278
      %v1280 = vpop.f32.mrb[0].mxu0
      %v1281 = vadd.f32 0.0, %v1280
      %v1282 = vpop.f32.mrb[0].mxu0
      %v1283 = vadd.f32 0.0, %v1282
      %v1284 = vpop.f32.mrb[0].mxu0
      %v1285 = vadd.f32 0.0, %v1284
      %1286 = vmatprep.mubr.bf16.mxu0 0
      %1287 = vmatmul.mubr.bf16.gmra.mrb[0].mxu0 %v885
      %v1288 = vpop.f32.mrb[0].mxu0
      %v1289 = vadd.f32 0.0, %v1288
      %v1290 = vpop.f32.mrb[0].mxu0
      %v1291 = vadd.f32 0.0, %v1290
      %v1292 = vpop.f32.mrb[0].mxu0
      %v1293 = vadd.f32 0.0, %v1292
      %v1294 = vpop.f32.mrb[0].mxu0
      %v1295 = vadd.f32 0.0, %v1294
      %1296 = vmatprep.mubr.bf16.mxu0 0
      %1297 = vmatmul.mubr.bf16.gmra.mrb[0].mxu0 %v888
      %v1298 = vpop.f32.mrb[0].mxu0
      %v1299 = vadd.f32 0.0, %v1298
      %v1300 = vpop.f32.mrb[0].mxu0
      %v1301 = vadd.f32 0.0, %v1300
      %v1302 = vpop.f32.mrb[0].mxu0
      %v1303 = vadd.f32 0.0, %v1302
      %v1304 = vpop.f32.mrb[0].mxu0
      %v1305 = vadd.f32 0.0, %v1304
      %1306 = vmatprep.mubr.bf16.mxu0 0
      %1307 = vmatmul.mubr.bf16.gmra.mrb[0].mxu0 %v891
      %v1308 = vpop.f32.mrb[0].mxu0
      %v1309 = vadd.f32 0.0, %v1308
      %v1310 = vpop.f32.mrb[0].mxu0
      %v1311 = vadd.f32 0.0, %v1310
      %v1312 = vpop.f32.mrb[0].mxu0
      %v1313 = vadd.f32 0.0, %v1312
      %v1314 = vpop.f32.mrb[0].mxu0
      %v1315 = vadd.f32 0.0, %v1314
      %1316 = vmatprep.mubr.bf16.mxu0 0
      %1317 = vmatmul.mubr.bf16.gmra.mrb[0].mxu0 %v894
      %v1318 = vpop.f32.mrb[0].mxu0
      %v1319 = vadd.f32 0.0, %v1318
      %v1320 = vpop.f32.mrb[0].mxu0
      %v1321 = vadd.f32 0.0, %v1320
      %v1322 = vpop.f32.mrb[0].mxu0
      %v1323 = vadd.f32 0.0, %v1322
      %v1324 = vpop.f32.mrb[0].mxu0
      %v1325 = vadd.f32 0.0, %v1324
      %1326 = vmatprep.mubr.bf16.mxu0 0
      %1327 = vmatmul.mubr.bf16.gmra.mrb[0].mxu0 %v897
      %v1328 = vpop.f32.mrb[0].mxu0
      %v1329 = vadd.f32 0.0, %v1328
      %v1330 = vpop.f32.mrb[0].mxu0
      %v1331 = vadd.f32 0.0, %v1330
      %v1332 = vpop.f32.mrb[0].mxu0
      %v1333 = vadd.f32 0.0, %v1332
      %v1334 = vpop.f32.mrb[0].mxu0
      %v1335 = vadd.f32 0.0, %v1334
      %1336 = vmatprep.mubr.bf16.mxu0 0
      %1337 = vmatmul.mubr.bf16.gmra.mrb[0].mxu0 %v900
      %v1338 = vpop.f32.mrb[0].mxu0
      %v1339 = vadd.f32 0.0, %v1338
      %v1340 = vpop.f32.mrb[0].mxu0
      %v1341 = vadd.f32 0.0, %v1340
      %v1342 = vpop.f32.mrb[0].mxu0
      %v1343 = vadd.f32 0.0, %v1342
      %v1344 = vpop.f32.mrb[0].mxu0
      %v1345 = vadd.f32 0.0, %v1344
      %1346 = vmatprep.mubr.bf16.mxu0 0
      %1347 = vmatmul.mubr.bf16.gmra.mrb[0].mxu0 %v903
      %v1348 = vpop.f32.mrb[0].mxu0
      %v1349 = vadd.f32 0.0, %v1348
      %v1350 = vpop.f32.mrb[0].mxu0
      %v1351 = vadd.f32 0.0, %v1350
      %v1352 = vpop.f32.mrb[0].mxu0
      %v1353 = vadd.f32 0.0, %v1352
      %v1354 = vpop.f32.mrb[0].mxu0
      %v1355 = vadd.f32 0.0, %v1354
      %1356 = vdwg.mxu0
      %1357 = vmatprep.subr.bf16.mxu0 %v849
      %1358 = vmatpush1.bf16.msra.mxu0 %v848
      %1359 = vmatprep.subr.bf16.mxu0 %v859
      %1360 = vmatpush1.bf16.msra.mxu0 %v858
      %1361 = vmatprep.subr.bf16.mxu0 0
      %1362 = vmatpush1.bf16.msra.mxu0 0
      %1363 = vmatprep.subr.bf16.mxu0 0
      %1364 = vmatpush1.bf16.msra.mxu0 0
      %1365 = vmatprep.subr.bf16.mxu0 0
      %1366 = vmatpush1.bf16.msra.mxu0 0
      %1367 = vmatprep.subr.bf16.mxu0 0
      %1368 = vmatpush1.bf16.msra.mxu0 0
      %1369 = vmatprep.subr.bf16.mxu0 0
      %1370 = vmatpush1.bf16.msra.mxu0 0
      %1371 = vmatprep.subr.bf16.mxu0 0
      %1372 = vmatpush1.bf16.msra.mxu0 0
      %1373 = vmatprep.subr.bf16.mxu0 0
      %1374 = vmatpush1.bf16.msra.mxu0 0
      %1375 = vmatprep.subr.bf16.mxu0 0
      %1376 = vmatpush1.bf16.msra.mxu0 0
      %1377 = vmatprep.subr.bf16.mxu0 0
      %1378 = vmatpush1.bf16.msra.mxu0 0
      %1379 = vmatprep.subr.bf16.mxu0 0
      %1380 = vmatpush1.bf16.msra.mxu0 0
      %1381 = vmatprep.subr.bf16.mxu0 0
      %1382 = vmatpush1.bf16.msra.mxu0 0
      %1383 = vmatprep.subr.bf16.mxu0 0
      %1384 = vmatpush1.bf16.msra.mxu0 0
      %1385 = vmatprep.subr.bf16.mxu0 0
      %1386 = vmatpush1.bf16.msra.mxu0 0
      %1387 = vmatprep.subr.bf16.mxu0 0
      %1388 = vmatpush1.bf16.msra.mxu0 0
      %1389 = vmatprep.mubr.bf16.mxu0 0
      %1390 = vmatmul.mubr.bf16.gmra.mrb[0].mxu0 %v882
      %v1391 = vpop.f32.mrb[0].mxu0
      %v1392 = vadd.f32 0.0, %v1391
      %v1393 = vpop.f32.mrb[0].mxu0
      %v1394 = vadd.f32 0.0, %v1393
      %v1395 = vpop.f32.mrb[0].mxu0
      %v1396 = vadd.f32 0.0, %v1395
      %v1397 = vpop.f32.mrb[0].mxu0
      %v1398 = vadd.f32 0.0, %v1397
      %1399 = vmatprep.mubr.bf16.mxu0 0
      %1400 = vmatmul.mubr.bf16.gmra.mrb[0].mxu0 %v885
      %v1401 = vpop.f32.mrb[0].mxu0
      %v1402 = vadd.f32 0.0, %v1401
      %v1403 = vpop.f32.mrb[0].mxu0
      %v1404 = vadd.f32 0.0, %v1403
      %v1405 = vpop.f32.mrb[0].mxu0
      %v1406 = vadd.f32 0.0, %v1405
      %v1407 = vpop.f32.mrb[0].mxu0
      %v1408 = vadd.f32 0.0, %v1407
      %1409 = vmatprep.mubr.bf16.mxu0 0
      %1410 = vmatmul.mubr.bf16.gmra.mrb[0].mxu0 %v888
      %v1411 = vpop.f32.mrb[0].mxu0
      %v1412 = vadd.f32 0.0, %v1411
      %v1413 = vpop.f32.mrb[0].mxu0
      %v1414 = vadd.f32 0.0, %v1413
      %v1415 = vpop.f32.mrb[0].mxu0
      %v1416 = vadd.f32 0.0, %v1415
      %v1417 = vpop.f32.mrb[0].mxu0
      %v1418 = vadd.f32 0.0, %v1417
      %1419 = vmatprep.mubr.bf16.mxu0 0
      %1420 = vmatmul.mubr.bf16.gmra.mrb[0].mxu0 %v891
      %v1421 = vpop.f32.mrb[0].mxu0
      %v1422 = vadd.f32 0.0, %v1421
      %v1423 = vpop.f32.mrb[0].mxu0
      %v1424 = vadd.f32 0.0, %v1423
      %v1425 = vpop.f32.mrb[0].mxu0
      %v1426 = vadd.f32 0.0, %v1425
      %v1427 = vpop.f32.mrb[0].mxu0
      %v1428 = vadd.f32 0.0, %v1427
      %1429 = vmatprep.mubr.bf16.mxu0 0
      %1430 = vmatmul.mubr.bf16.gmra.mrb[0].mxu0 %v894
      %v1431 = vpop.f32.mrb[0].mxu0
      %v1432 = vadd.f32 0.0, %v1431
      %v1433 = vpop.f32.mrb[0].mxu0
      %v1434 = vadd.f32 0.0, %v1433
      %v1435 = vpop.f32.mrb[0].mxu0
      %v1436 = vadd.f32 0.0, %v1435
      %v1437 = vpop.f32.mrb[0].mxu0
      %v1438 = vadd.f32 0.0, %v1437
      %1439 = vmatprep.mubr.bf16.mxu0 0
      %1440 = vmatmul.mubr.bf16.gmra.mrb[0].mxu0 %v897
      %v1441 = vpop.f32.mrb[0].mxu0
      %v1442 = vadd.f32 0.0, %v1441
      %v1443 = vpop.f32.mrb[0].mxu0
      %v1444 = vadd.f32 0.0, %v1443
      %v1445 = vpop.f32.mrb[0].mxu0
      %v1446 = vadd.f32 0.0, %v1445
      %v1447 = vpop.f32.mrb[0].mxu0
      %v1448 = vadd.f32 0.0, %v1447
      %1449 = vmatprep.mubr.bf16.mxu0 0
      %1450 = vmatmul.mubr.bf16.gmra.mrb[0].mxu0 %v900
      %v1451 = vpop.f32.mrb[0].mxu0
      %v1452 = vadd.f32 0.0, %v1451
      %v1453 = vpop.f32.mrb[0].mxu0
      %v1454 = vadd.f32 0.0, %v1453
      %v1455 = vpop.f32.mrb[0].mxu0
      %v1456 = vadd.f32 0.0, %v1455
      %v1457 = vpop.f32.mrb[0].mxu0
      %v1458 = vadd.f32 0.0, %v1457
      %1459 = vmatprep.mubr.bf16.mxu0 0
      %1460 = vmatmul.mubr.bf16.gmra.mrb[0].mxu0 %v903
      %v1461 = vpop.f32.mrb[0].mxu0
      %v1462 = vadd.f32 0.0, %v1461
      %v1463 = vpop.f32.mrb[0].mxu0
      %v1464 = vadd.f32 0.0, %v1463
      %v1465 = vpop.f32.mrb[0].mxu0
      %v1466 = vadd.f32 0.0, %v1465
      %v1467 = vpop.f32.mrb[0].mxu0
      %v1468 = vadd.f32 0.0, %v1467
      %1469 = vdwg.mxu0
      %v1470 = vpack.c.bf16 %v944, %v940
      %v1471 = vpack.c.bf16 %v946, %v942
      %v1472 = vpack.c.bf16 %v1057, %v1053
      %v1473 = vpack.c.bf16 %v1059, %v1055
      %v1474 = vpack.c.bf16 %v1170, %v1166
      %v1475 = vpack.c.bf16 %v1172, %v1168
      %v1476 = vpack.c.bf16 %v1283, %v1279
      %v1477 = vpack.c.bf16 %v1285, %v1281
      %v1478 = vpack.c.bf16 %v1396, %v1392
      %v1479 = vpack.c.bf16 %v1398, %v1394
      %v1480 = vpack.c.bf16 %v954, %v950
      %v1481 = vpack.c.bf16 %v956, %v952
      %v1482 = vpack.c.bf16 %v1067, %v1063
      %v1483 = vpack.c.bf16 %v1069, %v1065
      %v1484 = vpack.c.bf16 %v1180, %v1176
      %v1485 = vpack.c.bf16 %v1182, %v1178
      %v1486 = vpack.c.bf16 %v1293, %v1289
      %v1487 = vpack.c.bf16 %v1295, %v1291
      %v1488 = vpack.c.bf16 %v1406, %v1402
      %v1489 = vpack.c.bf16 %v1408, %v1404
      %v1490 = vpack.c.bf16 %v964, %v960
      %v1491 = vpack.c.bf16 %v966, %v962
      %v1492 = vpack.c.bf16 %v1077, %v1073
      %v1493 = vpack.c.bf16 %v1079, %v1075
      %v1494 = vpack.c.bf16 %v1190, %v1186
      %v1495 = vpack.c.bf16 %v1192, %v1188
      %v1496 = vpack.c.bf16 %v1303, %v1299
      %v1497 = vpack.c.bf16 %v1305, %v1301
      %v1498 = vpack.c.bf16 %v1416, %v1412
      %v1499 = vpack.c.bf16 %v1418, %v1414
      %v1500 = vpack.c.bf16 %v974, %v970
      %v1501 = vpack.c.bf16 %v976, %v972
      %v1502 = vpack.c.bf16 %v1087, %v1083
      %v1503 = vpack.c.bf16 %v1089, %v1085
      %v1504 = vpack.c.bf16 %v1200, %v1196
      %v1505 = vpack.c.bf16 %v1202, %v1198
      %v1506 = vpack.c.bf16 %v1313, %v1309
      %v1507 = vpack.c.bf16 %v1315, %v1311
      %v1508 = vpack.c.bf16 %v1426, %v1422
      %v1509 = vpack.c.bf16 %v1428, %v1424
      %v1510 = vpack.c.bf16 %v984, %v980
      %v1511 = vpack.c.bf16 %v986, %v982
      %v1512 = vpack.c.bf16 %v1097, %v1093
      %v1513 = vpack.c.bf16 %v1099, %v1095
      %v1514 = vpack.c.bf16 %v1210, %v1206
      %v1515 = vpack.c.bf16 %v1212, %v1208
      %v1516 = vpack.c.bf16 %v1323, %v1319
      %v1517 = vpack.c.bf16 %v1325, %v1321
      %v1518 = vpack.c.bf16 %v1436, %v1432
      %v1519 = vpack.c.bf16 %v1438, %v1434
      %v1520 = vpack.c.bf16 %v994, %v990
      %v1521 = vpack.c.bf16 %v996, %v992
      %v1522 = vpack.c.bf16 %v1107, %v1103
      %v1523 = vpack.c.bf16 %v1109, %v1105
      %v1524 = vpack.c.bf16 %v1220, %v1216
      %v1525 = vpack.c.bf16 %v1222, %v1218
      %v1526 = vpack.c.bf16 %v1333, %v1329
      %v1527 = vpack.c.bf16 %v1335, %v1331
      %v1528 = vpack.c.bf16 %v1446, %v1442
      %v1529 = vpack.c.bf16 %v1448, %v1444
      %v1530 = vpack.c.bf16 %v1004, %v1000
      %v1531 = vpack.c.bf16 %v1006, %v1002
      %v1532 = vpack.c.bf16 %v1117, %v1113
      %v1533 = vpack.c.bf16 %v1119, %v1115
      %v1534 = vpack.c.bf16 %v1230, %v1226
      %v1535 = vpack.c.bf16 %v1232, %v1228
      %v1536 = vpack.c.bf16 %v1343, %v1339
      %v1537 = vpack.c.bf16 %v1345, %v1341
      %v1538 = vpack.c.bf16 %v1456, %v1452
      %v1539 = vpack.c.bf16 %v1458, %v1454
      %v1540 = vpack.c.bf16 %v1014, %v1010
      %v1541 = vpack.c.bf16 %v1016, %v1012
      %v1542 = vpack.c.bf16 %v1127, %v1123
      %v1543 = vpack.c.bf16 %v1129, %v1125
      %v1544 = vpack.c.bf16 %v1240, %v1236
      %v1545 = vpack.c.bf16 %v1242, %v1238
      %v1546 = vpack.c.bf16 %v1353, %v1349
      %v1547 = vpack.c.bf16 %v1355, %v1351
      %v1548 = vpack.c.bf16 %v1466, %v1462
      %v1549 = vpack.c.bf16 %v1468, %v1464
      %v1550 = vld [vmem:[%s429] sm:$0xff]
      %v1551 = vld [vmem:[%s429 + $0x8] sm:$0x3]
      %v1554 = vcombine.high %v1550, %v1550
      %v1556 = vunpack.c.l.s4 1966171168
      %v1557 = vunpack.c.0.s8 %v1556
      %v1558 = vlaneseq
      %v1559 = vshrl.u32 %v1558, 7
      %v1560 = vsub.s32 %v1557, %v1559
      %v1561 = vrot.slane %v1550, %v1560
      %v1563 = vunpack.c.l.s4 1966171168
      %v1564 = vunpack.c.0.s8 %v1563
      %v1565 = vlaneseq
      %v1566 = vshrl.u32 %v1565, 7
      %v1567 = vsub.s32 %v1564, %v1566
      %v1568 = vrot.slane %v1554, %v1567
      %v1569 = vcombine.high %v1561, %v1561
      %v1570 = vcombine.high %v1568, %v1568
      %v1572 = vunpack.c.l.s4 1966171168
      %v1573 = vunpack.c.0.s8 %v1572
      %v1574 = vlaneseq
      %v1575 = vshrl.u32 %v1574, 7
      %v1576 = vsub.s32 %v1573, %v1575
      %v1577 = vrot.slane %v1561, %v1576
      %v1579 = vunpack.c.l.s4 1966171168
      %v1580 = vunpack.c.0.s8 %v1579
      %v1581 = vlaneseq
      %v1582 = vshrl.u32 %v1581, 7
      %v1583 = vsub.s32 %v1580, %v1582
      %v1584 = vrot.slane %v1568, %v1583
      %v1586 = vunpack.c.l.s4 1966171168
      %v1587 = vunpack.c.0.s8 %v1586
      %v1588 = vlaneseq
      %v1589 = vshrl.u32 %v1588, 7
      %v1590 = vsub.s32 %v1587, %v1589
      %v1591 = vrot.slane %v1569, %v1590
      %v1593 = vunpack.c.l.s4 1966171168
      %v1594 = vunpack.c.0.s8 %v1593
      %v1595 = vlaneseq
      %v1596 = vshrl.u32 %v1595, 7
      %v1597 = vsub.s32 %v1594, %v1596
      %v1598 = vrot.slane %v1570, %v1597
      %v1599 = vcombine.high %v1577, %v1577
      %v1600 = vcombine.high %v1584, %v1584
      %v1601 = vcombine.high %v1591, %v1591
      %v1602 = vcombine.high %v1598, %v1598
      %v1604 = vunpack.c.l.s4 1966171168
      %v1605 = vunpack.c.0.s8 %v1604
      %v1606 = vlaneseq
      %v1607 = vshrl.u32 %v1606, 7
      %v1608 = vsub.s32 %v1605, %v1607
      %v1609 = vrot.slane %v1551, %v1608
      %v1610 = vcombine.high %v1609, %v1609
      %v1612 = vunpack.c.l.s4 1966171168
      %v1613 = vunpack.c.0.s8 %v1612
      %v1614 = vlaneseq
      %v1615 = vshrl.u32 %v1614, 7
      %v1616 = vsub.s32 %v1613, %v1615
      %v1617 = vrot.slane %v1609, %v1616
      %v1619 = vunpack.c.l.s4 1966171168
      %v1620 = vunpack.c.0.s8 %v1619
      %v1621 = vlaneseq
      %v1622 = vshrl.u32 %v1621, 7
      %v1623 = vsub.s32 %v1620, %v1622
      %v1624 = vrot.slane %v1610, %v1623
      %v1626 = vpack.i.b16 %v1577, %v1577
      %v1628 = vlaneseq
      %v1629 = vshrl.u32 %v1628, 7
      %v1630 = vsub.s32 0, %v1629
      %v1631 = vrot.slane %v1626, %v1630
      %v1633 = vpack.i.b16 %v1591, %v1591
      %v1635 = vlaneseq
      %v1636 = vshrl.u32 %v1635, 7
      %v1637 = vsub.s32 0, %v1636
      %v1638 = vrot.slane %v1633, %v1637
      %v1640 = vpack.i.b16 %v1599, %v1599
      %v1642 = vlaneseq
      %v1643 = vshrl.u32 %v1642, 7
      %v1644 = vsub.s32 0, %v1643
      %v1645 = vrot.slane %v1640, %v1644
      %v1647 = vpack.i.b16 %v1601, %v1601
      %v1649 = vlaneseq
      %v1650 = vshrl.u32 %v1649, 7
      %v1651 = vsub.s32 0, %v1650
      %v1652 = vrot.slane %v1647, %v1651
      %v1654 = vpack.i.b16 %v1584, %v1584
      %v1656 = vlaneseq
      %v1657 = vshrl.u32 %v1656, 7
      %v1658 = vsub.s32 0, %v1657
      %v1659 = vrot.slane %v1654, %v1658
      %v1661 = vpack.i.b16 %v1598, %v1598
      %v1663 = vlaneseq
      %v1664 = vshrl.u32 %v1663, 7
      %v1665 = vsub.s32 0, %v1664
      %v1666 = vrot.slane %v1661, %v1665
      %v1668 = vpack.i.b16 %v1600, %v1600
      %v1670 = vlaneseq
      %v1671 = vshrl.u32 %v1670, 7
      %v1672 = vsub.s32 0, %v1671
      %v1673 = vrot.slane %v1668, %v1672
      %v1675 = vpack.i.b16 %v1602, %v1602
      %v1677 = vlaneseq
      %v1678 = vshrl.u32 %v1677, 7
      %v1679 = vsub.s32 0, %v1678
      %v1680 = vrot.slane %v1675, %v1679
      %v1682 = vpack.i.b16 %v1617, %v1617
      %v1684 = vlaneseq
      %v1685 = vshrl.u32 %v1684, 7
      %v1686 = vsub.s32 0, %v1685
      %v1687 = vrot.slane %v1682, %v1686
      %v1689 = vpack.i.b16 %v1624, %v1624
      %v1691 = vlaneseq
      %v1692 = vshrl.u32 %v1691, 7
      %v1693 = vsub.s32 0, %v1692
      %v1694 = vrot.slane %v1689, %v1693
      %v1695 = vadd.bf16 %v1470, %v1631
      %v1696 = vadd.bf16 %v1471, %v1638
      %v1697 = vadd.bf16 %v1472, %v1645
      %v1698 = vadd.bf16 %v1473, %v1652
      %v1699 = vadd.bf16 %v1474, %v1659
      %v1700 = vadd.bf16 %v1475, %v1666
      %v1701 = vadd.bf16 %v1476, %v1673
      %v1702 = vadd.bf16 %v1477, %v1680
      %v1703 = vadd.bf16 %v1478, %v1687
      %v1704 = vadd.bf16 %v1479, %v1694
      %v1705 = vadd.bf16 %v1480, %v1631
      %v1706 = vadd.bf16 %v1481, %v1638
      %v1707 = vadd.bf16 %v1482, %v1645
      %v1708 = vadd.bf16 %v1483, %v1652
      %v1709 = vadd.bf16 %v1484, %v1659
      %v1710 = vadd.bf16 %v1485, %v1666
      %v1711 = vadd.bf16 %v1486, %v1673
      %v1712 = vadd.bf16 %v1487, %v1680
      %v1713 = vadd.bf16 %v1488, %v1687
      %v1714 = vadd.bf16 %v1489, %v1694
      %v1715 = vadd.bf16 %v1490, %v1631
      %v1716 = vadd.bf16 %v1491, %v1638
      %v1717 = vadd.bf16 %v1492, %v1645
      %v1718 = vadd.bf16 %v1493, %v1652
      %v1719 = vadd.bf16 %v1494, %v1659
      %v1720 = vadd.bf16 %v1495, %v1666
      %v1721 = vadd.bf16 %v1496, %v1673
      %v1722 = vadd.bf16 %v1497, %v1680
      %v1723 = vadd.bf16 %v1498, %v1687
      %v1724 = vadd.bf16 %v1499, %v1694
      %v1725 = vadd.bf16 %v1500, %v1631
      %v1726 = vadd.bf16 %v1501, %v1638
      %v1727 = vadd.bf16 %v1502, %v1645
      %v1728 = vadd.bf16 %v1503, %v1652
      %v1729 = vadd.bf16 %v1504, %v1659
      %v1730 = vadd.bf16 %v1505, %v1666
      %v1731 = vadd.bf16 %v1506, %v1673
      %v1732 = vadd.bf16 %v1507, %v1680
      %v1733 = vadd.bf16 %v1508, %v1687
      %v1734 = vadd.bf16 %v1509, %v1694
      %v1735 = vadd.bf16 %v1510, %v1631
      %v1736 = vadd.bf16 %v1511, %v1638
      %v1737 = vadd.bf16 %v1512, %v1645
      %v1738 = vadd.bf16 %v1513, %v1652
      %v1739 = vadd.bf16 %v1514, %v1659
      %v1740 = vadd.bf16 %v1515, %v1666
      %v1741 = vadd.bf16 %v1516, %v1673
      %v1742 = vadd.bf16 %v1517, %v1680
      %v1743 = vadd.bf16 %v1518, %v1687
      %v1744 = vadd.bf16 %v1519, %v1694
      %v1745 = vadd.bf16 %v1520, %v1631
      %v1746 = vadd.bf16 %v1521, %v1638
      %v1747 = vadd.bf16 %v1522, %v1645
      %v1748 = vadd.bf16 %v1523, %v1652
      %v1749 = vadd.bf16 %v1524, %v1659
      %v1750 = vadd.bf16 %v1525, %v1666
      %v1751 = vadd.bf16 %v1526, %v1673
      %v1752 = vadd.bf16 %v1527, %v1680
      %v1753 = vadd.bf16 %v1528, %v1687
      %v1754 = vadd.bf16 %v1529, %v1694
      %v1755 = vadd.bf16 %v1530, %v1631
      %v1756 = vadd.bf16 %v1531, %v1638
      %v1757 = vadd.bf16 %v1532, %v1645
      %v1758 = vadd.bf16 %v1533, %v1652
      %v1759 = vadd.bf16 %v1534, %v1659
      %v1760 = vadd.bf16 %v1535, %v1666
      %v1761 = vadd.bf16 %v1536, %v1673
      %v1762 = vadd.bf16 %v1537, %v1680
      %v1763 = vadd.bf16 %v1538, %v1687
      %v1764 = vadd.bf16 %v1539, %v1694
      %v1765 = vadd.bf16 %v1540, %v1631
      %v1766 = vadd.bf16 %v1541, %v1638
      %v1767 = vadd.bf16 %v1542, %v1645
      %v1768 = vadd.bf16 %v1543, %v1652
      %v1769 = vadd.bf16 %v1544, %v1659
      %v1770 = vadd.bf16 %v1545, %v1666
      %v1771 = vadd.bf16 %v1546, %v1673
      %v1772 = vadd.bf16 %v1547, %v1680
      %v1773 = vadd.bf16 %v1548, %v1687
      %v1774 = vadd.bf16 %v1549, %v1694
      %v1775 = vxor.u32 %v1695, 2147516416
      %v1776 = vxor.u32 %v1696, 2147516416
      %v1777 = vxor.u32 %v1697, 2147516416
      %v1778 = vxor.u32 %v1698, 2147516416
      %v1779 = vxor.u32 %v1699, 2147516416
      %v1780 = vxor.u32 %v1700, 2147516416
      %v1781 = vxor.u32 %v1701, 2147516416
      %v1782 = vxor.u32 %v1702, 2147516416
      %v1783 = vxor.u32 %v1703, 2147516416
      %v1784 = vxor.u32 %v1704, 2147516416
      %v1785 = vxor.u32 %v1705, 2147516416
      %v1786 = vxor.u32 %v1706, 2147516416
      %v1787 = vxor.u32 %v1707, 2147516416
      %v1788 = vxor.u32 %v1708, 2147516416
      %v1789 = vxor.u32 %v1709, 2147516416
      %v1790 = vxor.u32 %v1710, 2147516416
      %v1791 = vxor.u32 %v1711, 2147516416
      %v1792 = vxor.u32 %v1712, 2147516416
      %v1793 = vxor.u32 %v1713, 2147516416
      %v1794 = vxor.u32 %v1714, 2147516416
      %v1795 = vxor.u32 %v1715, 2147516416
      %v1796 = vxor.u32 %v1716, 2147516416
      %v1797 = vxor.u32 %v1717, 2147516416
      %v1798 = vxor.u32 %v1718, 2147516416
      %v1799 = vxor.u32 %v1719, 2147516416
      %v1800 = vxor.u32 %v1720, 2147516416
      %v1801 = vxor.u32 %v1721, 2147516416
      %v1802 = vxor.u32 %v1722, 2147516416
      %v1803 = vxor.u32 %v1723, 2147516416
      %v1804 = vxor.u32 %v1724, 2147516416
      %v1805 = vxor.u32 %v1725, 2147516416
      %v1806 = vxor.u32 %v1726, 2147516416
      %v1807 = vxor.u32 %v1727, 2147516416
      %v1808 = vxor.u32 %v1728, 2147516416
      %v1809 = vxor.u32 %v1729, 2147516416
      %v1810 = vxor.u32 %v1730, 2147516416
      %v1811 = vxor.u32 %v1731, 2147516416
      %v1812 = vxor.u32 %v1732, 2147516416
      %v1813 = vxor.u32 %v1733, 2147516416
      %v1814 = vxor.u32 %v1734, 2147516416
      %v1815 = vxor.u32 %v1735, 2147516416
      %v1816 = vxor.u32 %v1736, 2147516416
      %v1817 = vxor.u32 %v1737, 2147516416
      %v1818 = vxor.u32 %v1738, 2147516416
      %v1819 = vxor.u32 %v1739, 2147516416
      %v1820 = vxor.u32 %v1740, 2147516416
      %v1821 = vxor.u32 %v1741, 2147516416
      %v1822 = vxor.u32 %v1742, 2147516416
      %v1823 = vxor.u32 %v1743, 2147516416
      %v1824 = vxor.u32 %v1744, 2147516416
      %v1825 = vxor.u32 %v1745, 2147516416
      %v1826 = vxor.u32 %v1746, 2147516416
      %v1827 = vxor.u32 %v1747, 2147516416
      %v1828 = vxor.u32 %v1748, 2147516416
      %v1829 = vxor.u32 %v1749, 2147516416
      %v1830 = vxor.u32 %v1750, 2147516416
      %v1831 = vxor.u32 %v1751, 2147516416
      %v1832 = vxor.u32 %v1752, 2147516416
      %v1833 = vxor.u32 %v1753, 2147516416
      %v1834 = vxor.u32 %v1754, 2147516416
      %v1835 = vxor.u32 %v1755, 2147516416
      %v1836 = vxor.u32 %v1756, 2147516416
      %v1837 = vxor.u32 %v1757, 2147516416
      %v1838 = vxor.u32 %v1758, 2147516416
      %v1839 = vxor.u32 %v1759, 2147516416
      %v1840 = vxor.u32 %v1760, 2147516416
      %v1841 = vxor.u32 %v1761, 2147516416
      %v1842 = vxor.u32 %v1762, 2147516416
      %v1843 = vxor.u32 %v1763, 2147516416
      %v1844 = vxor.u32 %v1764, 2147516416
      %v1845 = vxor.u32 %v1765, 2147516416
      %v1846 = vxor.u32 %v1766, 2147516416
      %v1847 = vxor.u32 %v1767, 2147516416
      %v1848 = vxor.u32 %v1768, 2147516416
      %v1849 = vxor.u32 %v1769, 2147516416
      %v1850 = vxor.u32 %v1770, 2147516416
      %v1851 = vxor.u32 %v1771, 2147516416
      %v1852 = vxor.u32 %v1772, 2147516416
      %v1853 = vxor.u32 %v1773, 2147516416
      %v1854 = vxor.u32 %v1774, 2147516416
      %v1856 = vmul.bf16 %v1775, 1069105081
      %v1857 = vpow.bf16.pop %v1856
      %v1859 = vmul.bf16 %v1776, 1069105081
      %v1860 = vpow.bf16.pop %v1859
      %v1862 = vmul.bf16 %v1777, 1069105081
      %v1863 = vpow.bf16.pop %v1862
      %v1865 = vmul.bf16 %v1778, 1069105081
      %v1866 = vpow.bf16.pop %v1865
      %v1868 = vmul.bf16 %v1779, 1069105081
      %v1869 = vpow.bf16.pop %v1868
      %v1871 = vmul.bf16 %v1780, 1069105081
      %v1872 = vpow.bf16.pop %v1871
      %v1874 = vmul.bf16 %v1781, 1069105081
      %v1875 = vpow.bf16.pop %v1874
      %v1877 = vmul.bf16 %v1782, 1069105081
      %v1878 = vpow.bf16.pop %v1877
      %v1880 = vmul.bf16 %v1783, 1069105081
      %v1881 = vpow.bf16.pop %v1880
      %v1883 = vmul.bf16 %v1784, 1069105081
      %v1884 = vpow.bf16.pop %v1883
      %v1886 = vmul.bf16 %v1785, 1069105081
      %v1887 = vpow.bf16.pop %v1886
      %v1889 = vmul.bf16 %v1786, 1069105081
      %v1890 = vpow.bf16.pop %v1889
      %v1892 = vmul.bf16 %v1787, 1069105081
      %v1893 = vpow.bf16.pop %v1892
      %v1895 = vmul.bf16 %v1788, 1069105081
      %v1896 = vpow.bf16.pop %v1895
      %v1898 = vmul.bf16 %v1789, 1069105081
      %v1899 = vpow.bf16.pop %v1898
      %v1901 = vmul.bf16 %v1790, 1069105081
      %v1902 = vpow.bf16.pop %v1901
      %v1904 = vmul.bf16 %v1791, 1069105081
      %v1905 = vpow.bf16.pop %v1904
      %v1907 = vmul.bf16 %v1792, 1069105081
      %v1908 = vpow.bf16.pop %v1907
      %v1910 = vmul.bf16 %v1793, 1069105081
      %v1911 = vpow.bf16.pop %v1910
      %v1913 = vmul.bf16 %v1794, 1069105081
      %v1914 = vpow.bf16.pop %v1913
      %v1916 = vmul.bf16 %v1795, 1069105081
      %v1917 = vpow.bf16.pop %v1916
      %v1919 = vmul.bf16 %v1796, 1069105081
      %v1920 = vpow.bf16.pop %v1919
      %v1922 = vmul.bf16 %v1797, 1069105081
      %v1923 = vpow.bf16.pop %v1922
      %v1925 = vmul.bf16 %v1798, 1069105081
      %v1926 = vpow.bf16.pop %v1925
      %v1928 = vmul.bf16 %v1799, 1069105081
      %v1929 = vpow.bf16.pop %v1928
      %v1931 = vmul.bf16 %v1800, 1069105081
      %v1932 = vpow.bf16.pop %v1931
      %v1934 = vmul.bf16 %v1801, 1069105081
      %v1935 = vpow.bf16.pop %v1934
      %v1937 = vmul.bf16 %v1802, 1069105081
      %v1938 = vpow.bf16.pop %v1937
      %v1940 = vmul.bf16 %v1803, 1069105081
      %v1941 = vpow.bf16.pop %v1940
      %v1943 = vmul.bf16 %v1804, 1069105081
      %v1944 = vpow.bf16.pop %v1943
      %v1946 = vmul.bf16 %v1805, 1069105081
      %v1947 = vpow.bf16.pop %v1946
      %v1949 = vmul.bf16 %v1806, 1069105081
      %v1950 = vpow.bf16.pop %v1949
      %v1952 = vmul.bf16 %v1807, 1069105081
      %v1953 = vpow.bf16.pop %v1952
      %v1955 = vmul.bf16 %v1808, 1069105081
      %v1956 = vpow.bf16.pop %v1955
      %v1958 = vmul.bf16 %v1809, 1069105081
      %v1959 = vpow.bf16.pop %v1958
      %v1961 = vmul.bf16 %v1810, 1069105081
      %v1962 = vpow.bf16.pop %v1961
      %v1964 = vmul.bf16 %v1811, 1069105081
      %v1965 = vpow.bf16.pop %v1964
      %v1967 = vmul.bf16 %v1812, 1069105081
      %v1968 = vpow.bf16.pop %v1967
      %v1970 = vmul.bf16 %v1813, 1069105081
      %v1971 = vpow.bf16.pop %v1970
      %v1973 = vmul.bf16 %v1814, 1069105081
      %v1974 = vpow.bf16.pop %v1973
      %v1976 = vmul.bf16 %v1815, 1069105081
      %v1977 = vpow.bf16.pop %v1976
      %v1979 = vmul.bf16 %v1816, 1069105081
      %v1980 = vpow.bf16.pop %v1979
      %v1982 = vmul.bf16 %v1817, 1069105081
      %v1983 = vpow.bf16.pop %v1982
      %v1985 = vmul.bf16 %v1818, 1069105081
      %v1986 = vpow.bf16.pop %v1985
      %v1988 = vmul.bf16 %v1819, 1069105081
      %v1989 = vpow.bf16.pop %v1988
      %v1991 = vmul.bf16 %v1820, 1069105081
      %v1992 = vpow.bf16.pop %v1991
      %v1994 = vmul.bf16 %v1821, 1069105081
      %v1995 = vpow.bf16.pop %v1994
      %v1997 = vmul.bf16 %v1822, 1069105081
      %v1998 = vpow.bf16.pop %v1997
      %v2000 = vmul.bf16 %v1823, 1069105081
      %v2001 = vpow.bf16.pop %v2000
      %v2003 = vmul.bf16 %v1824, 1069105081
      %v2004 = vpow.bf16.pop %v2003
      %v2006 = vmul.bf16 %v1825, 1069105081
      %v2007 = vpow.bf16.pop %v2006
      %v2009 = vmul.bf16 %v1826, 1069105081
      %v2010 = vpow.bf16.pop %v2009
      %v2012 = vmul.bf16 %v1827, 1069105081
      %v2013 = vpow.bf16.pop %v2012
      %v2015 = vmul.bf16 %v1828, 1069105081
      %v2016 = vpow.bf16.pop %v2015
      %v2018 = vmul.bf16 %v1829, 1069105081
      %v2019 = vpow.bf16.pop %v2018
      %v2021 = vmul.bf16 %v1830, 1069105081
      %v2022 = vpow.bf16.pop %v2021
      %v2024 = vmul.bf16 %v1831, 1069105081
      %v2025 = vpow.bf16.pop %v2024
      %v2027 = vmul.bf16 %v1832, 1069105081
      %v2028 = vpow.bf16.pop %v2027
      %v2030 = vmul.bf16 %v1833, 1069105081
      %v2031 = vpow.bf16.pop %v2030
      %v2033 = vmul.bf16 %v1834, 1069105081
      %v2034 = vpow.bf16.pop %v2033
      %v2036 = vmul.bf16 %v1835, 1069105081
      %v2037 = vpow.bf16.pop %v2036
      %v2039 = vmul.bf16 %v1836, 1069105081
      %v2040 = vpow.bf16.pop %v2039
      %v2042 = vmul.bf16 %v1837, 1069105081
      %v2043 = vpow.bf16.pop %v2042
      %v2045 = vmul.bf16 %v1838, 1069105081
      %v2046 = vpow.bf16.pop %v2045
      %v2048 = vmul.bf16 %v1839, 1069105081
      %v2049 = vpow.bf16.pop %v2048
      %v2051 = vmul.bf16 %v1840, 1069105081
      %v2052 = vpow.bf16.pop %v2051
      %v2054 = vmul.bf16 %v1841, 1069105081
      %v2055 = vpow.bf16.pop %v2054
      %v2057 = vmul.bf16 %v1842, 1069105081
      %v2058 = vpow.bf16.pop %v2057
      %v2060 = vmul.bf16 %v1843, 1069105081
      %v2061 = vpow.bf16.pop %v2060
      %v2063 = vmul.bf16 %v1844, 1069105081
      %v2064 = vpow.bf16.pop %v2063
      %v2066 = vmul.bf16 %v1845, 1069105081
      %v2067 = vpow.bf16.pop %v2066
      %v2069 = vmul.bf16 %v1846, 1069105081
      %v2070 = vpow.bf16.pop %v2069
      %v2072 = vmul.bf16 %v1847, 1069105081
      %v2073 = vpow.bf16.pop %v2072
      %v2075 = vmul.bf16 %v1848, 1069105081
      %v2076 = vpow.bf16.pop %v2075
      %v2078 = vmul.bf16 %v1849, 1069105081
      %v2079 = vpow.bf16.pop %v2078
      %v2081 = vmul.bf16 %v1850, 1069105081
      %v2082 = vpow.bf16.pop %v2081
      %v2084 = vmul.bf16 %v1851, 1069105081
      %v2085 = vpow.bf16.pop %v2084
      %v2087 = vmul.bf16 %v1852, 1069105081
      %v2088 = vpow.bf16.pop %v2087
      %v2090 = vmul.bf16 %v1853, 1069105081
      %v2091 = vpow.bf16.pop %v2090
      %v2093 = vmul.bf16 %v1854, 1069105081
      %v2094 = vpow.bf16.pop %v2093
      %v2095 = vadd.bf16 %v1857, 1065369472
      %v2096 = vadd.bf16 %v1860, 1065369472
      %v2097 = vadd.bf16 %v1863, 1065369472
      %v2098 = vadd.bf16 %v1866, 1065369472
      %v2099 = vadd.bf16 %v1869, 1065369472
      %v2100 = vadd.bf16 %v1872, 1065369472
      %v2101 = vadd.bf16 %v1875, 1065369472
      %v2102 = vadd.bf16 %v1878, 1065369472
      %v2103 = vadd.bf16 %v1881, 1065369472
      %v2104 = vadd.bf16 %v1884, 1065369472
      %v2105 = vadd.bf16 %v1887, 1065369472
      %v2106 = vadd.bf16 %v1890, 1065369472
      %v2107 = vadd.bf16 %v1893, 1065369472
      %v2108 = vadd.bf16 %v1896, 1065369472
      %v2109 = vadd.bf16 %v1899, 1065369472
      %v2110 = vadd.bf16 %v1902, 1065369472
      %v2111 = vadd.bf16 %v1905, 1065369472
      %v2112 = vadd.bf16 %v1908, 1065369472
      %v2113 = vadd.bf16 %v1911, 1065369472
      %v2114 = vadd.bf16 %v1914, 1065369472
      %v2115 = vadd.bf16 %v1917, 1065369472
      %v2116 = vadd.bf16 %v1920, 1065369472
      %v2117 = vadd.bf16 %v1923, 1065369472
      %v2118 = vadd.bf16 %v1926, 1065369472
      %v2119 = vadd.bf16 %v1929, 1065369472
      %v2120 = vadd.bf16 %v1932, 1065369472
      %v2121 = vadd.bf16 %v1935, 1065369472
      %v2122 = vadd.bf16 %v1938, 1065369472
      %v2123 = vadd.bf16 %v1941, 1065369472
      %v2124 = vadd.bf16 %v1944, 1065369472
      %v2125 = vadd.bf16 %v1947, 1065369472
      %v2126 = vadd.bf16 %v1950, 1065369472
      %v2127 = vadd.bf16 %v1953, 1065369472
      %v2128 = vadd.bf16 %v1956, 1065369472
      %v2129 = vadd.bf16 %v1959, 1065369472
      %v2130 = vadd.bf16 %v1962, 1065369472
      %v2131 = vadd.bf16 %v1965, 1065369472
      %v2132 = vadd.bf16 %v1968, 1065369472
      %v2133 = vadd.bf16 %v1971, 1065369472
      %v2134 = vadd.bf16 %v1974, 1065369472
      %v2135 = vadd.bf16 %v1977, 1065369472
      %v2136 = vadd.bf16 %v1980, 1065369472
      %v2137 = vadd.bf16 %v1983, 1065369472
      %v2138 = vadd.bf16 %v1986, 1065369472
      %v2139 = vadd.bf16 %v1989, 1065369472
      %v2140 = vadd.bf16 %v1992, 1065369472
      %v2141 = vadd.bf16 %v1995, 1065369472
      %v2142 = vadd.bf16 %v1998, 1065369472
      %v2143 = vadd.bf16 %v2001, 1065369472
      %v2144 = vadd.bf16 %v2004, 1065369472
      %v2145 = vadd.bf16 %v2007, 1065369472
      %v2146 = vadd.bf16 %v2010, 1065369472
      %v2147 = vadd.bf16 %v2013, 1065369472
      %v2148 = vadd.bf16 %v2016, 1065369472
      %v2149 = vadd.bf16 %v2019, 1065369472
      %v2150 = vadd.bf16 %v2022, 1065369472
      %v2151 = vadd.bf16 %v2025, 1065369472
      %v2152 = vadd.bf16 %v2028, 1065369472
      %v2153 = vadd.bf16 %v2031, 1065369472
      %v2154 = vadd.bf16 %v2034, 1065369472
      %v2155 = vadd.bf16 %v2037, 1065369472
      %v2156 = vadd.bf16 %v2040, 1065369472
      %v2157 = vadd.bf16 %v2043, 1065369472
      %v2158 = vadd.bf16 %v2046, 1065369472
      %v2159 = vadd.bf16 %v2049, 1065369472
      %v2160 = vadd.bf16 %v2052, 1065369472
      %v2161 = vadd.bf16 %v2055, 1065369472
      %v2162 = vadd.bf16 %v2058, 1065369472
      %v2163 = vadd.bf16 %v2061, 1065369472
      %v2164 = vadd.bf16 %v2064, 1065369472
      %v2165 = vadd.bf16 %v2067, 1065369472
      %v2166 = vadd.bf16 %v2070, 1065369472
      %v2167 = vadd.bf16 %v2073, 1065369472
      %v2168 = vadd.bf16 %v2076, 1065369472
      %v2169 = vadd.bf16 %v2079, 1065369472
      %v2170 = vadd.bf16 %v2082, 1065369472
      %v2171 = vadd.bf16 %v2085, 1065369472
      %v2172 = vadd.bf16 %v2088, 1065369472
      %v2173 = vadd.bf16 %v2091, 1065369472
      %v2174 = vadd.bf16 %v2094, 1065369472
      %v2175 = vrcp.bf16.pop %v2095
      %v2176 = vmul.bf16 1065369472, %v2175
      %v2177 = vrcp.bf16.pop %v2096
      %v2178 = vmul.bf16 1065369472, %v2177
      %v2179 = vrcp.bf16.pop %v2097
      %v2180 = vmul.bf16 1065369472, %v2179
      %v2181 = vrcp.bf16.pop %v2098
      %v2182 = vmul.bf16 1065369472, %v2181
      %v2183 = vrcp.bf16.pop %v2099
      %v2184 = vmul.bf16 1065369472, %v2183
      %v2185 = vrcp.bf16.pop %v2100
      %v2186 = vmul.bf16 1065369472, %v2185
      %v2187 = vrcp.bf16.pop %v2101
      %v2188 = vmul.bf16 1065369472, %v2187
      %v2189 = vrcp.bf16.pop %v2102
      %v2190 = vmul.bf16 1065369472, %v2189
      %v2191 = vrcp.bf16.pop %v2103
      %v2192 = vmul.bf16 1065369472, %v2191
      %v2193 = vrcp.bf16.pop %v2104
      %v2194 = vmul.bf16 1065369472, %v2193
      %v2195 = vrcp.bf16.pop %v2105
      %v2196 = vmul.bf16 1065369472, %v2195
      %v2197 = vrcp.bf16.pop %v2106
      %v2198 = vmul.bf16 1065369472, %v2197
      %v2199 = vrcp.bf16.pop %v2107
      %v2200 = vmul.bf16 1065369472, %v2199
      %v2201 = vrcp.bf16.pop %v2108
      %v2202 = vmul.bf16 1065369472, %v2201
      %v2203 = vrcp.bf16.pop %v2109
      %v2204 = vmul.bf16 1065369472, %v2203
      %v2205 = vrcp.bf16.pop %v2110
      %v2206 = vmul.bf16 1065369472, %v2205
      %v2207 = vrcp.bf16.pop %v2111
      %v2208 = vmul.bf16 1065369472, %v2207
      %v2209 = vrcp.bf16.pop %v2112
      %v2210 = vmul.bf16 1065369472, %v2209
      %v2211 = vrcp.bf16.pop %v2113
      %v2212 = vmul.bf16 1065369472, %v2211
      %v2213 = vrcp.bf16.pop %v2114
      %v2214 = vmul.bf16 1065369472, %v2213
      %v2215 = vrcp.bf16.pop %v2115
      %v2216 = vmul.bf16 1065369472, %v2215
      %v2217 = vrcp.bf16.pop %v2116
      %v2218 = vmul.bf16 1065369472, %v2217
      %v2219 = vrcp.bf16.pop %v2117
      %v2220 = vmul.bf16 1065369472, %v2219
      %v2221 = vrcp.bf16.pop %v2118
      %v2222 = vmul.bf16 1065369472, %v2221
      %v2223 = vrcp.bf16.pop %v2119
      %v2224 = vmul.bf16 1065369472, %v2223
      %v2225 = vrcp.bf16.pop %v2120
      %v2226 = vmul.bf16 1065369472, %v2225
      %v2227 = vrcp.bf16.pop %v2121
      %v2228 = vmul.bf16 1065369472, %v2227
      %v2229 = vrcp.bf16.pop %v2122
      %v2230 = vmul.bf16 1065369472, %v2229
      %v2231 = vrcp.bf16.pop %v2123
      %v2232 = vmul.bf16 1065369472, %v2231
      %v2233 = vrcp.bf16.pop %v2124
      %v2234 = vmul.bf16 1065369472, %v2233
      %v2235 = vrcp.bf16.pop %v2125
      %v2236 = vmul.bf16 1065369472, %v2235
      %v2237 = vrcp.bf16.pop %v2126
      %v2238 = vmul.bf16 1065369472, %v2237
      %v2239 = vrcp.bf16.pop %v2127
      %v2240 = vmul.bf16 1065369472, %v2239
      %v2241 = vrcp.bf16.pop %v2128
      %v2242 = vmul.bf16 1065369472, %v2241
      %v2243 = vrcp.bf16.pop %v2129
      %v2244 = vmul.bf16 1065369472, %v2243
      %v2245 = vrcp.bf16.pop %v2130
      %v2246 = vmul.bf16 1065369472, %v2245
      %v2247 = vrcp.bf16.pop %v2131
      %v2248 = vmul.bf16 1065369472, %v2247
      %v2249 = vrcp.bf16.pop %v2132
      %v2250 = vmul.bf16 1065369472, %v2249
      %v2251 = vrcp.bf16.pop %v2133
      %v2252 = vmul.bf16 1065369472, %v2251
      %v2253 = vrcp.bf16.pop %v2134
      %v2254 = vmul.bf16 1065369472, %v2253
      %v2255 = vrcp.bf16.pop %v2135
      %v2256 = vmul.bf16 1065369472, %v2255
      %v2257 = vrcp.bf16.pop %v2136
      %v2258 = vmul.bf16 1065369472, %v2257
      %v2259 = vrcp.bf16.pop %v2137
      %v2260 = vmul.bf16 1065369472, %v2259
      %v2261 = vrcp.bf16.pop %v2138
      %v2262 = vmul.bf16 1065369472, %v2261
      %v2263 = vrcp.bf16.pop %v2139
      %v2264 = vmul.bf16 1065369472, %v2263
      %v2265 = vrcp.bf16.pop %v2140
      %v2266 = vmul.bf16 1065369472, %v2265
      %v2267 = vrcp.bf16.pop %v2141
      %v2268 = vmul.bf16 1065369472, %v2267
      %v2269 = vrcp.bf16.pop %v2142
      %v2270 = vmul.bf16 1065369472, %v2269
      %v2271 = vrcp.bf16.pop %v2143
      %v2272 = vmul.bf16 1065369472, %v2271
      %v2273 = vrcp.bf16.pop %v2144
      %v2274 = vmul.bf16 1065369472, %v2273
      %v2275 = vrcp.bf16.pop %v2145
      %v2276 = vmul.bf16 1065369472, %v2275
      %v2277 = vrcp.bf16.pop %v2146
      %v2278 = vmul.bf16 1065369472, %v2277
      %v2279 = vrcp.bf16.pop %v2147
      %v2280 = vmul.bf16 1065369472, %v2279
      %v2281 = vrcp.bf16.pop %v2148
      %v2282 = vmul.bf16 1065369472, %v2281
      %v2283 = vrcp.bf16.pop %v2149
      %v2284 = vmul.bf16 1065369472, %v2283
      %v2285 = vrcp.bf16.pop %v2150
      %v2286 = vmul.bf16 1065369472, %v2285
      %v2287 = vrcp.bf16.pop %v2151
      %v2288 = vmul.bf16 1065369472, %v2287
      %v2289 = vrcp.bf16.pop %v2152
      %v2290 = vmul.bf16 1065369472, %v2289
      %v2291 = vrcp.bf16.pop %v2153
      %v2292 = vmul.bf16 1065369472, %v2291
      %v2293 = vrcp.bf16.pop %v2154
      %v2294 = vmul.bf16 1065369472, %v2293
      %v2295 = vrcp.bf16.pop %v2155
      %v2296 = vmul.bf16 1065369472, %v2295
      %v2297 = vrcp.bf16.pop %v2156
      %v2298 = vmul.bf16 1065369472, %v2297
      %v2299 = vrcp.bf16.pop %v2157
      %v2300 = vmul.bf16 1065369472, %v2299
      %v2301 = vrcp.bf16.pop %v2158
      %v2302 = vmul.bf16 1065369472, %v2301
      %v2303 = vrcp.bf16.pop %v2159
      %v2304 = vmul.bf16 1065369472, %v2303
      %v2305 = vrcp.bf16.pop %v2160
      %v2306 = vmul.bf16 1065369472, %v2305
      %v2307 = vrcp.bf16.pop %v2161
      %v2308 = vmul.bf16 1065369472, %v2307
      %v2309 = vrcp.bf16.pop %v2162
      %v2310 = vmul.bf16 1065369472, %v2309
      %v2311 = vrcp.bf16.pop %v2163
      %v2312 = vmul.bf16 1065369472, %v2311
      %v2313 = vrcp.bf16.pop %v2164
      %v2314 = vmul.bf16 1065369472, %v2313
      %v2315 = vrcp.bf16.pop %v2165
      %v2316 = vmul.bf16 1065369472, %v2315
      %v2317 = vrcp.bf16.pop %v2166
      %v2318 = vmul.bf16 1065369472, %v2317
      %v2319 = vrcp.bf16.pop %v2167
      %v2320 = vmul.bf16 1065369472, %v2319
      %v2321 = vrcp.bf16.pop %v2168
      %v2322 = vmul.bf16 1065369472, %v2321
      %v2323 = vrcp.bf16.pop %v2169
      %v2324 = vmul.bf16 1065369472, %v2323
      %v2325 = vrcp.bf16.pop %v2170
      %v2326 = vmul.bf16 1065369472, %v2325
      %v2327 = vrcp.bf16.pop %v2171
      %v2328 = vmul.bf16 1065369472, %v2327
      %v2329 = vrcp.bf16.pop %v2172
      %v2330 = vmul.bf16 1065369472, %v2329
      %v2331 = vrcp.bf16.pop %v2173
      %v2332 = vmul.bf16 1065369472, %v2331
      %v2333 = vrcp.bf16.pop %v2174
      %v2334 = vmul.bf16 1065369472, %v2333
      %v2335 = vmul.bf16 %v1695, %v2176
      %v2336 = vmul.bf16 %v1696, %v2178
      %v2337 = vmul.bf16 %v1697, %v2180
      %v2338 = vmul.bf16 %v1698, %v2182
      %v2339 = vmul.bf16 %v1699, %v2184
      %v2340 = vmul.bf16 %v1700, %v2186
      %v2341 = vmul.bf16 %v1701, %v2188
      %v2342 = vmul.bf16 %v1702, %v2190
      %v2343 = vmul.bf16 %v1703, %v2192
      %v2344 = vmul.bf16 %v1704, %v2194
      %v2345 = vmul.bf16 %v1705, %v2196
      %v2346 = vmul.bf16 %v1706, %v2198
      %v2347 = vmul.bf16 %v1707, %v2200
      %v2348 = vmul.bf16 %v1708, %v2202
      %v2349 = vmul.bf16 %v1709, %v2204
      %v2350 = vmul.bf16 %v1710, %v2206
      %v2351 = vmul.bf16 %v1711, %v2208
      %v2352 = vmul.bf16 %v1712, %v2210
      %v2353 = vmul.bf16 %v1713, %v2212
      %v2354 = vmul.bf16 %v1714, %v2214
      %v2355 = vmul.bf16 %v1715, %v2216
      %v2356 = vmul.bf16 %v1716, %v2218
      %v2357 = vmul.bf16 %v1717, %v2220
      %v2358 = vmul.bf16 %v1718, %v2222
      %v2359 = vmul.bf16 %v1719, %v2224
      %v2360 = vmul.bf16 %v1720, %v2226
      %v2361 = vmul.bf16 %v1721, %v2228
      %v2362 = vmul.bf16 %v1722, %v2230
      %v2363 = vmul.bf16 %v1723, %v2232
      %v2364 = vmul.bf16 %v1724, %v2234
      %v2365 = vmul.bf16 %v1725, %v2236
      %v2366 = vmul.bf16 %v1726, %v2238
      %v2367 = vmul.bf16 %v1727, %v2240
      %v2368 = vmul.bf16 %v1728, %v2242
      %v2369 = vmul.bf16 %v1729, %v2244
      %v2370 = vmul.bf16 %v1730, %v2246
      %v2371 = vmul.bf16 %v1731, %v2248
      %v2372 = vmul.bf16 %v1732, %v2250
      %v2373 = vmul.bf16 %v1733, %v2252
      %v2374 = vmul.bf16 %v1734, %v2254
      %v2375 = vmul.bf16 %v1735, %v2256
      %v2376 = vmul.bf16 %v1736, %v2258
      %v2377 = vmul.bf16 %v1737, %v2260
      %v2378 = vmul.bf16 %v1738, %v2262
      %v2379 = vmul.bf16 %v1739, %v2264
      %v2380 = vmul.bf16 %v1740, %v2266
      %v2381 = vmul.bf16 %v1741, %v2268
      %v2382 = vmul.bf16 %v1742, %v2270
      %v2383 = vmul.bf16 %v1743, %v2272
      %v2384 = vmul.bf16 %v1744, %v2274
      %v2385 = vmul.bf16 %v1745, %v2276
      %v2386 = vmul.bf16 %v1746, %v2278
      %v2387 = vmul.bf16 %v1747, %v2280
      %v2388 = vmul.bf16 %v1748, %v2282
      %v2389 = vmul.bf16 %v1749, %v2284
      %v2390 = vmul.bf16 %v1750, %v2286
      %v2391 = vmul.bf16 %v1751, %v2288
      %v2392 = vmul.bf16 %v1752, %v2290
      %v2393 = vmul.bf16 %v1753, %v2292
      %v2394 = vmul.bf16 %v1754, %v2294
      %v2395 = vmul.bf16 %v1755, %v2296
      %v2396 = vmul.bf16 %v1756, %v2298
      %v2397 = vmul.bf16 %v1757, %v2300
      %v2398 = vmul.bf16 %v1758, %v2302
      %v2399 = vmul.bf16 %v1759, %v2304
      %v2400 = vmul.bf16 %v1760, %v2306
      %v2401 = vmul.bf16 %v1761, %v2308
      %v2402 = vmul.bf16 %v1762, %v2310
      %v2403 = vmul.bf16 %v1763, %v2312
      %v2404 = vmul.bf16 %v1764, %v2314
      %v2405 = vmul.bf16 %v1765, %v2316
      %v2406 = vmul.bf16 %v1766, %v2318
      %v2407 = vmul.bf16 %v1767, %v2320
      %v2408 = vmul.bf16 %v1768, %v2322
      %v2409 = vmul.bf16 %v1769, %v2324
      %v2410 = vmul.bf16 %v1770, %v2326
      %v2411 = vmul.bf16 %v1771, %v2328
      %v2412 = vmul.bf16 %v1772, %v2330
      %v2413 = vmul.bf16 %v1773, %v2332
      %v2414 = vmul.bf16 %v1774, %v2334
      %v2415 = vld [vmem:[%s5] sm:$0x1]
      %2416 = vmatprep.subr.bf16.mxu0 %v2336
      %2417 = vmatpush1.bf16.msra.mxu0 %v2335
      %2418 = vmatprep.subr.bf16.mxu0 %v2346
      %2419 = vmatpush1.bf16.msra.mxu0 %v2345
      %2420 = vmatprep.subr.bf16.mxu0 %v2356
      %2421 = vmatpush1.bf16.msra.mxu0 %v2355
      %2422 = vmatprep.subr.bf16.mxu0 %v2366
      %2423 = vmatpush1.bf16.msra.mxu0 %v2365
      %2424 = vmatprep.subr.bf16.mxu0 %v2376
      %2425 = vmatpush1.bf16.msra.mxu0 %v2375
      %2426 = vmatprep.subr.bf16.mxu0 %v2386
      %2427 = vmatpush1.bf16.msra.mxu0 %v2385
      %2428 = vmatprep.subr.bf16.mxu0 %v2396
      %2429 = vmatpush1.bf16.msra.mxu0 %v2395
      %2430 = vmatprep.subr.bf16.mxu0 %v2406
      %2431 = vmatpush1.bf16.msra.mxu0 %v2405
      %2432 = vmatprep.subr.bf16.mxu0 0
      %2433 = vmatpush1.bf16.msra.mxu0 0
      %2434 = vmatprep.subr.bf16.mxu0 0
      %2435 = vmatpush1.bf16.msra.mxu0 0
      %2436 = vmatprep.subr.bf16.mxu0 0
      %2437 = vmatpush1.bf16.msra.mxu0 0
      %2438 = vmatprep.subr.bf16.mxu0 0
      %2439 = vmatpush1.bf16.msra.mxu0 0
      %2440 = vmatprep.subr.bf16.mxu0 0
      %2441 = vmatpush1.bf16.msra.mxu0 0
      %2442 = vmatprep.subr.bf16.mxu0 0
      %2443 = vmatpush1.bf16.msra.mxu0 0
      %2444 = vmatprep.subr.bf16.mxu0 0
      %2445 = vmatpush1.bf16.msra.mxu0 0
      %2446 = vmatprep.subr.bf16.mxu0 0
      %2447 = vmatpush1.bf16.msra.mxu0 0
      %2448 = vmatprep.mubr.bf16.mxu0 0
      %2449 = vmatmul.mubr.bf16.gmra.mrb[0].mxu0 %v2415
      %v2450 = vpop.f32.mrb[0].mxu0
      %v2451 = vadd.f32 0.0, %v2450
      %v2452 = vpop.f32.mrb[0].mxu0
      %v2453 = vadd.f32 0.0, %v2452
      %v2454 = vpop.f32.mrb[0].mxu0
      %v2455 = vpop.f32.mrb[0].mxu0
      %2456 = vdwg.mxu0
      %2457 = vmatprep.subr.bf16.mxu0 %v2338
      %2458 = vmatpush1.bf16.msra.mxu0 %v2337
      %2459 = vmatprep.subr.bf16.mxu0 %v2348
      %2460 = vmatpush1.bf16.msra.mxu0 %v2347
      %2461 = vmatprep.subr.bf16.mxu0 %v2358
      %2462 = vmatpush1.bf16.msra.mxu0 %v2357
      %2463 = vmatprep.subr.bf16.mxu0 %v2368
      %2464 = vmatpush1.bf16.msra.mxu0 %v2367
      %2465 = vmatprep.subr.bf16.mxu0 %v2378
      %2466 = vmatpush1.bf16.msra.mxu0 %v2377
      %2467 = vmatprep.subr.bf16.mxu0 %v2388
      %2468 = vmatpush1.bf16.msra.mxu0 %v2387
      %2469 = vmatprep.subr.bf16.mxu0 %v2398
      %2470 = vmatpush1.bf16.msra.mxu0 %v2397
      %2471 = vmatprep.subr.bf16.mxu0 %v2408
      %2472 = vmatpush1.bf16.msra.mxu0 %v2407
      %2473 = vmatprep.subr.bf16.mxu0 0
      %2474 = vmatpush1.bf16.msra.mxu0 0
      %2475 = vmatprep.subr.bf16.mxu0 0
      %2476 = vmatpush1.bf16.msra.mxu0 0
      %2477 = vmatprep.subr.bf16.mxu0 0
      %2478 = vmatpush1.bf16.msra.mxu0 0
      %2479 = vmatprep.subr.bf16.mxu0 0
      %2480 = vmatpush1.bf16.msra.mxu0 0
      %2481 = vmatprep.subr.bf16.mxu0 0
      %2482 = vmatpush1.bf16.msra.mxu0 0
      %2483 = vmatprep.subr.bf16.mxu0 0
      %2484 = vmatpush1.bf16.msra.mxu0 0
      %2485 = vmatprep.subr.bf16.mxu0 0
      %2486 = vmatpush1.bf16.msra.mxu0 0
      %2487 = vmatprep.subr.bf16.mxu0 0
      %2488 = vmatpush1.bf16.msra.mxu0 0
      %2489 = vmatprep.mubr.bf16.mxu0 0
      %2490 = vmatmul.mubr.bf16.gmra.mrb[0].mxu0 %v2415
      %v2491 = vpop.f32.mrb[0].mxu0
      %v2492 = vadd.f32 0.0, %v2491
      %v2493 = vpop.f32.mrb[0].mxu0
      %v2494 = vadd.f32 0.0, %v2493
      %v2495 = vpop.f32.mrb[0].mxu0
      %v2496 = vpop.f32.mrb[0].mxu0
      %2497 = vdwg.mxu0
      %2498 = vmatprep.subr.bf16.mxu0 %v2340
      %2499 = vmatpush1.bf16.msra.mxu0 %v2339
      %2500 = vmatprep.subr.bf16.mxu0 %v2350
      %2501 = vmatpush1.bf16.msra.mxu0 %v2349
      %2502 = vmatprep.subr.bf16.mxu0 %v2360
      %2503 = vmatpush1.bf16.msra.mxu0 %v2359
      %2504 = vmatprep.subr.bf16.mxu0 %v2370
      %2505 = vmatpush1.bf16.msra.mxu0 %v2369
      %2506 = vmatprep.subr.bf16.mxu0 %v2380
      %2507 = vmatpush1.bf16.msra.mxu0 %v2379
      %2508 = vmatprep.subr.bf16.mxu0 %v2390
      %2509 = vmatpush1.bf16.msra.mxu0 %v2389
      %2510 = vmatprep.subr.bf16.mxu0 %v2400
      %2511 = vmatpush1.bf16.msra.mxu0 %v2399
      %2512 = vmatprep.subr.bf16.mxu0 %v2410
      %2513 = vmatpush1.bf16.msra.mxu0 %v2409
      %2514 = vmatprep.subr.bf16.mxu0 0
      %2515 = vmatpush1.bf16.msra.mxu0 0
      %2516 = vmatprep.subr.bf16.mxu0 0
      %2517 = vmatpush1.bf16.msra.mxu0 0
      %2518 = vmatprep.subr.bf16.mxu0 0
      %2519 = vmatpush1.bf16.msra.mxu0 0
      %2520 = vmatprep.subr.bf16.mxu0 0
      %2521 = vmatpush1.bf16.msra.mxu0 0
      %2522 = vmatprep.subr.bf16.mxu0 0
      %2523 = vmatpush1.bf16.msra.mxu0 0
      %2524 = vmatprep.subr.bf16.mxu0 0
      %2525 = vmatpush1.bf16.msra.mxu0 0
      %2526 = vmatprep.subr.bf16.mxu0 0
      %2527 = vmatpush1.bf16.msra.mxu0 0
      %2528 = vmatprep.subr.bf16.mxu0 0
      %2529 = vmatpush1.bf16.msra.mxu0 0
      %2530 = vmatprep.mubr.bf16.mxu0 0
      %2531 = vmatmul.mubr.bf16.gmra.mrb[0].mxu0 %v2415
      %v2532 = vpop.f32.mrb[0].mxu0
      %v2533 = vadd.f32 0.0, %v2532
      %v2534 = vpop.f32.mrb[0].mxu0
      %v2535 = vadd.f32 0.0, %v2534
      %v2536 = vpop.f32.mrb[0].mxu0
      %v2537 = vpop.f32.mrb[0].mxu0
      %2538 = vdwg.mxu0
      %2539 = vmatprep.subr.bf16.mxu0 %v2342
      %2540 = vmatpush1.bf16.msra.mxu0 %v2341
      %2541 = vmatprep.subr.bf16.mxu0 %v2352
      %2542 = vmatpush1.bf16.msra.mxu0 %v2351
      %2543 = vmatprep.subr.bf16.mxu0 %v2362
      %2544 = vmatpush1.bf16.msra.mxu0 %v2361
      %2545 = vmatprep.subr.bf16.mxu0 %v2372
      %2546 = vmatpush1.bf16.msra.mxu0 %v2371
      %2547 = vmatprep.subr.bf16.mxu0 %v2382
      %2548 = vmatpush1.bf16.msra.mxu0 %v2381
      %2549 = vmatprep.subr.bf16.mxu0 %v2392
      %2550 = vmatpush1.bf16.msra.mxu0 %v2391
      %2551 = vmatprep.subr.bf16.mxu0 %v2402
      %2552 = vmatpush1.bf16.msra.mxu0 %v2401
      %2553 = vmatprep.subr.bf16.mxu0 %v2412
      %2554 = vmatpush1.bf16.msra.mxu0 %v2411
      %2555 = vmatprep.subr.bf16.mxu0 0
      %2556 = vmatpush1.bf16.msra.mxu0 0
      %2557 = vmatprep.subr.bf16.mxu0 0
      %2558 = vmatpush1.bf16.msra.mxu0 0
      %2559 = vmatprep.subr.bf16.mxu0 0
      %2560 = vmatpush1.bf16.msra.mxu0 0
      %2561 = vmatprep.subr.bf16.mxu0 0
      %2562 = vmatpush1.bf16.msra.mxu0 0
      %2563 = vmatprep.subr.bf16.mxu0 0
      %2564 = vmatpush1.bf16.msra.mxu0 0
      %2565 = vmatprep.subr.bf16.mxu0 0
      %2566 = vmatpush1.bf16.msra.mxu0 0
      %2567 = vmatprep.subr.bf16.mxu0 0
      %2568 = vmatpush1.bf16.msra.mxu0 0
      %2569 = vmatprep.subr.bf16.mxu0 0
      %2570 = vmatpush1.bf16.msra.mxu0 0
      %2571 = vmatprep.mubr.bf16.mxu0 0
      %2572 = vmatmul.mubr.bf16.gmra.mrb[0].mxu0 %v2415
      %v2573 = vpop.f32.mrb[0].mxu0
      %v2574 = vadd.f32 0.0, %v2573
      %v2575 = vpop.f32.mrb[0].mxu0
      %v2576 = vadd.f32 0.0, %v2575
      %v2577 = vpop.f32.mrb[0].mxu0
      %v2578 = vpop.f32.mrb[0].mxu0
      %2579 = vdwg.mxu0
      %2580 = vmatprep.subr.bf16.mxu0 %v2344
      %2581 = vmatpush1.bf16.msra.mxu0 %v2343
      %2582 = vmatprep.subr.bf16.mxu0 %v2354
      %2583 = vmatpush1.bf16.msra.mxu0 %v2353
      %2584 = vmatprep.subr.bf16.mxu0 %v2364
      %2585 = vmatpush1.bf16.msra.mxu0 %v2363
      %2586 = vmatprep.subr.bf16.mxu0 %v2374
      %2587 = vmatpush1.bf16.msra.mxu0 %v2373
      %2588 = vmatprep.subr.bf16.mxu0 %v2384
      %2589 = vmatpush1.bf16.msra.mxu0 %v2383
      %2590 = vmatprep.subr.bf16.mxu0 %v2394
      %2591 = vmatpush1.bf16.msra.mxu0 %v2393
      %2592 = vmatprep.subr.bf16.mxu0 %v2404
      %2593 = vmatpush1.bf16.msra.mxu0 %v2403
      %2594 = vmatprep.subr.bf16.mxu0 %v2414
      %2595 = vmatpush1.bf16.msra.mxu0 %v2413
      %2596 = vmatprep.subr.bf16.mxu0 0
      %2597 = vmatpush1.bf16.msra.mxu0 0
      %2598 = vmatprep.subr.bf16.mxu0 0
      %2599 = vmatpush1.bf16.msra.mxu0 0
      %2600 = vmatprep.subr.bf16.mxu0 0
      %2601 = vmatpush1.bf16.msra.mxu0 0
      %2602 = vmatprep.subr.bf16.mxu0 0
      %2603 = vmatpush1.bf16.msra.mxu0 0
      %2604 = vmatprep.subr.bf16.mxu0 0
      %2605 = vmatpush1.bf16.msra.mxu0 0
      %2606 = vmatprep.subr.bf16.mxu0 0
      %2607 = vmatpush1.bf16.msra.mxu0 0
      %2608 = vmatprep.subr.bf16.mxu0 0
      %2609 = vmatpush1.bf16.msra.mxu0 0
      %2610 = vmatprep.subr.bf16.mxu0 0
      %2611 = vmatpush1.bf16.msra.mxu0 0
      %2612 = vmatprep.mubr.bf16.mxu0 0
      %2613 = vmatmul.mubr.bf16.gmra.mrb[0].mxu0 %v2415
      %v2614 = vpop.f32.mrb[0].mxu0
      %v2615 = vadd.f32 0.0, %v2614
      %v2616 = vpop.f32.mrb[0].mxu0
      %v2617 = vadd.f32 0.0, %v2616
      %v2618 = vpop.f32.mrb[0].mxu0
      %v2619 = vpop.f32.mrb[0].mxu0
      %2620 = vdwg.mxu0
      %v2621 = vpack.c.bf16 %v2451, %v2451
      %v2622 = vpack.c.bf16 %v2453, %v2453
      %v2623 = vpack.c.bf16 %v2492, %v2492
      %v2624 = vpack.c.bf16 %v2494, %v2494
      %v2625 = vpack.c.bf16 %v2533, %v2533
      %v2626 = vpack.c.bf16 %v2535, %v2535
      %v2627 = vpack.c.bf16 %v2574, %v2574
      %v2628 = vpack.c.bf16 %v2576, %v2576
      %v2629 = vpack.c.bf16 %v2615, %v2615
      %v2630 = vpack.c.bf16 %v2617, %v2617
      %v2631 = vld [vmem:[%s434] sm:$0xf]
      %v2632 = vld [vmem:[%s434 + $0x4] sm:$0xf]
      %v2633 = vld [vmem:[%s434 + $0x8] sm:$0xf]
      %v2634 = vld [vmem:[%s434 + $0xc] sm:$0xf]
      %v2635 = vld [vmem:[%s434 + $0x10] sm:$0xf]
      %v2636 = vld [vmem:[%s434 + $0x14] sm:$0xf]
      %v2637 = vld [vmem:[%s434 + $0x18] sm:$0xf]
      %v2638 = vld [vmem:[%s434 + $0x1c] sm:$0xf]
      %v2639 = vld [vmem:[%s434 + $0x20] sm:$0xf]
      %v2640 = vld [vmem:[%s434 + $0x24] sm:$0xf]
      %v2641 = vld [vmem:[%s434 + $0x28] sm:$0xf]
      %v2642 = vld [vmem:[%s434 + $0x2c] sm:$0xf]
      %v2643 = vld [vmem:[%s434 + $0x30] sm:$0xf]
      %v2644 = vld [vmem:[%s434 + $0x34] sm:$0xf]
      %v2645 = vld [vmem:[%s434 + $0x38] sm:$0xf]
      %v2646 = vld [vmem:[%s434 + $0x3c] sm:$0xf]
      %v2647 = vld [vmem:[%s434 + $0x40] sm:$0xf]
      %v2648 = vld [vmem:[%s434 + $0x44] sm:$0xf]
      %v2649 = vld [vmem:[%s434 + $0x48] sm:$0xf]
      %v2650 = vld [vmem:[%s434 + $0x4c] sm:$0xf]
      %v2651 = vld [vmem:[%s434 + $0x50] sm:$0xf]
      %v2652 = vld [vmem:[%s434 + $0x54] sm:$0xf]
      %v2653 = vld [vmem:[%s434 + $0x58] sm:$0xf]
      %v2654 = vld [vmem:[%s434 + $0x5c] sm:$0xf]
      %v2655 = vld [vmem:[%s434 + $0x60] sm:$0xf]
      %v2656 = vld [vmem:[%s434 + $0x64] sm:$0xf]
      %v2657 = vld [vmem:[%s434 + $0x68] sm:$0xf]
      %v2658 = vld [vmem:[%s434 + $0x6c] sm:$0xf]
      %v2659 = vld [vmem:[%s434 + $0x70] sm:$0xf]
      %v2660 = vld [vmem:[%s434 + $0x74] sm:$0xf]
      %v2661 = vld [vmem:[%s434 + $0x78] sm:$0xf]
      %v2662 = vld [vmem:[%s434 + $0x7c] sm:$0xf]
      %v2663 = vld [vmem:[%s434 + $0x80] sm:$0xf]
      %v2664 = vld [vmem:[%s434 + $0x84] sm:$0xf]
      %v2665 = vld [vmem:[%s434 + $0x88] sm:$0xf]
      %v2666 = vld [vmem:[%s434 + $0x8c] sm:$0xf]
      %v2667 = vld [vmem:[%s434 + $0x90] sm:$0xf]
      %v2668 = vld [vmem:[%s434 + $0x94] sm:$0xf]
      %v2669 = vld [vmem:[%s434 + $0x98] sm:$0xf]
      %v2670 = vld [vmem:[%s434 + $0x9c] sm:$0xf]
      %v2671 = vld [vmem:[%s434 + $0xa0] sm:$0xf]
      %v2672 = vld [vmem:[%s434 + $0xa4] sm:$0xf]
      %v2673 = vld [vmem:[%s434 + $0xa8] sm:$0xf]
      %v2674 = vld [vmem:[%s434 + $0xac] sm:$0xf]
      %v2675 = vld [vmem:[%s434 + $0xb0] sm:$0xf]
      %v2676 = vld [vmem:[%s434 + $0xb4] sm:$0xf]
      %v2677 = vld [vmem:[%s434 + $0xb8] sm:$0xf]
      %v2678 = vld [vmem:[%s434 + $0xbc] sm:$0xf]
      %v2679 = vld [vmem:[%s434 + $0xc0] sm:$0xf]
      %v2680 = vld [vmem:[%s434 + $0xc4] sm:$0xf]
      %v2681 = vld [vmem:[%s434 + $0xc8] sm:$0xf]
      %v2682 = vld [vmem:[%s434 + $0xcc] sm:$0xf]
      %v2683 = vld [vmem:[%s434 + $0xd0] sm:$0xf]
      %v2684 = vld [vmem:[%s434 + $0xd4] sm:$0xf]
      %v2685 = vld [vmem:[%s434 + $0xd8] sm:$0xf]
      %v2686 = vld [vmem:[%s434 + $0xdc] sm:$0xf]
      %v2687 = vld [vmem:[%s434 + $0xe0] sm:$0xf]
      %v2688 = vld [vmem:[%s434 + $0xe4] sm:$0xf]
      %v2689 = vld [vmem:[%s434 + $0xe8] sm:$0xf]
      %v2690 = vld [vmem:[%s434 + $0xec] sm:$0xf]
      %v2691 = vld [vmem:[%s434 + $0xf0] sm:$0xf]
      %v2692 = vld [vmem:[%s434 + $0xf4] sm:$0xf]
      %v2693 = vld [vmem:[%s434 + $0xf8] sm:$0xf]
      %v2694 = vld [vmem:[%s434 + $0xfc] sm:$0xf]
      %v2695 = vld [vmem:[%s434 + $0x100] sm:$0xf]
      %v2696 = vld [vmem:[%s434 + $0x104] sm:$0xf]
      %v2697 = vld [vmem:[%s434 + $0x108] sm:$0xf]
      %v2698 = vld [vmem:[%s434 + $0x10c] sm:$0xf]
      %v2699 = vld [vmem:[%s434 + $0x110] sm:$0xf]
      %v2700 = vld [vmem:[%s434 + $0x114] sm:$0xf]
      %v2701 = vld [vmem:[%s434 + $0x118] sm:$0xf]
      %v2702 = vld [vmem:[%s434 + $0x11c] sm:$0xf]
      %v2703 = vld [vmem:[%s434 + $0x120] sm:$0xf]
      %v2704 = vld [vmem:[%s434 + $0x124] sm:$0xf]
      %v2705 = vld [vmem:[%s434 + $0x128] sm:$0xf]
      %v2706 = vld [vmem:[%s434 + $0x12c] sm:$0xf]
      %v2707 = vld [vmem:[%s434 + $0x130] sm:$0xf]
      %v2708 = vld [vmem:[%s434 + $0x134] sm:$0xf]
      %v2709 = vld [vmem:[%s434 + $0x138] sm:$0xf]
      %v2710 = vld [vmem:[%s434 + $0x13c] sm:$0xf]
      %v2711 = vld [vmem:[%s434 + $0x140] sm:$0xf]
      %v2712 = vld [vmem:[%s434 + $0x144] sm:$0xf]
      %v2713 = vld [vmem:[%s434 + $0x148] sm:$0xf]
      %v2714 = vld [vmem:[%s434 + $0x14c] sm:$0xf]
      %v2715 = vld [vmem:[%s434 + $0x150] sm:$0xf]
      %v2716 = vld [vmem:[%s434 + $0x154] sm:$0xf]
      %v2717 = vld [vmem:[%s434 + $0x158] sm:$0xf]
      %v2718 = vld [vmem:[%s434 + $0x15c] sm:$0xf]
      %v2719 = vld [vmem:[%s434 + $0x160] sm:$0xf]
      %v2720 = vld [vmem:[%s434 + $0x164] sm:$0xf]
      %v2721 = vld [vmem:[%s434 + $0x168] sm:$0xf]
      %v2722 = vld [vmem:[%s434 + $0x16c] sm:$0xf]
      %v2723 = vld [vmem:[%s434 + $0x170] sm:$0xf]
      %v2724 = vld [vmem:[%s434 + $0x174] sm:$0xf]
      %v2725 = vld [vmem:[%s434 + $0x178] sm:$0xf]
      %v2726 = vld [vmem:[%s434 + $0x17c] sm:$0xf]
      %v2727 = vld [vmem:[%s434 + $0x180] sm:$0xf]
      %v2728 = vld [vmem:[%s434 + $0x184] sm:$0xf]
      %v2729 = vld [vmem:[%s434 + $0x188] sm:$0xf]
      %v2730 = vld [vmem:[%s434 + $0x18c] sm:$0xf]
      %v2731 = vld [vmem:[%s434 + $0x190] sm:$0xf]
      %v2732 = vld [vmem:[%s434 + $0x194] sm:$0xf]
      %v2733 = vld [vmem:[%s434 + $0x198] sm:$0xf]
      %v2734 = vld [vmem:[%s434 + $0x19c] sm:$0xf]
      %v2735 = vld [vmem:[%s434 + $0x1a0] sm:$0xf]
      %v2736 = vld [vmem:[%s434 + $0x1a4] sm:$0xf]
      %v2737 = vld [vmem:[%s434 + $0x1a8] sm:$0xf]
      %v2738 = vld [vmem:[%s434 + $0x1ac] sm:$0xf]
      %v2739 = vld [vmem:[%s434 + $0x1b0] sm:$0xf]
      %v2740 = vld [vmem:[%s434 + $0x1b4] sm:$0xf]
      %v2741 = vld [vmem:[%s434 + $0x1b8] sm:$0xf]
      %v2742 = vld [vmem:[%s434 + $0x1bc] sm:$0xf]
      %v2743 = vld [vmem:[%s434 + $0x1c0] sm:$0xf]
      %v2744 = vld [vmem:[%s434 + $0x1c4] sm:$0xf]
      %v2745 = vld [vmem:[%s434 + $0x1c8] sm:$0xf]
      %v2746 = vld [vmem:[%s434 + $0x1cc] sm:$0xf]
      %v2747 = vld [vmem:[%s434 + $0x1d0] sm:$0xf]
      %v2748 = vld [vmem:[%s434 + $0x1d4] sm:$0xf]
      %v2749 = vld [vmem:[%s434 + $0x1d8] sm:$0xf]
      %v2750 = vld [vmem:[%s434 + $0x1dc] sm:$0xf]
      %v2751 = vld [vmem:[%s434 + $0x1e0] sm:$0xf]
      %v2752 = vld [vmem:[%s434 + $0x1e4] sm:$0xf]
      %v2753 = vld [vmem:[%s434 + $0x1e8] sm:$0xf]
      %v2754 = vld [vmem:[%s434 + $0x1ec] sm:$0xf]
      %v2755 = vld [vmem:[%s434 + $0x1f0] sm:$0xf]
      %v2756 = vld [vmem:[%s434 + $0x1f4] sm:$0xf]
      %v2757 = vld [vmem:[%s434 + $0x1f8] sm:$0xf]
      %v2758 = vld [vmem:[%s434 + $0x1fc] sm:$0xf]
      %v2759 = vld [vmem:[%s434 + $0x200] sm:$0xf]
      %v2760 = vld [vmem:[%s434 + $0x204] sm:$0xf]
      %v2761 = vld [vmem:[%s434 + $0x208] sm:$0xf]
      %v2762 = vld [vmem:[%s434 + $0x20c] sm:$0xf]
      %v2763 = vld [vmem:[%s434 + $0x210] sm:$0xf]
      %v2764 = vld [vmem:[%s434 + $0x214] sm:$0xf]
      %v2765 = vld [vmem:[%s434 + $0x218] sm:$0xf]
      %v2766 = vld [vmem:[%s434 + $0x21c] sm:$0xf]
      %v2767 = vld [vmem:[%s434 + $0x220] sm:$0xf]
      %v2768 = vld [vmem:[%s434 + $0x224] sm:$0xf]
      %v2769 = vld [vmem:[%s434 + $0x228] sm:$0xf]
      %v2770 = vld [vmem:[%s434 + $0x22c] sm:$0xf]
      %v2771 = vld [vmem:[%s434 + $0x230] sm:$0xf]
      %v2772 = vld [vmem:[%s434 + $0x234] sm:$0xf]
      %v2773 = vld [vmem:[%s434 + $0x238] sm:$0xf]
      %v2774 = vld [vmem:[%s434 + $0x23c] sm:$0xf]
      %v2775 = vld [vmem:[%s434 + $0x240] sm:$0xf]
      %v2776 = vld [vmem:[%s434 + $0x244] sm:$0xf]
      %v2777 = vld [vmem:[%s434 + $0x248] sm:$0xf]
      %v2778 = vld [vmem:[%s434 + $0x24c] sm:$0xf]
      %v2779 = vld [vmem:[%s434 + $0x250] sm:$0xf]
      %v2780 = vld [vmem:[%s434 + $0x254] sm:$0xf]
      %v2781 = vld [vmem:[%s434 + $0x258] sm:$0xf]
      %v2782 = vld [vmem:[%s434 + $0x25c] sm:$0xf]
      %v2783 = vld [vmem:[%s434 + $0x260] sm:$0xf]
      %v2784 = vld [vmem:[%s434 + $0x264] sm:$0xf]
      %v2785 = vld [vmem:[%s434 + $0x268] sm:$0xf]
      %v2786 = vld [vmem:[%s434 + $0x26c] sm:$0xf]
      %v2787 = vld [vmem:[%s434 + $0x270] sm:$0xf]
      %v2788 = vld [vmem:[%s434 + $0x274] sm:$0xf]
      %v2789 = vld [vmem:[%s434 + $0x278] sm:$0xf]
      %v2790 = vld [vmem:[%s434 + $0x27c] sm:$0xf]
      %v2791 = vld [vmem:[%s437] sm:$0x1]
      %v2793 = vlaneseq
      %v2794 = vshrl.u32 %v2793, 7
      %v2795 = vsub.s32 0, %v2794
      %v2796 = vrot.slane %v2791, %v2795
      %v2958 = vunpack.c.l.b16 %v2631
      %v2959 = vunpack.c.l.b16 %v2632
      %v2960 = vunpack.c.l.b16 %v2633
      %v2961 = vunpack.c.l.b16 %v2634
      %v2962 = vunpack.c.l.b16 %v2635
      %v2963 = vunpack.c.l.b16 %v2636
      %v2964 = vunpack.c.l.b16 %v2637
      %v2965 = vunpack.c.l.b16 %v2638
      %v2966 = vunpack.c.l.b16 %v2639
      %v2967 = vunpack.c.l.b16 %v2640
      %v2968 = vunpack.c.l.b16 %v2641
      %v2969 = vunpack.c.l.b16 %v2642
      %v2970 = vunpack.c.l.b16 %v2643
      %v2971 = vunpack.c.l.b16 %v2644
      %v2972 = vunpack.c.l.b16 %v2645
      %v2973 = vunpack.c.l.b16 %v2646
      %v2974 = vunpack.c.l.b16 %v2647
      %v2975 = vunpack.c.l.b16 %v2648
      %v2976 = vunpack.c.l.b16 %v2649
      %v2977 = vunpack.c.l.b16 %v2650
      %v2978 = vunpack.c.l.b16 %v2651
      %v2979 = vunpack.c.l.b16 %v2652
      %v2980 = vunpack.c.l.b16 %v2653
      %v2981 = vunpack.c.l.b16 %v2654
      %v2982 = vunpack.c.l.b16 %v2655
      %v2983 = vunpack.c.l.b16 %v2656
      %v2984 = vunpack.c.l.b16 %v2657
      %v2985 = vunpack.c.l.b16 %v2658
      %v2986 = vunpack.c.l.b16 %v2659
      %v2987 = vunpack.c.l.b16 %v2660
      %v2988 = vunpack.c.l.b16 %v2661
      %v2989 = vunpack.c.l.b16 %v2662
      %v2990 = vunpack.c.l.b16 %v2663
      %v2991 = vunpack.c.l.b16 %v2664
      %v2992 = vunpack.c.l.b16 %v2665
      %v2993 = vunpack.c.l.b16 %v2666
      %v2994 = vunpack.c.l.b16 %v2667
      %v2995 = vunpack.c.l.b16 %v2668
      %v2996 = vunpack.c.l.b16 %v2669
      %v2997 = vunpack.c.l.b16 %v2670
      %v2998 = vunpack.c.l.b16 %v2671
      %v2999 = vunpack.c.l.b16 %v2672
      %v3000 = vunpack.c.l.b16 %v2673
      %v3001 = vunpack.c.l.b16 %v2674
      %v3002 = vunpack.c.l.b16 %v2675
      %v3003 = vunpack.c.l.b16 %v2676
      %v3004 = vunpack.c.l.b16 %v2677
      %v3005 = vunpack.c.l.b16 %v2678
      %v3006 = vunpack.c.l.b16 %v2679
      %v3007 = vunpack.c.l.b16 %v2680
      %v3008 = vunpack.c.l.b16 %v2681
      %v3009 = vunpack.c.l.b16 %v2682
      %v3010 = vunpack.c.l.b16 %v2683
      %v3011 = vunpack.c.l.b16 %v2684
      %v3012 = vunpack.c.l.b16 %v2685
      %v3013 = vunpack.c.l.b16 %v2686
      %v3014 = vunpack.c.l.b16 %v2687
      %v3015 = vunpack.c.l.b16 %v2688
      %v3016 = vunpack.c.l.b16 %v2689
      %v3017 = vunpack.c.l.b16 %v2690
      %v3018 = vunpack.c.l.b16 %v2691
      %v3019 = vunpack.c.l.b16 %v2692
      %v3020 = vunpack.c.l.b16 %v2693
      %v3021 = vunpack.c.l.b16 %v2694
      %v3022 = vunpack.c.l.b16 %v2695
      %v3023 = vunpack.c.l.b16 %v2696
      %v3024 = vunpack.c.l.b16 %v2697
      %v3025 = vunpack.c.l.b16 %v2698
      %v3026 = vunpack.c.l.b16 %v2699
      %v3027 = vunpack.c.l.b16 %v2700
      %v3028 = vunpack.c.l.b16 %v2701
      %v3029 = vunpack.c.l.b16 %v2702
      %v3030 = vunpack.c.l.b16 %v2703
      %v3031 = vunpack.c.l.b16 %v2704
      %v3032 = vunpack.c.l.b16 %v2705
      %v3033 = vunpack.c.l.b16 %v2706
      %v3034 = vunpack.c.l.b16 %v2707
      %v3035 = vunpack.c.l.b16 %v2708
      %v3036 = vunpack.c.l.b16 %v2709
      %v3037 = vunpack.c.l.b16 %v2710
      %v3038 = vunpack.c.l.b16 %v2711
      %v3039 = vunpack.c.l.b16 %v2712
      %v3040 = vunpack.c.l.b16 %v2713
      %v3041 = vunpack.c.l.b16 %v2714
      %v3042 = vunpack.c.l.b16 %v2715
      %v3043 = vunpack.c.l.b16 %v2716
      %v3044 = vunpack.c.l.b16 %v2717
      %v3045 = vunpack.c.l.b16 %v2718
      %v3046 = vunpack.c.l.b16 %v2719
      %v3047 = vunpack.c.l.b16 %v2720
      %v3048 = vunpack.c.l.b16 %v2721
      %v3049 = vunpack.c.l.b16 %v2722
      %v3050 = vunpack.c.l.b16 %v2723
      %v3051 = vunpack.c.l.b16 %v2724
      %v3052 = vunpack.c.l.b16 %v2725
      %v3053 = vunpack.c.l.b16 %v2726
      %v3054 = vunpack.c.l.b16 %v2727
      %v3055 = vunpack.c.l.b16 %v2728
      %v3056 = vunpack.c.l.b16 %v2729
      %v3057 = vunpack.c.l.b16 %v2730
      %v3058 = vunpack.c.l.b16 %v2731
      %v3059 = vunpack.c.l.b16 %v2732
      %v3060 = vunpack.c.l.b16 %v2733
      %v3061 = vunpack.c.l.b16 %v2734
      %v3062 = vunpack.c.l.b16 %v2735
      %v3063 = vunpack.c.l.b16 %v2736
      %v3064 = vunpack.c.l.b16 %v2737
      %v3065 = vunpack.c.l.b16 %v2738
      %v3066 = vunpack.c.l.b16 %v2739
      %v3067 = vunpack.c.l.b16 %v2740
      %v3068 = vunpack.c.l.b16 %v2741
      %v3069 = vunpack.c.l.b16 %v2742
      %v3070 = vunpack.c.l.b16 %v2743
      %v3071 = vunpack.c.l.b16 %v2744
      %v3072 = vunpack.c.l.b16 %v2745
      %v3073 = vunpack.c.l.b16 %v2746
      %v3074 = vunpack.c.l.b16 %v2747
      %v3075 = vunpack.c.l.b16 %v2748
      %v3076 = vunpack.c.l.b16 %v2749
      %v3077 = vunpack.c.l.b16 %v2750
      %v3078 = vunpack.c.l.b16 %v2751
      %v3079 = vunpack.c.l.b16 %v2752
      %v3080 = vunpack.c.l.b16 %v2753
      %v3081 = vunpack.c.l.b16 %v2754
      %v3082 = vunpack.c.l.b16 %v2755
      %v3083 = vunpack.c.l.b16 %v2756
      %v3084 = vunpack.c.l.b16 %v2757
      %v3085 = vunpack.c.l.b16 %v2758
      %v3086 = vunpack.c.l.b16 %v2759
      %v3087 = vunpack.c.l.b16 %v2760
      %v3088 = vunpack.c.l.b16 %v2761
      %v3089 = vunpack.c.l.b16 %v2762
      %v3090 = vunpack.c.l.b16 %v2763
      %v3091 = vunpack.c.l.b16 %v2764
      %v3092 = vunpack.c.l.b16 %v2765
      %v3093 = vunpack.c.l.b16 %v2766
      %v3094 = vunpack.c.l.b16 %v2767
      %v3095 = vunpack.c.l.b16 %v2768
      %v3096 = vunpack.c.l.b16 %v2769
      %v3097 = vunpack.c.l.b16 %v2770
      %v3098 = vunpack.c.l.b16 %v2771
      %v3099 = vunpack.c.l.b16 %v2772
      %v3100 = vunpack.c.l.b16 %v2773
      %v3101 = vunpack.c.l.b16 %v2774
      %v3102 = vunpack.c.l.b16 %v2775
      %v3103 = vunpack.c.l.b16 %v2776
      %v3104 = vunpack.c.l.b16 %v2777
      %v3105 = vunpack.c.l.b16 %v2778
      %v3106 = vunpack.c.l.b16 %v2779
      %v3107 = vunpack.c.l.b16 %v2780
      %v3108 = vunpack.c.l.b16 %v2781
      %v3109 = vunpack.c.l.b16 %v2782
      %v3110 = vunpack.c.l.b16 %v2783
      %v3111 = vunpack.c.l.b16 %v2784
      %v3112 = vunpack.c.l.b16 %v2785
      %v3113 = vunpack.c.l.b16 %v2786
      %v3114 = vunpack.c.l.b16 %v2787
      %v3115 = vunpack.c.l.b16 %v2788
      %v3116 = vunpack.c.l.b16 %v2789
      %v3117 = vunpack.c.l.b16 %v2790
      %v3118 = vpack.c.b16 %v2959, %v2958
      %v3119 = vpack.c.b16 %v2961, %v2960
      %v3120 = vpack.c.b16 %v2963, %v2962
      %v3121 = vpack.c.b16 %v2965, %v2964
      %v3122 = vpack.c.b16 %v2967, %v2966
      %v3123 = vpack.c.b16 %v2969, %v2968
      %v3124 = vpack.c.b16 %v2971, %v2970
      %v3125 = vpack.c.b16 %v2973, %v2972
      %v3126 = vpack.c.b16 %v2975, %v2974
      %v3127 = vpack.c.b16 %v2977, %v2976
      %v3128 = vpack.c.b16 %v2979, %v2978
      %v3129 = vpack.c.b16 %v2981, %v2980
      %v3130 = vpack.c.b16 %v2983, %v2982
      %v3131 = vpack.c.b16 %v2985, %v2984
      %v3132 = vpack.c.b16 %v2987, %v2986
      %v3133 = vpack.c.b16 %v2989, %v2988
      %v3134 = vpack.c.b16 %v2991, %v2990
      %v3135 = vpack.c.b16 %v2993, %v2992
      %v3136 = vpack.c.b16 %v2995, %v2994
      %v3137 = vpack.c.b16 %v2997, %v2996
      %v3138 = vpack.c.b16 %v2999, %v2998
      %v3139 = vpack.c.b16 %v3001, %v3000
      %v3140 = vpack.c.b16 %v3003, %v3002
      %v3141 = vpack.c.b16 %v3005, %v3004
      %v3142 = vpack.c.b16 %v3007, %v3006
      %v3143 = vpack.c.b16 %v3009, %v3008
      %v3144 = vpack.c.b16 %v3011, %v3010
      %v3145 = vpack.c.b16 %v3013, %v3012
      %v3146 = vpack.c.b16 %v3015, %v3014
      %v3147 = vpack.c.b16 %v3017, %v3016
      %v3148 = vpack.c.b16 %v3019, %v3018
      %v3149 = vpack.c.b16 %v3021, %v3020
      %v3150 = vpack.c.b16 %v3023, %v3022
      %v3151 = vpack.c.b16 %v3025, %v3024
      %v3152 = vpack.c.b16 %v3027, %v3026
      %v3153 = vpack.c.b16 %v3029, %v3028
      %v3154 = vpack.c.b16 %v3031, %v3030
      %v3155 = vpack.c.b16 %v3033, %v3032
      %v3156 = vpack.c.b16 %v3035, %v3034
      %v3157 = vpack.c.b16 %v3037, %v3036
      %v3158 = vpack.c.b16 %v3039, %v3038
      %v3159 = vpack.c.b16 %v3041, %v3040
      %v3160 = vpack.c.b16 %v3043, %v3042
      %v3161 = vpack.c.b16 %v3045, %v3044
      %v3162 = vpack.c.b16 %v3047, %v3046
      %v3163 = vpack.c.b16 %v3049, %v3048
      %v3164 = vpack.c.b16 %v3051, %v3050
      %v3165 = vpack.c.b16 %v3053, %v3052
      %v3166 = vpack.c.b16 %v3055, %v3054
      %v3167 = vpack.c.b16 %v3057, %v3056
      %v3168 = vpack.c.b16 %v3059, %v3058
      %v3169 = vpack.c.b16 %v3061, %v3060
      %v3170 = vpack.c.b16 %v3063, %v3062
      %v3171 = vpack.c.b16 %v3065, %v3064
      %v3172 = vpack.c.b16 %v3067, %v3066
      %v3173 = vpack.c.b16 %v3069, %v3068
      %v3174 = vpack.c.b16 %v3071, %v3070
      %v3175 = vpack.c.b16 %v3073, %v3072
      %v3176 = vpack.c.b16 %v3075, %v3074
      %v3177 = vpack.c.b16 %v3077, %v3076
      %v3178 = vpack.c.b16 %v3079, %v3078
      %v3179 = vpack.c.b16 %v3081, %v3080
      %v3180 = vpack.c.b16 %v3083, %v3082
      %v3181 = vpack.c.b16 %v3085, %v3084
      %v3182 = vpack.c.b16 %v3087, %v3086
      %v3183 = vpack.c.b16 %v3089, %v3088
      %v3184 = vpack.c.b16 %v3091, %v3090
      %v3185 = vpack.c.b16 %v3093, %v3092
      %v3186 = vpack.c.b16 %v3095, %v3094
      %v3187 = vpack.c.b16 %v3097, %v3096
      %v3188 = vpack.c.b16 %v3099, %v3098
      %v3189 = vpack.c.b16 %v3101, %v3100
      %v3190 = vpack.c.b16 %v3103, %v3102
      %v3191 = vpack.c.b16 %v3105, %v3104
      %v3192 = vpack.c.b16 %v3107, %v3106
      %v3193 = vpack.c.b16 %v3109, %v3108
      %v3194 = vpack.c.b16 %v3111, %v3110
      %v3195 = vpack.c.b16 %v3113, %v3112
      %v3196 = vpack.c.b16 %v3115, %v3114
      %v3197 = vpack.c.b16 %v3117, %v3116
      %3278 = vmatprep.subr.bf16.mxu0 0
      %3279 = vmatpush1.bf16.msra.mxu0 %v3118
      %3280 = vmatprep.subr.bf16.mxu0 0
      %3281 = vmatpush1.bf16.msra.mxu0 %v3119
      %3282 = vmatprep.subr.bf16.mxu0 0
      %3283 = vmatpush1.bf16.msra.mxu0 %v3120
      %3284 = vmatprep.subr.bf16.mxu0 0
      %3285 = vmatpush1.bf16.msra.mxu0 %v3121
      %3286 = vmatprep.subr.bf16.mxu0 0
      %3287 = vmatpush1.bf16.msra.mxu0 %v3122
      %3288 = vmatprep.subr.bf16.mxu0 0
      %3289 = vmatpush1.bf16.msra.mxu0 %v3123
      %3290 = vmatprep.subr.bf16.mxu0 0
      %3291 = vmatpush1.bf16.msra.mxu0 %v3124
      %3292 = vmatprep.subr.bf16.mxu0 0
      %3293 = vmatpush1.bf16.msra.mxu0 %v3125
      %3294 = vmatprep.subr.bf16.mxu0 0
      %3295 = vmatpush1.bf16.msra.mxu0 %v3126
      %3296 = vmatprep.subr.bf16.mxu0 0
      %3297 = vmatpush1.bf16.msra.mxu0 %v3127
      %3298 = vmatprep.subr.bf16.mxu0 0
      %3299 = vmatpush1.bf16.msra.mxu0 %v3128
      %3300 = vmatprep.subr.bf16.mxu0 0
      %3301 = vmatpush1.bf16.msra.mxu0 %v3129
      %3302 = vmatprep.subr.bf16.mxu0 0
      %3303 = vmatpush1.bf16.msra.mxu0 %v3130
      %3304 = vmatprep.subr.bf16.mxu0 0
      %3305 = vmatpush1.bf16.msra.mxu0 %v3131
      %3306 = vmatprep.subr.bf16.mxu0 0
      %3307 = vmatpush1.bf16.msra.mxu0 %v3132
      %3308 = vmatprep.subr.bf16.mxu0 0
      %3309 = vmatpush1.bf16.msra.mxu0 %v3133
      %3310 = vmatprep.mubr.bf16.mxu0 %v2622
      %3311 = vmatmul.mubr.bf16.gmra.mrb[0].mxu0 %v2621
      %v3312 = vpop.f32.mrb[0].mxu0
      %v3313 = vadd.f32 %v2796, %v3312
      %v3314 = vpop.f32.mrb[0].mxu0
      %v3315 = vpop.f32.mrb[0].mxu0
      %v3316 = vpop.f32.mrb[0].mxu0
      %3317 = vdwg.mxu0
      %3318 = vmatprep.subr.bf16.mxu0 0
      %3319 = vmatpush1.bf16.msra.mxu0 %v3134
      %3320 = vmatprep.subr.bf16.mxu0 0
      %3321 = vmatpush1.bf16.msra.mxu0 %v3135
      %3322 = vmatprep.subr.bf16.mxu0 0
      %3323 = vmatpush1.bf16.msra.mxu0 %v3136
      %3324 = vmatprep.subr.bf16.mxu0 0
      %3325 = vmatpush1.bf16.msra.mxu0 %v3137
      %3326 = vmatprep.subr.bf16.mxu0 0
      %3327 = vmatpush1.bf16.msra.mxu0 %v3138
      %3328 = vmatprep.subr.bf16.mxu0 0
      %3329 = vmatpush1.bf16.msra.mxu0 %v3139
      %3330 = vmatprep.subr.bf16.mxu0 0
      %3331 = vmatpush1.bf16.msra.mxu0 %v3140
      %3332 = vmatprep.subr.bf16.mxu0 0
      %3333 = vmatpush1.bf16.msra.mxu0 %v3141
      %3334 = vmatprep.subr.bf16.mxu0 0
      %3335 = vmatpush1.bf16.msra.mxu0 %v3142
      %3336 = vmatprep.subr.bf16.mxu0 0
      %3337 = vmatpush1.bf16.msra.mxu0 %v3143
      %3338 = vmatprep.subr.bf16.mxu0 0
      %3339 = vmatpush1.bf16.msra.mxu0 %v3144
      %3340 = vmatprep.subr.bf16.mxu0 0
      %3341 = vmatpush1.bf16.msra.mxu0 %v3145
      %3342 = vmatprep.subr.bf16.mxu0 0
      %3343 = vmatpush1.bf16.msra.mxu0 %v3146
      %3344 = vmatprep.subr.bf16.mxu0 0
      %3345 = vmatpush1.bf16.msra.mxu0 %v3147
      %3346 = vmatprep.subr.bf16.mxu0 0
      %3347 = vmatpush1.bf16.msra.mxu0 %v3148
      %3348 = vmatprep.subr.bf16.mxu0 0
      %3349 = vmatpush1.bf16.msra.mxu0 %v3149
      %3350 = vmatprep.mubr.bf16.mxu0 %v2624
      %3351 = vmatmul.mubr.bf16.gmra.mrb[0].mxu0 %v2623
      %v3352 = vpop.f32.mrb[0].mxu0
      %v3353 = vadd.f32 %v3313, %v3352
      %v3354 = vpop.f32.mrb[0].mxu0
      %v3355 = vpop.f32.mrb[0].mxu0
      %v3356 = vpop.f32.mrb[0].mxu0
      %3357 = vdwg.mxu0
      %3358 = vmatprep.subr.bf16.mxu0 0
      %3359 = vmatpush1.bf16.msra.mxu0 %v3150
      %3360 = vmatprep.subr.bf16.mxu0 0
      %3361 = vmatpush1.bf16.msra.mxu0 %v3151
      %3362 = vmatprep.subr.bf16.mxu0 0
      %3363 = vmatpush1.bf16.msra.mxu0 %v3152
      %3364 = vmatprep.subr.bf16.mxu0 0
      %3365 = vmatpush1.bf16.msra.mxu0 %v3153
      %3366 = vmatprep.subr.bf16.mxu0 0
      %3367 = vmatpush1.bf16.msra.mxu0 %v3154
      %3368 = vmatprep.subr.bf16.mxu0 0
      %3369 = vmatpush1.bf16.msra.mxu0 %v3155
      %3370 = vmatprep.subr.bf16.mxu0 0
      %3371 = vmatpush1.bf16.msra.mxu0 %v3156
      %3372 = vmatprep.subr.bf16.mxu0 0
      %3373 = vmatpush1.bf16.msra.mxu0 %v3157
      %3374 = vmatprep.subr.bf16.mxu0 0
      %3375 = vmatpush1.bf16.msra.mxu0 %v3158
      %3376 = vmatprep.subr.bf16.mxu0 0
      %3377 = vmatpush1.bf16.msra.mxu0 %v3159
      %3378 = vmatprep.subr.bf16.mxu0 0
      %3379 = vmatpush1.bf16.msra.mxu0 %v3160
      %3380 = vmatprep.subr.bf16.mxu0 0
      %3381 = vmatpush1.bf16.msra.mxu0 %v3161
      %3382 = vmatprep.subr.bf16.mxu0 0
      %3383 = vmatpush1.bf16.msra.mxu0 %v3162
      %3384 = vmatprep.subr.bf16.mxu0 0
      %3385 = vmatpush1.bf16.msra.mxu0 %v3163
      %3386 = vmatprep.subr.bf16.mxu0 0
      %3387 = vmatpush1.bf16.msra.mxu0 %v3164
      %3388 = vmatprep.subr.bf16.mxu0 0
      %3389 = vmatpush1.bf16.msra.mxu0 %v3165
      %3390 = vmatprep.mubr.bf16.mxu0 %v2626
      %3391 = vmatmul.mubr.bf16.gmra.mrb[0].mxu0 %v2625
      %v3392 = vpop.f32.mrb[0].mxu0
      %v3393 = vadd.f32 %v3353, %v3392
      %v3394 = vpop.f32.mrb[0].mxu0
      %v3395 = vpop.f32.mrb[0].mxu0
      %v3396 = vpop.f32.mrb[0].mxu0
      %3397 = vdwg.mxu0
      %3398 = vmatprep.subr.bf16.mxu0 0
      %3399 = vmatpush1.bf16.msra.mxu0 %v3166
      %3400 = vmatprep.subr.bf16.mxu0 0
      %3401 = vmatpush1.bf16.msra.mxu0 %v3167
      %3402 = vmatprep.subr.bf16.mxu0 0
      %3403 = vmatpush1.bf16.msra.mxu0 %v3168
      %3404 = vmatprep.subr.bf16.mxu0 0
      %3405 = vmatpush1.bf16.msra.mxu0 %v3169
      %3406 = vmatprep.subr.bf16.mxu0 0
      %3407 = vmatpush1.bf16.msra.mxu0 %v3170
      %3408 = vmatprep.subr.bf16.mxu0 0
      %3409 = vmatpush1.bf16.msra.mxu0 %v3171
      %3410 = vmatprep.subr.bf16.mxu0 0
      %3411 = vmatpush1.bf16.msra.mxu0 %v3172
      %3412 = vmatprep.subr.bf16.mxu0 0
      %3413 = vmatpush1.bf16.msra.mxu0 %v3173
      %3414 = vmatprep.subr.bf16.mxu0 0
      %3415 = vmatpush1.bf16.msra.mxu0 %v3174
      %3416 = vmatprep.subr.bf16.mxu0 0
      %3417 = vmatpush1.bf16.msra.mxu0 %v3175
      %3418 = vmatprep.subr.bf16.mxu0 0
      %3419 = vmatpush1.bf16.msra.mxu0 %v3176
      %3420 = vmatprep.subr.bf16.mxu0 0
      %3421 = vmatpush1.bf16.msra.mxu0 %v3177
      %3422 = vmatprep.subr.bf16.mxu0 0
      %3423 = vmatpush1.bf16.msra.mxu0 %v3178
      %3424 = vmatprep.subr.bf16.mxu0 0
      %3425 = vmatpush1.bf16.msra.mxu0 %v3179
      %3426 = vmatprep.subr.bf16.mxu0 0
      %3427 = vmatpush1.bf16.msra.mxu0 %v3180
      %3428 = vmatprep.subr.bf16.mxu0 0
      %3429 = vmatpush1.bf16.msra.mxu0 %v3181
      %3430 = vmatprep.mubr.bf16.mxu0 %v2628
      %3431 = vmatmul.mubr.bf16.gmra.mrb[0].mxu0 %v2627
      %v3432 = vpop.f32.mrb[0].mxu0
      %v3433 = vadd.f32 %v3393, %v3432
      %v3434 = vpop.f32.mrb[0].mxu0
      %v3435 = vpop.f32.mrb[0].mxu0
      %v3436 = vpop.f32.mrb[0].mxu0
      %3437 = vdwg.mxu0
      %3438 = vmatprep.subr.bf16.mxu0 0
      %3439 = vmatpush1.bf16.msra.mxu0 %v3182
      %3440 = vmatprep.subr.bf16.mxu0 0
      %3441 = vmatpush1.bf16.msra.mxu0 %v3183
      %3442 = vmatprep.subr.bf16.mxu0 0
      %3443 = vmatpush1.bf16.msra.mxu0 %v3184
      %3444 = vmatprep.subr.bf16.mxu0 0
      %3445 = vmatpush1.bf16.msra.mxu0 %v3185
      %3446 = vmatprep.subr.bf16.mxu0 0
      %3447 = vmatpush1.bf16.msra.mxu0 %v3186
      %3448 = vmatprep.subr.bf16.mxu0 0
      %3449 = vmatpush1.bf16.msra.mxu0 %v3187
      %3450 = vmatprep.subr.bf16.mxu0 0
      %3451 = vmatpush1.bf16.msra.mxu0 %v3188
      %3452 = vmatprep.subr.bf16.mxu0 0
      %3453 = vmatpush1.bf16.msra.mxu0 %v3189
      %3454 = vmatprep.subr.bf16.mxu0 0
      %3455 = vmatpush1.bf16.msra.mxu0 %v3190
      %3456 = vmatprep.subr.bf16.mxu0 0
      %3457 = vmatpush1.bf16.msra.mxu0 %v3191
      %3458 = vmatprep.subr.bf16.mxu0 0
      %3459 = vmatpush1.bf16.msra.mxu0 %v3192
      %3460 = vmatprep.subr.bf16.mxu0 0
      %3461 = vmatpush1.bf16.msra.mxu0 %v3193
      %3462 = vmatprep.subr.bf16.mxu0 0
      %3463 = vmatpush1.bf16.msra.mxu0 %v3194
      %3464 = vmatprep.subr.bf16.mxu0 0
      %3465 = vmatpush1.bf16.msra.mxu0 %v3195
      %3466 = vmatprep.subr.bf16.mxu0 0
      %3467 = vmatpush1.bf16.msra.mxu0 %v3196
      %3468 = vmatprep.subr.bf16.mxu0 0
      %3469 = vmatpush1.bf16.msra.mxu0 %v3197
      %3470 = vmatprep.mubr.bf16.mxu0 %v2630
      %3471 = vmatmul.mubr.bf16.gmra.mrb[0].mxu0 %v2629
      %v3472 = vpop.f32.mrb[0].mxu0
      %v3473 = vadd.f32 %v3433, %v3472
      %v3474 = vpop.f32.mrb[0].mxu0
      %v3475 = vpop.f32.mrb[0].mxu0
      %v3476 = vpop.f32.mrb[0].mxu0
      %3477 = vdwg.mxu0
      %3478 = vst [vmem:[%s444] sm:$0x3] %v3473
      %p3479 = scmp.lt.s32.totalorder %s23, 1
      %s3480 = scalar_select %p3479, %s23, 1
      %p3481 = scmp.lt.s32.totalorder %s24, 0
      %s3482 = scalar_select %p3481, %s24, 0
      %s3483 = sadd.s32 %s3482, %s3480
      %s3484 = smul.addr %s3483, 2
      %s3485 = scalar_lea.vmem %s8, %s3484
      // Predicated region
      $region53: #{mult_stage_forward.1} parent=51 // pred_check
        %p3486 = pneg %p256
      $region54: #{mult_stage_forward.1} parent=51 // pred_check_branch
        %3488 = sbr.rel (%p3486) target = $region56
      $region55: #{mult_stage_forward.1} parent=51 // pred_region
        _
      $region56: #{mult_stage_forward.1} parent=51 // pred_fallthru
        _
    $region52: #{mult_stage_forward.1} parent=5 // pred_fallthru
      _
    %p3489 = scmp.le.s32.totalorder 2, %s14
    // Predicated region
    $region57: #{mult_stage_forward.1} parent=5 // pred_check
      %p3490 = pneg %p3489
    $region58: #{mult_stage_forward.1} parent=5 // pred_check_branch
      %3492 = sbr.rel (%p3490) target = $region60
    $region59: #{mult_stage_forward.1} parent=5 // pred_region
      %s3493 = ssub.s32 %s14, 2
      // Predicated region
      $region61: #{mult_stage_forward.1} parent=59 // pred_check
        %p3494 = pneg %p262
      $region62: #{mult_stage_forward.1} parent=59 // pred_check_branch
        %3496 = sbr.rel (%p3494) target = $region64
      $region63: #{mult_stage_forward.1} parent=59 // pred_region
        %p3497 = scmp.lt.s32.totalorder %s25, 1
        %s3498 = scalar_select %p3497, %s25, 1
        %p3499 = scmp.lt.s32.totalorder %s26, 0
        %s3500 = scalar_select %p3499, %s26, 0
        %s3501 = sadd.s32 %s3500, %s3498
        %s3502 = smul.addr %s3501, 2
        %s3503 = scalar_lea.vmem %s8, %s3502
      $region64: #{mult_stage_forward.1} parent=59 // pred_fallthru
        _
    $region60: #{mult_stage_forward.1} parent=5 // pred_fallthru
      _
  $region6: #{mult_stage_forward.1} parent=0 // loop_footer
    %s18 = sadd.s32 1, %s14
  $region7: #{mult_stage_forward.1} parent=0 // loop_footer_branch
    %13 = sbr.rel target = $region3
  $region8: #{mult_stage_forward.1} parent=0 // loop_exit
    _

</llo_original>
